<compile_context>
chip_gen: v7x
topology: tpu7x:2x2x1
jax: 0.10.0
libtpu: 0.0.40
codegen_flags: <defaults>
</compile_context>

<pallas_src>
import jax
import jax.numpy as jnp
from jax.experimental import pallas as pl
from jax.experimental.pallas import tpu as pltpu

LEAKY_SLOPE = 0.01  # torch.nn.LeakyReLU default


def _leaky(x):
    return jnp.where(x > 0, x, LEAKY_SLOPE * x)


def _bf16(x):
    return x.astype(jnp.bfloat16)


# ------------------------------ Pallas kernel ------------------------------- #

def _build_double_q_kernel(n_groups, depths, n_sgs):
    """Builds the fused per-twin forward body.

    Ref layout (positional):
      inp, gt,
      qg_w1, qg_b1, qg_w2, qg_b2,
      [gather_i, adj_i, pool_i, ws_i, wn_i, bg_i] * n_groups,
      v_w1, v_b1, v_w2, v_b2, v_w3, v_b3,
      q_out, sl_out,
      pooled_scratch
    """
    row_off, off = [], 0
    for n in n_sgs:
        row_off.append(off)
        off += n

    def kernel(*refs):
        inp_ref, gt_ref = refs[0], refs[1]
        qw1, qb1, qw2, qb2 = refs[2], refs[3], refs[4], refs[5]
        p = 6
        grp = []
        for _ in range(n_groups):
            grp.append(refs[p:p + 6])
            p += 6
        vw1, vb1, vw2, vb2, vw3, vb3 = refs[p:p + 6]
        p += 6
        q_ref, sl_ref = refs[p], refs[p + 1]
        pooled_sc = refs[p + 2]

        # ---- QGcnn edge MLP + sigmoid/MSE side loss (this twin) ----
        # TODO(synk): QGcnn's NodeConv/EdgeConv + angle/post_input conditioning
        # is not in the provided source; approximated by this per-edge MLP.
        x = _bf16(inp_ref[...])                                     # (E, 2F+1)
        h = _leaky(jnp.dot(x, qw1[...],
                           preferred_element_type=jnp.float32) + qb1[...])
        ef = (jnp.dot(_bf16(h), qw2[...],
                      preferred_element_type=jnp.float32) + qb2[...])  # (E, F)
        pred = jax.nn.sigmoid(jnp.mean(ef, axis=-1, keepdims=True))    # (E, 1)
        err = pred - gt_ref[...]
        sl_ref[...] = jnp.mean(err * err, keepdims=True).astype(sl_ref.dtype)

        # ---- per-subgraph: gather (one-hot matmul) -> GCN stack -> pool ----
        ef_bf = _bf16(ef)
        for g in range(n_groups):
            gth_ref, adj_ref, pool_ref, ws_ref, wn_ref, bg_ref = grp[g]
            adj = adj_ref[...]                                      # (M, M) bf16
            # gather rows of ef without leaving VMEM: sub = one_hot @ ef
            x_bf = _bf16(jnp.dot(gth_ref[...], ef_bf,
                                 preferred_element_type=jnp.float32))  # (M, F)
            # TODO(synk): GlobalEdgeGcnn source not provided; modeled as
            # sg_size//2 graph-conv layers over the normalized adjacency,
            # side loss contribution = 0.
            for l in range(depths[g]):                # static unroll, depth<=4
                agg = jnp.dot(adj, x_bf, preferred_element_type=jnp.float32)
                y = (jnp.dot(x_bf, ws_ref[l],
                             preferred_element_type=jnp.float32)
                     + jnp.dot(_bf16(agg), wn_ref[l],
                               preferred_element_type=jnp.float32)
                     + bg_ref[l])
                x_bf = _bf16(_leaky(y))
            # mean over sg_size == pool-matrix matmul; stash rows for the
            # single fused value MLP below.
            pooled = jnp.dot(pool_ref[...], x_bf,
                             preferred_element_type=jnp.float32)   # (n_sg, F)
            r0 = row_off[g]
            pooled_sc[r0:r0 + n_sgs[g], :] = pooled

        # ---- one 3-layer value MLP over all subgraph groups (this twin) ----
        pooled_all = _bf16(pooled_sc[...])                      # (total_sg, F)
        h1 = _leaky(jnp.dot(pooled_all, vw1[...],
                            preferred_element_type=jnp.float32) + vb1[...])
        h2 = _leaky(jnp.dot(_bf16(h1), vw2[...],
                            preferred_element_type=jnp.float32) + vb2[...])
        qv = (jnp.dot(_bf16(h2), vw3[...],
                      preferred_element_type=jnp.float32) + vb3[...])
        q_ref[...] = qv.astype(q_ref.dtype)

    return kernel


# ------------------------------ kernel wrapper ------------------------------ #

def double_q_call(params, inp, gt, graph_consts, s_subgraph):
    """Single pallas_call: grid=(2,) 'parallel' over the twin Q-nets."""
    E, K = inp.shape
    hl = params["gcn_1"]["w1"].shape[-1]
    F_ = params["gcn_1"]["w2"].shape[-1]
    H = params["value"]["w1"].shape[-1]
    nc = params["value"]["w3"].shape[-1]
    depths = tuple(int(ssg) // 2 for ssg in s_subgraph)
    n_sgs = tuple(int(gc["pool"].shape[0]) for gc in graph_consts)
    total_sg = sum(n_sgs)

    in_specs = [
        pl.BlockSpec((E, K), lambda q: (0, 0)),                 # shared input
        pl.BlockSpec((E, 1), lambda q: (0, 0)),                 # shared gt
        pl.BlockSpec((None, K, hl), lambda q: (q, 0, 0)),       # per-twin QGcnn
        pl.BlockSpec((None, 1, hl), lambda q: (q, 0, 0)),
        pl.BlockSpec((None, hl, F_), lambda q: (q, 0, 0)),
        pl.BlockSpec((None, 1, F_), lambda q: (q, 0, 0)),
    ]
    args = [inp, gt,
            params["gcn_1"]["w1"], params["gcn_1"]["b1"],
            params["gcn_1"]["w2"], params["gcn_1"]["b2"]]
    for i, gc in enumerate(graph_consts):
        M = gc["adj"].shape[0]
        n_sg = gc["pool"].shape[0]
        d = depths[i]
        gp = params["gcn_2"][i]
        in_specs += [
            pl.BlockSpec((M, E), lambda q: (0, 0)),             # shared gather
            pl.BlockSpec((M, M), lambda q: (0, 0)),             # shared adjacency
            pl.BlockSpec((n_sg, M), lambda q: (0, 0)),          # shared pool
            pl.BlockSpec((None, d, F_, F_), lambda q: (q, 0, 0, 0)),
            pl.BlockSpec((None, d, F_, F_), lambda q: (q, 0, 0, 0)),
            pl.BlockSpec((None, d, 1, F_), lambda q: (q, 0, 0, 0)),
        ]
        args += [gc["gather"], gc["adj"], gc["pool"],
                 gp["ws"], gp["wn"], gp["b"]]
    vp = params["value"]
    in_specs += [
        pl.BlockSpec((None, F_, H), lambda q: (q, 0, 0)),
        pl.BlockSpec((None, 1, H), lambda q: (q, 0, 0)),
        pl.BlockSpec((None, H, H), lambda q: (q, 0, 0)),
        pl.BlockSpec((None, 1, H), lambda q: (q, 0, 0)),
        pl.BlockSpec((None, H, nc), lambda q: (q, 0, 0)),
        pl.BlockSpec((None, 1, nc), lambda q: (q, 0, 0)),
    ]
    args += [vp["w1"], vp["b1"], vp["w2"], vp["b2"], vp["w3"], vp["b3"]]

    kernel = _build_double_q_kernel(len(graph_consts), depths, n_sgs)
    q, sl = pl.pallas_call(
        kernel,
        grid=(2,),
        in_specs=in_specs,
        out_specs=[
            pl.BlockSpec((None, total_sg, nc), lambda q: (q, 0, 0)),
            pl.BlockSpec((None, 1, 1), lambda q: (q, 0, 0)),
        ],
        out_shape=[
            jax.ShapeDtypeStruct((2, total_sg, nc), jnp.float32),
            jax.ShapeDtypeStruct((2, 1, 1), jnp.float32),
        ],
        scratch_shapes=[pltpu.VMEM((total_sg, F_), jnp.float32)],
        compiler_params=pltpu.CompilerParams(
            dimension_semantics=("parallel",)),
    )(*args)
    return q, sl[:, 0, 0]


# --------------------------------- forward ---------------------------------- #

def double_q_forward(params, s_subgraph, node_features, actions, edge_index,
                     angles, graph_consts, gt_edges, post_input):
    # TODO(synk): `angles`, `post_input`, `n_hidden_layer` only feed QGcnn
    # internals / tensorboard logging not present in the provided source.
    del angles, post_input
    actions = actions[:, None]                                  # .unsqueeze(-1)

    # JAX glue (data-dependent gather/concat), shared between the two Q-nets.
    src = node_features[edge_index[0]]
    dst = node_features[edge_index[1]]
    inp = jnp.concatenate([src, dst, actions], axis=-1)         # (E, 2F+1)
    gt = gt_edges[:, None]                                      # (E, 1)

    # Single fused kernel: both twins' edge MLP + GCN stacks + value MLP.
    q, sl = double_q_call(params, inp, gt, graph_consts, s_subgraph)

    q1_out, q2_out = [], []
    off = 0
    for gc in graph_consts:
        n_sg = gc["pool"].shape[0]
        q1_out.append(jnp.squeeze(q[0, off:off + n_sg, :]))
        q2_out.append(jnp.squeeze(q[1, off:off + n_sg, :]))
        off += n_sg
    # TODO(synk): GlobalEdgeGcnn side losses assumed 0 (source not provided).
    side_loss = (sl[0] + sl[1]) / 4.0
    return q1_out, q2_out, side_loss


# ------------------- static graph structure (precomputed) ------------------- #

def precompute_graph_constants(s_subgraph, sub_graphs, sep_subgraphs, n_edges):
    """adj / pool / gather-one-hot depend only on the (static) graph layout,
    so they are built once outside the jitted hot forward (perf review)."""
    consts = []
    for i, sg_size in enumerate(s_subgraph):
        idx = sub_graphs[i]
        M = int(idx.shape[0])
        gather = jax.nn.one_hot(idx, n_edges, dtype=jnp.float32)      # (M, E)
        sep = sep_subgraphs[i]
        sg_edges = jnp.concatenate(
            [sep, jnp.stack([sep[1], sep[0]], axis=0)], axis=1)       # undirected
        adj = jnp.zeros((M, M), jnp.float32).at[
            sg_edges[0], sg_edges[1]].add(1.0)
        deg = jnp.maximum(adj.sum(axis=1, keepdims=True), 1.0)
        adj = adj / deg
        n_sg = M // int(sg_size)
        pool = (jnp.repeat(jnp.eye(n_sg, dtype=jnp.float32), sg_size, axis=1)
                / float(sg_size))                                     # (n_sg, M)
        consts.append({
            "gather": gather.astype(jnp.bfloat16),   # exact 0/1
            "adj": adj.astype(jnp.bfloat16),         # MXU operand anyway
            "pool": pool.astype(jnp.bfloat16),       # 1/2^k exact
        })
    return consts


# -------------------------------- parameters -------------------------------- #

def init_params(key, n_in, n_classes, hl_factor, s_subgraph):
    keys = iter(jax.random.split(key, 128))

    def lin(shape, fan_in):
        w = (jax.random.normal(next(keys), shape, jnp.float32)
             / jnp.sqrt(float(fan_in)))
        return w.astype(jnp.bfloat16)                # weights bf16 at rest

    def bias(shape):
        return jax.random.normal(next(keys), shape, jnp.float32) * 0.01

    # Twin QGcnn edge MLP, stacked on a leading axis of 2 (Q-net 1 / Q-net 2).
    qg = {
        "w1": lin((2, 2 * n_in + 1, hl_factor), 2 * n_in + 1),
        "b1": bias((2, 1, hl_factor)),
        "w2": lin((2, hl_factor, n_in), hl_factor),
        "b2": bias((2, 1, n_in)),
    }
    # Per-subgraph GlobalEdgeGcnn stacks: weights stacked as [2, depth, F, F].
    gcn2 = []
    for ssg in s_subgraph:
        depth = ssg // 2
        gcn2.append({
            "ws": lin((2, depth, n_in, n_in), n_in),
            "wn": lin((2, depth, n_in, n_in), n_in),
            "b": bias((2, depth, 1, n_in)),
        })
    # Twin value heads.
    H = hl_factor * 4
    val = {
        "w1": lin((2, n_in, H), n_in), "b1": bias((2, 1, H)),
        "w2": lin((2, H, H), H),       "b2": bias((2, 1, H)),
        "w3": lin((2, H, n_classes), H), "b3": bias((2, 1, n_classes)),
    }
    return {"gcn_1": qg, "gcn_2": gcn2, "value": val}


# ----------------------------------- main ----------------------------------- #

if __name__ == "__main__":
    F = 16            # n_in_features
    N_CLASSES = 3
    HL_FACTOR = 32    # hl_factor -> value hidden = 128
    S_SUBGRAPH = (4, 8)
    N_NODES, N_EDGES = 16, 32

    root = jax.random.PRNGKey(0)
    kp, kn, ke, ka, kan, kg, ks1, ks2, kq1, kq2 = jax.random.split(root, 10)

    params = init_params(kp, F, N_CLASSES, HL_FACTOR, S_SUBGRAPH)

    node_features = jax.random.normal(kn, (N_NODES, F), jnp.float32)
    edge_index = jax.random.randint(ke, (2, N_EDGES), 0, N_NODES)
    actions = jax.random.uniform(ka, (N_EDGES,), jnp.float32)
    angles = jax.random.uniform(kan, (N_EDGES,), jnp.float32)
    gt_edges = (jax.random.uniform(kg, (N_EDGES,)) > 0.5).astype(jnp.float32)
    # sub_graphs[i]: edge indices, length = n_subgraphs_i * sg_size_i (= 16 each)
    sub_graphs = [jax.random.randint(ks1, (4 * 4,), 0, N_EDGES),
                  jax.random.randint(ks2, (2 * 8,), 0, N_EDGES)]
    # sep_subgraphs[i]: directed edges among the 16 subgraph "edge-nodes"
    sep_subgraphs = [jax.random.randint(kq1, (2, 20), 0, 16),
                     jax.random.randint(kq2, (2, 20), 0, 16)]

    # Static graph structure, hoisted out of the hot forward.
    graph_consts = precompute_graph_constants(S_SUBGRAPH, sub_graphs,
                                              sep_subgraphs, N_EDGES)

    fwd = jax.jit(double_q_forward, static_argnums=(1,))
    q1, q2, side_loss = fwd(params, S_SUBGRAPH, node_features, actions,
                            edge_index, angles, graph_consts, gt_edges, False)

    jax.block_until_ready((q1, q2, side_loss))
    assert q1[0].shape == (4, N_CLASSES) and q1[1].shape == (2, N_CLASSES)
    assert q2[0].shape == (4, N_CLASSES) and q2[1].shape == (2, N_CLASSES)
    assert side_loss.shape == ()
    print("KERNEL_OK")
</pallas_src>

<mosaic_0001>
module attributes {stable_mosaic.version = 11 : i64} {
  func.func @kernel(%arg0: i32, %arg1: memref<32x33xf32, #tpu.memory_space<vmem>>, %arg2: memref<32x1xf32, #tpu.memory_space<vmem>>, %arg3: memref<1x33x32xbf16, #tpu.memory_space<vmem>>, %arg4: memref<1x1x32xf32, #tpu.memory_space<vmem>>, %arg5: memref<1x32x16xbf16, #tpu.memory_space<vmem>>, %arg6: memref<1x1x16xf32, #tpu.memory_space<vmem>>, %arg7: memref<16x32xbf16, #tpu.memory_space<vmem>>, %arg8: memref<16x16xbf16, #tpu.memory_space<vmem>>, %arg9: memref<4x16xbf16, #tpu.memory_space<vmem>>, %arg10: memref<1x2x16x16xbf16, #tpu.memory_space<vmem>>, %arg11: memref<1x2x16x16xbf16, #tpu.memory_space<vmem>>, %arg12: memref<1x2x1x16xf32, #tpu.memory_space<vmem>>, %arg13: memref<16x32xbf16, #tpu.memory_space<vmem>>, %arg14: memref<16x16xbf16, #tpu.memory_space<vmem>>, %arg15: memref<2x16xbf16, #tpu.memory_space<vmem>>, %arg16: memref<1x4x16x16xbf16, #tpu.memory_space<vmem>>, %arg17: memref<1x4x16x16xbf16, #tpu.memory_space<vmem>>, %arg18: memref<1x4x1x16xf32, #tpu.memory_space<vmem>>, %arg19: memref<1x16x128xbf16, #tpu.memory_space<vmem>>, %arg20: memref<1x1x128xf32, #tpu.memory_space<vmem>>, %arg21: memref<1x128x128xbf16, #tpu.memory_space<vmem>>, %arg22: memref<1x1x128xf32, #tpu.memory_space<vmem>>, %arg23: memref<1x128x3xbf16, #tpu.memory_space<vmem>>, %arg24: memref<1x1x3xf32, #tpu.memory_space<vmem>>, %arg25: memref<1x6x3xf32, #tpu.memory_space<vmem>>, %arg26: memref<1x1x1xf32, #tpu.memory_space<vmem>>, %arg27: memref<6x16xf32, #tpu.memory_space<vmem>>) attributes {dimension_semantics = [#tpu.dimension_semantics<parallel>], iteration_bounds = array<i64: 2>, scalar_prefetch = 0 : i64, scratch_operands = 1 : i64, tpu.core_type = #tpu.core_type<tc>, window_params = [{pipeline_mode = #tpu.pipeline_mode<synchronous>, transform_indices = @transform_0, window_bounds = array<i64: 32, 33>}, {pipeline_mode = #tpu.pipeline_mode<synchronous>, transform_indices = @transform_1, window_bounds = array<i64: 32, 1>}, {transform_indices = @transform_2, window_bounds = array<i64: 1, 33, 32>}, {transform_indices = @transform_3, window_bounds = array<i64: 1, 1, 32>}, {transform_indices = @transform_4, window_bounds = array<i64: 1, 32, 16>}, {transform_indices = @transform_5, window_bounds = array<i64: 1, 1, 16>}, {pipeline_mode = #tpu.pipeline_mode<synchronous>, transform_indices = @transform_6, window_bounds = array<i64: 16, 32>}, {pipeline_mode = #tpu.pipeline_mode<synchronous>, transform_indices = @transform_7, window_bounds = array<i64: 16, 16>}, {pipeline_mode = #tpu.pipeline_mode<synchronous>, transform_indices = @transform_8, window_bounds = array<i64: 4, 16>}, {transform_indices = @transform_9, window_bounds = array<i64: 1, 2, 16, 16>}, {transform_indices = @transform_10, window_bounds = array<i64: 1, 2, 16, 16>}, {transform_indices = @transform_11, window_bounds = array<i64: 1, 2, 1, 16>}, {pipeline_mode = #tpu.pipeline_mode<synchronous>, transform_indices = @transform_12, window_bounds = array<i64: 16, 32>}, {pipeline_mode = #tpu.pipeline_mode<synchronous>, transform_indices = @transform_13, window_bounds = array<i64: 16, 16>}, {pipeline_mode = #tpu.pipeline_mode<synchronous>, transform_indices = @transform_14, window_bounds = array<i64: 2, 16>}, {transform_indices = @transform_15, window_bounds = array<i64: 1, 4, 16, 16>}, {transform_indices = @transform_16, window_bounds = array<i64: 1, 4, 16, 16>}, {transform_indices = @transform_17, window_bounds = array<i64: 1, 4, 1, 16>}, {transform_indices = @transform_18, window_bounds = array<i64: 1, 16, 128>}, {transform_indices = @transform_19, window_bounds = array<i64: 1, 1, 128>}, {transform_indices = @transform_20, window_bounds = array<i64: 1, 128, 128>}, {transform_indices = @transform_21, window_bounds = array<i64: 1, 1, 128>}, {transform_indices = @transform_22, window_bounds = array<i64: 1, 128, 3>}, {transform_indices = @transform_23, window_bounds = array<i64: 1, 1, 3>}, {transform_indices = @transform_24, window_bounds = array<i64: 1, 6, 3>}, {transform_indices = @transform_25, window_bounds = array<i64: 1, 1, 1>}]} {
    %c0 = arith.constant 0 : index
    %c0_0 = arith.constant 0 : index
    %0 = vector.load %arg1[%c0, %c0_0] : memref<32x33xf32, #tpu.memory_space<vmem>>, vector<32x33xf32>
    %1 = arith.truncf %0 : vector<32x33xf32> to vector<32x33xbf16>
    %c0_1 = arith.constant 0 : index
    %c0_2 = arith.constant 0 : index
    %c0_3 = arith.constant 0 : index
    %2 = vector.load %arg3[%c0_1, %c0_2, %c0_3] : memref<1x33x32xbf16, #tpu.memory_space<vmem>>, vector<1x33x32xbf16>
    %3 = vector.shape_cast %2 : vector<1x33x32xbf16> to vector<33x32xbf16>
    %cst = arith.constant dense<0.000000e+00> : vector<32x32xf32>
    %4 = tpu.matmul %1, %3, %cst {dimension_numbers = #tpu.dot_dimension_numbers<[1], [0], [0], [1], [0, 0, 1, 1], [], []>} : vector<32x33xbf16>, vector<33x32xbf16>, vector<32x32xf32> -> vector<32x32xf32>
    %c0_4 = arith.constant 0 : index
    %c0_5 = arith.constant 0 : index
    %c0_6 = arith.constant 0 : index
    %5 = vector.load %arg4[%c0_4, %c0_5, %c0_6] : memref<1x1x32xf32, #tpu.memory_space<vmem>>, vector<1x1x32xf32>
    %6 = vector.shape_cast %5 : vector<1x1x32xf32> to vector<1x32xf32>
    %7 = vector.broadcast %6 : vector<1x32xf32> to vector<32x32xf32>
    %8 = arith.addf %4, %7 : vector<32x32xf32>
    %cst_7 = arith.constant 0.000000e+00 : f32
    %9 = vector.broadcast %cst_7 : f32 to vector<32x32xf32>
    %10 = arith.cmpf ogt, %8, %9 : vector<32x32xf32>
    %cst_8 = arith.constant 0.00999999977 : f32
    %11 = vector.broadcast %cst_8 : f32 to vector<32x32xf32>
    %12 = arith.mulf %11, %8 : vector<32x32xf32>
    %13 = arith.select %10, %8, %12 : vector<32x32xi1>, vector<32x32xf32>
    %14 = arith.truncf %13 : vector<32x32xf32> to vector<32x32xbf16>
    %c0_9 = arith.constant 0 : index
    %c0_10 = arith.constant 0 : index
    %c0_11 = arith.constant 0 : index
    %15 = vector.load %arg5[%c0_9, %c0_10, %c0_11] : memref<1x32x16xbf16, #tpu.memory_space<vmem>>, vector<1x32x16xbf16>
    %16 = vector.shape_cast %15 : vector<1x32x16xbf16> to vector<32x16xbf16>
    %cst_12 = arith.constant dense<0.000000e+00> : vector<32x16xf32>
    %17 = tpu.matmul %14, %16, %cst_12 {dimension_numbers = #tpu.dot_dimension_numbers<[1], [0], [0], [1], [0, 0, 1, 1], [], []>} : vector<32x32xbf16>, vector<32x16xbf16>, vector<32x16xf32> -> vector<32x16xf32>
    %c0_13 = arith.constant 0 : index
    %c0_14 = arith.constant 0 : index
    %c0_15 = arith.constant 0 : index
    %18 = vector.load %arg6[%c0_13, %c0_14, %c0_15] : memref<1x1x16xf32, #tpu.memory_space<vmem>>, vector<1x1x16xf32>
    %19 = vector.shape_cast %18 : vector<1x1x16xf32> to vector<1x16xf32>
    %20 = vector.broadcast %19 : vector<1x16xf32> to vector<32x16xf32>
    %21 = arith.addf %17, %20 : vector<32x16xf32>
    %cst_16 = arith.constant dense<0.000000e+00> : vector<32xf32>
    %22 = vector.multi_reduction <add>, %21, %cst_16 [1] : vector<32x16xf32> to vector<32xf32>
    %23 = vector.shape_cast %22 : vector<32xf32> to vector<32x1xf32>
    %cst_17 = arith.constant 1.600000e+01 : f32
    %24 = vector.broadcast %cst_17 : f32 to vector<32x1xf32>
    %25 = arith.divf %23, %24 : vector<32x1xf32>
    %26 = arith.negf %25 : vector<32x1xf32>
    %27 = math.exp %26 : vector<32x1xf32>
    %cst_18 = arith.constant 1.000000e+00 : f32
    %28 = vector.broadcast %cst_18 : f32 to vector<32x1xf32>
    %29 = arith.addf %28, %27 : vector<32x1xf32>
    %30 = arith.divf %28, %29 : vector<32x1xf32>
    %c0_19 = arith.constant 0 : index
    %c0_20 = arith.constant 0 : index
    %31 = vector.load %arg2[%c0_19, %c0_20] : memref<32x1xf32, #tpu.memory_space<vmem>>, vector<32x1xf32>
    %32 = arith.subf %30, %31 : vector<32x1xf32>
    %33 = arith.mulf %32, %32 : vector<32x1xf32>
    %34 = vector.shape_cast %33 : vector<32x1xf32> to vector<1x32x1xf32>
    %cst_21 = arith.constant dense<0.000000e+00> : vector<1xf32>
    %35 = vector.multi_reduction <add>, %34, %cst_21 [1, 2] : vector<1x32x1xf32> to vector<1xf32>
    %36 = vector.shape_cast %35 : vector<1xf32> to vector<1x1x1xf32>
    %37 = vector.extract %36[0, 0, 0] : f32 from vector<1x1x1xf32>
    %38 = vector.broadcast %37 : f32 to vector<1x1xf32>
    %cst_22 = arith.constant 3.200000e+01 : f32
    %39 = vector.broadcast %cst_22 : f32 to vector<1x1xf32>
    %40 = arith.divf %38, %39 : vector<1x1xf32>
    %c0_23 = arith.constant 0 : index
    %c0_24 = arith.constant 0 : index
    %c0_25 = arith.constant 0 : index
    %41 = vector.load %arg26[%c0_23, %c0_24, %c0_25] : memref<1x1x1xf32, #tpu.memory_space<vmem>>, vector<1x1x1xf32>
    %42 = vector.shape_cast %41 : vector<1x1x1xf32> to vector<1x1xf32>
    %43 = vector.shape_cast %40 : vector<1x1xf32> to vector<1x1x1xf32>
    tpu.vector_store %arg26[%c0_23, %c0_24, %c0_25], %43 {strides = array<i32>} : memref<1x1x1xf32, #tpu.memory_space<vmem>>, vector<1x1x1xf32>,
    %44 = arith.truncf %21 : vector<32x16xf32> to vector<32x16xbf16>
    %c0_26 = arith.constant 0 : index
    %c0_27 = arith.constant 0 : index
    %45 = vector.load %arg8[%c0_26, %c0_27] : memref<16x16xbf16, #tpu.memory_space<vmem>>, vector<16x16xbf16>
    %c0_28 = arith.constant 0 : index
    %c0_29 = arith.constant 0 : index
    %46 = vector.load %arg7[%c0_28, %c0_29] : memref<16x32xbf16, #tpu.memory_space<vmem>>, vector<16x32xbf16>
    %cst_30 = arith.constant dense<0.000000e+00> : vector<16x16xf32>
    %47 = tpu.matmul %46, %44, %cst_30 {dimension_numbers = #tpu.dot_dimension_numbers<[1], [0], [0], [1], [0, 0, 1, 1], [], []>} : vector<16x32xbf16>, vector<32x16xbf16>, vector<16x16xf32> -> vector<16x16xf32>
    %48 = arith.truncf %47 : vector<16x16xf32> to vector<16x16xbf16>
    %cst_31 = arith.constant dense<0.000000e+00> : vector<16x16xf32>
    %49 = tpu.matmul %45, %48, %cst_31 {dimension_numbers = #tpu.dot_dimension_numbers<[1], [0], [0], [1], [0, 0, 1, 1], [], []>} : vector<16x16xbf16>, vector<16x16xbf16>, vector<16x16xf32> -> vector<16x16xf32>
    %c0_32 = arith.constant 0 : index
    %c0_33 = arith.constant 0 : index
    %c0_34 = arith.constant 0 : index
    %c0_35 = arith.constant 0 : index
    %50 = vector.load %arg10[%c0_32, %c0_33, %c0_34, %c0_35] : memref<1x2x16x16xbf16, #tpu.memory_space<vmem>>, vector<1x1x16x16xbf16>
    %51 = vector.shape_cast %50 : vector<1x1x16x16xbf16> to vector<16x16xbf16>
    %cst_36 = arith.constant dense<0.000000e+00> : vector<16x16xf32>
    %52 = tpu.matmul %48, %51, %cst_36 {dimension_numbers = #tpu.dot_dimension_numbers<[1], [0], [0], [1], [0, 0, 1, 1], [], []>} : vector<16x16xbf16>, vector<16x16xbf16>, vector<16x16xf32> -> vector<16x16xf32>
    %53 = arith.truncf %49 : vector<16x16xf32> to vector<16x16xbf16>
    %c0_37 = arith.constant 0 : index
    %c0_38 = arith.constant 0 : index
    %c0_39 = arith.constant 0 : index
    %c0_40 = arith.constant 0 : index
    %54 = vector.load %arg11[%c0_37, %c0_38, %c0_39, %c0_40] : memref<1x2x16x16xbf16, #tpu.memory_space<vmem>>, vector<1x1x16x16xbf16>
    %55 = vector.shape_cast %54 : vector<1x1x16x16xbf16> to vector<16x16xbf16>
    %cst_41 = arith.constant dense<0.000000e+00> : vector<16x16xf32>
    %56 = tpu.matmul %53, %55, %cst_41 {dimension_numbers = #tpu.dot_dimension_numbers<[1], [0], [0], [1], [0, 0, 1, 1], [], []>} : vector<16x16xbf16>, vector<16x16xbf16>, vector<16x16xf32> -> vector<16x16xf32>
    %57 = arith.addf %52, %56 : vector<16x16xf32>
    %c0_42 = arith.constant 0 : index
    %c0_43 = arith.constant 0 : index
    %c0_44 = arith.constant 0 : index
    %c0_45 = arith.constant 0 : index
    %58 = vector.load %arg12[%c0_42, %c0_43, %c0_44, %c0_45] : memref<1x2x1x16xf32, #tpu.memory_space<vmem>>, vector<1x1x1x16xf32>
    %59 = vector.shape_cast %58 : vector<1x1x1x16xf32> to vector<1x16xf32>
    %60 = vector.broadcast %59 : vector<1x16xf32> to vector<16x16xf32>
    %61 = arith.addf %57, %60 : vector<16x16xf32>
    %cst_46 = arith.constant 0.000000e+00 : f32
    %62 = vector.broadcast %cst_46 : f32 to vector<16x16xf32>
    %63 = arith.cmpf ogt, %61, %62 : vector<16x16xf32>
    %cst_47 = arith.constant 0.00999999977 : f32
    %64 = vector.broadcast %cst_47 : f32 to vector<16x16xf32>
    %65 = arith.mulf %64, %61 : vector<16x16xf32>
    %66 = arith.select %63, %61, %65 : vector<16x16xi1>, vector<16x16xf32>
    %67 = arith.truncf %66 : vector<16x16xf32> to vector<16x16xbf16>
    %cst_48 = arith.constant dense<0.000000e+00> : vector<16x16xf32>
    %68 = tpu.matmul %45, %67, %cst_48 {dimension_numbers = #tpu.dot_dimension_numbers<[1], [0], [0], [1], [0, 0, 1, 1], [], []>} : vector<16x16xbf16>, vector<16x16xbf16>, vector<16x16xf32> -> vector<16x16xf32>
    %c0_49 = arith.constant 0 : index
    %c1 = arith.constant 1 : index
    %c0_50 = arith.constant 0 : index
    %c0_51 = arith.constant 0 : index
    %69 = vector.load %arg10[%c0_49, %c1, %c0_50, %c0_51] : memref<1x2x16x16xbf16, #tpu.memory_space<vmem>>, vector<1x1x16x16xbf16>
    %70 = vector.shape_cast %69 : vector<1x1x16x16xbf16> to vector<16x16xbf16>
    %cst_52 = arith.constant dense<0.000000e+00> : vector<16x16xf32>
    %71 = tpu.matmul %67, %70, %cst_52 {dimension_numbers = #tpu.dot_dimension_numbers<[1], [0], [0], [1], [0, 0, 1, 1], [], []>} : vector<16x16xbf16>, vector<16x16xbf16>, vector<16x16xf32> -> vector<16x16xf32>
    %72 = arith.truncf %68 : vector<16x16xf32> to vector<16x16xbf16>
    %c0_53 = arith.constant 0 : index
    %c1_54 = arith.constant 1 : index
    %c0_55 = arith.constant 0 : index
    %c0_56 = arith.constant 0 : index
    %73 = vector.load %arg11[%c0_53, %c1_54, %c0_55, %c0_56] : memref<1x2x16x16xbf16, #tpu.memory_space<vmem>>, vector<1x1x16x16xbf16>
    %74 = vector.shape_cast %73 : vector<1x1x16x16xbf16> to vector<16x16xbf16>
    %cst_57 = arith.constant dense<0.000000e+00> : vector<16x16xf32>
    %75 = tpu.matmul %72, %74, %cst_57 {dimension_numbers = #tpu.dot_dimension_numbers<[1], [0], [0], [1], [0, 0, 1, 1], [], []>} : vector<16x16xbf16>, vector<16x16xbf16>, vector<16x16xf32> -> vector<16x16xf32>
    %76 = arith.addf %71, %75 : vector<16x16xf32>
    %c0_58 = arith.constant 0 : index
    %c1_59 = arith.constant 1 : index
    %c0_60 = arith.constant 0 : index
    %c0_61 = arith.constant 0 : index
    %77 = vector.load %arg12[%c0_58, %c1_59, %c0_60, %c0_61] : memref<1x2x1x16xf32, #tpu.memory_space<vmem>>, vector<1x1x1x16xf32>
    %78 = vector.shape_cast %77 : vector<1x1x1x16xf32> to vector<1x16xf32>
    %79 = vector.broadcast %78 : vector<1x16xf32> to vector<16x16xf32>
    %80 = arith.addf %76, %79 : vector<16x16xf32>
    %cst_62 = arith.constant 0.000000e+00 : f32
    %81 = vector.broadcast %cst_62 : f32 to vector<16x16xf32>
    %82 = arith.cmpf ogt, %80, %81 : vector<16x16xf32>
    %cst_63 = arith.constant 0.00999999977 : f32
    %83 = vector.broadcast %cst_63 : f32 to vector<16x16xf32>
    %84 = arith.mulf %83, %80 : vector<16x16xf32>
    %85 = arith.select %82, %80, %84 : vector<16x16xi1>, vector<16x16xf32>
    %86 = arith.truncf %85 : vector<16x16xf32> to vector<16x16xbf16>
    %c0_64 = arith.constant 0 : index
    %c0_65 = arith.constant 0 : index
    %87 = vector.load %arg9[%c0_64, %c0_65] : memref<4x16xbf16, #tpu.memory_space<vmem>>, vector<4x16xbf16>
    %cst_66 = arith.constant dense<0.000000e+00> : vector<4x16xf32>
    %88 = tpu.matmul %87, %86, %cst_66 {dimension_numbers = #tpu.dot_dimension_numbers<[1], [0], [0], [1], [0, 0, 1, 1], [], []>} : vector<4x16xbf16>, vector<16x16xbf16>, vector<4x16xf32> -> vector<4x16xf32>
    %c0_67 = arith.constant 0 : index
    %c0_68 = arith.constant 0 : index
    %89 = vector.load %arg27[%c0_67, %c0_68] : memref<6x16xf32, #tpu.memory_space<vmem>>, vector<4x16xf32>
    tpu.vector_store %arg27[%c0_67, %c0_68], %88 {strides = array<i32>} : memref<6x16xf32, #tpu.memory_space<vmem>>, vector<4x16xf32>,
    %c0_69 = arith.constant 0 : index
    %c0_70 = arith.constant 0 : index
    %90 = vector.load %arg14[%c0_69, %c0_70] : memref<16x16xbf16, #tpu.memory_space<vmem>>, vector<16x16xbf16>
    %c0_71 = arith.constant 0 : index
    %c0_72 = arith.constant 0 : index
    %91 = vector.load %arg13[%c0_71, %c0_72] : memref<16x32xbf16, #tpu.memory_space<vmem>>, vector<16x32xbf16>
    %cst_73 = arith.constant dense<0.000000e+00> : vector<16x16xf32>
    %92 = tpu.matmul %91, %44, %cst_73 {dimension_numbers = #tpu.dot_dimension_numbers<[1], [0], [0], [1], [0, 0, 1, 1], [], []>} : vector<16x32xbf16>, vector<32x16xbf16>, vector<16x16xf32> -> vector<16x16xf32>
    %93 = arith.truncf %92 : vector<16x16xf32> to vector<16x16xbf16>
    %cst_74 = arith.constant dense<0.000000e+00> : vector<16x16xf32>
    %94 = tpu.matmul %90, %93, %cst_74 {dimension_numbers = #tpu.dot_dimension_numbers<[1], [0], [0], [1], [0, 0, 1, 1], [], []>} : vector<16x16xbf16>, vector<16x16xbf16>, vector<16x16xf32> -> vector<16x16xf32>
    %c0_75 = arith.constant 0 : index
    %c0_76 = arith.constant 0 : index
    %c0_77 = arith.constant 0 : index
    %c0_78 = arith.constant 0 : index
    %95 = vector.load %arg16[%c0_75, %c0_76, %c0_77, %c0_78] : memref<1x4x16x16xbf16, #tpu.memory_space<vmem>>, vector<1x1x16x16xbf16>
    %96 = vector.shape_cast %95 : vector<1x1x16x16xbf16> to vector<16x16xbf16>
    %cst_79 = arith.constant dense<0.000000e+00> : vector<16x16xf32>
    %97 = tpu.matmul %93, %96, %cst_79 {dimension_numbers = #tpu.dot_dimension_numbers<[1], [0], [0], [1], [0, 0, 1, 1], [], []>} : vector<16x16xbf16>, vector<16x16xbf16>, vector<16x16xf32> -> vector<16x16xf32>
    %98 = arith.truncf %94 : vector<16x16xf32> to vector<16x16xbf16>
    %c0_80 = arith.constant 0 : index
    %c0_81 = arith.constant 0 : index
    %c0_82 = arith.constant 0 : index
    %c0_83 = arith.constant 0 : index
    %99 = vector.load %arg17[%c0_80, %c0_81, %c0_82, %c0_83] : memref<1x4x16x16xbf16, #tpu.memory_space<vmem>>, vector<1x1x16x16xbf16>
    %100 = vector.shape_cast %99 : vector<1x1x16x16xbf16> to vector<16x16xbf16>
    %cst_84 = arith.constant dense<0.000000e+00> : vector<16x16xf32>
    %101 = tpu.matmul %98, %100, %cst_84 {dimension_numbers = #tpu.dot_dimension_numbers<[1], [0], [0], [1], [0, 0, 1, 1], [], []>} : vector<16x16xbf16>, vector<16x16xbf16>, vector<16x16xf32> -> vector<16x16xf32>
    %102 = arith.addf %97, %101 : vector<16x16xf32>
    %c0_85 = arith.constant 0 : index
    %c0_86 = arith.constant 0 : index
    %c0_87 = arith.constant 0 : index
    %c0_88 = arith.constant 0 : index
    %103 = vector.load %arg18[%c0_85, %c0_86, %c0_87, %c0_88] : memref<1x4x1x16xf32, #tpu.memory_space<vmem>>, vector<1x1x1x16xf32>
    %104 = vector.shape_cast %103 : vector<1x1x1x16xf32> to vector<1x16xf32>
    %105 = vector.broadcast %104 : vector<1x16xf32> to vector<16x16xf32>
    %106 = arith.addf %102, %105 : vector<16x16xf32>
    %cst_89 = arith.constant 0.000000e+00 : f32
    %107 = vector.broadcast %cst_89 : f32 to vector<16x16xf32>
    %108 = arith.cmpf ogt, %106, %107 : vector<16x16xf32>
    %cst_90 = arith.constant 0.00999999977 : f32
    %109 = vector.broadcast %cst_90 : f32 to vector<16x16xf32>
    %110 = arith.mulf %109, %106 : vector<16x16xf32>
    %111 = arith.select %108, %106, %110 : vector<16x16xi1>, vector<16x16xf32>
    %112 = arith.truncf %111 : vector<16x16xf32> to vector<16x16xbf16>
    %cst_91 = arith.constant dense<0.000000e+00> : vector<16x16xf32>
    %113 = tpu.matmul %90, %112, %cst_91 {dimension_numbers = #tpu.dot_dimension_numbers<[1], [0], [0], [1], [0, 0, 1, 1], [], []>} : vector<16x16xbf16>, vector<16x16xbf16>, vector<16x16xf32> -> vector<16x16xf32>
    %c0_92 = arith.constant 0 : index
    %c1_93 = arith.constant 1 : index
    %c0_94 = arith.constant 0 : index
    %c0_95 = arith.constant 0 : index
    %114 = vector.load %arg16[%c0_92, %c1_93, %c0_94, %c0_95] : memref<1x4x16x16xbf16, #tpu.memory_space<vmem>>, vector<1x1x16x16xbf16>
    %115 = vector.shape_cast %114 : vector<1x1x16x16xbf16> to vector<16x16xbf16>
    %cst_96 = arith.constant dense<0.000000e+00> : vector<16x16xf32>
    %116 = tpu.matmul %112, %115, %cst_96 {dimension_numbers = #tpu.dot_dimension_numbers<[1], [0], [0], [1], [0, 0, 1, 1], [], []>} : vector<16x16xbf16>, vector<16x16xbf16>, vector<16x16xf32> -> vector<16x16xf32>
    %117 = arith.truncf %113 : vector<16x16xf32> to vector<16x16xbf16>
    %c0_97 = arith.constant 0 : index
    %c1_98 = arith.constant 1 : index
    %c0_99 = arith.constant 0 : index
    %c0_100 = arith.constant 0 : index
    %118 = vector.load %arg17[%c0_97, %c1_98, %c0_99, %c0_100] : memref<1x4x16x16xbf16, #tpu.memory_space<vmem>>, vector<1x1x16x16xbf16>
    %119 = vector.shape_cast %118 : vector<1x1x16x16xbf16> to vector<16x16xbf16>
    %cst_101 = arith.constant dense<0.000000e+00> : vector<16x16xf32>
    %120 = tpu.matmul %117, %119, %cst_101 {dimension_numbers = #tpu.dot_dimension_numbers<[1], [0], [0], [1], [0, 0, 1, 1], [], []>} : vector<16x16xbf16>, vector<16x16xbf16>, vector<16x16xf32> -> vector<16x16xf32>
    %121 = arith.addf %116, %120 : vector<16x16xf32>
    %c0_102 = arith.constant 0 : index
    %c1_103 = arith.constant 1 : index
    %c0_104 = arith.constant 0 : index
    %c0_105 = arith.constant 0 : index
    %122 = vector.load %arg18[%c0_102, %c1_103, %c0_104, %c0_105] : memref<1x4x1x16xf32, #tpu.memory_space<vmem>>, vector<1x1x1x16xf32>
    %123 = vector.shape_cast %122 : vector<1x1x1x16xf32> to vector<1x16xf32>
    %124 = vector.broadcast %123 : vector<1x16xf32> to vector<16x16xf32>
    %125 = arith.addf %121, %124 : vector<16x16xf32>
    %cst_106 = arith.constant 0.000000e+00 : f32
    %126 = vector.broadcast %cst_106 : f32 to vector<16x16xf32>
    %127 = arith.cmpf ogt, %125, %126 : vector<16x16xf32>
    %cst_107 = arith.constant 0.00999999977 : f32
    %128 = vector.broadcast %cst_107 : f32 to vector<16x16xf32>
    %129 = arith.mulf %128, %125 : vector<16x16xf32>
    %130 = arith.select %127, %125, %129 : vector<16x16xi1>, vector<16x16xf32>
    %131 = arith.truncf %130 : vector<16x16xf32> to vector<16x16xbf16>
    %cst_108 = arith.constant dense<0.000000e+00> : vector<16x16xf32>
    %132 = tpu.matmul %90, %131, %cst_108 {dimension_numbers = #tpu.dot_dimension_numbers<[1], [0], [0], [1], [0, 0, 1, 1], [], []>} : vector<16x16xbf16>, vector<16x16xbf16>, vector<16x16xf32> -> vector<16x16xf32>
    %c0_109 = arith.constant 0 : index
    %c2 = arith.constant 2 : index
    %c0_110 = arith.constant 0 : index
    %c0_111 = arith.constant 0 : index
    %133 = vector.load %arg16[%c0_109, %c2, %c0_110, %c0_111] : memref<1x4x16x16xbf16, #tpu.memory_space<vmem>>, vector<1x1x16x16xbf16>
    %134 = vector.shape_cast %133 : vector<1x1x16x16xbf16> to vector<16x16xbf16>
    %cst_112 = arith.constant dense<0.000000e+00> : vector<16x16xf32>
    %135 = tpu.matmul %131, %134, %cst_112 {dimension_numbers = #tpu.dot_dimension_numbers<[1], [0], [0], [1], [0, 0, 1, 1], [], []>} : vector<16x16xbf16>, vector<16x16xbf16>, vector<16x16xf32> -> vector<16x16xf32>
    %136 = arith.truncf %132 : vector<16x16xf32> to vector<16x16xbf16>
    %c0_113 = arith.constant 0 : index
    %c2_114 = arith.constant 2 : index
    %c0_115 = arith.constant 0 : index
    %c0_116 = arith.constant 0 : index
    %137 = vector.load %arg17[%c0_113, %c2_114, %c0_115, %c0_116] : memref<1x4x16x16xbf16, #tpu.memory_space<vmem>>, vector<1x1x16x16xbf16>
    %138 = vector.shape_cast %137 : vector<1x1x16x16xbf16> to vector<16x16xbf16>
    %cst_117 = arith.constant dense<0.000000e+00> : vector<16x16xf32>
    %139 = tpu.matmul %136, %138, %cst_117 {dimension_numbers = #tpu.dot_dimension_numbers<[1], [0], [0], [1], [0, 0, 1, 1], [], []>} : vector<16x16xbf16>, vector<16x16xbf16>, vector<16x16xf32> -> vector<16x16xf32>
    %140 = arith.addf %135, %139 : vector<16x16xf32>
    %c0_118 = arith.constant 0 : index
    %c2_119 = arith.constant 2 : index
    %c0_120 = arith.constant 0 : index
    %c0_121 = arith.constant 0 : index
    %141 = vector.load %arg18[%c0_118, %c2_119, %c0_120, %c0_121] : memref<1x4x1x16xf32, #tpu.memory_space<vmem>>, vector<1x1x1x16xf32>
    %142 = vector.shape_cast %141 : vector<1x1x1x16xf32> to vector<1x16xf32>
    %143 = vector.broadcast %142 : vector<1x16xf32> to vector<16x16xf32>
    %144 = arith.addf %140, %143 : vector<16x16xf32>
    %cst_122 = arith.constant 0.000000e+00 : f32
    %145 = vector.broadcast %cst_122 : f32 to vector<16x16xf32>
    %146 = arith.cmpf ogt, %144, %145 : vector<16x16xf32>
    %cst_123 = arith.constant 0.00999999977 : f32
    %147 = vector.broadcast %cst_123 : f32 to vector<16x16xf32>
    %148 = arith.mulf %147, %144 : vector<16x16xf32>
    %149 = arith.select %146, %144, %148 : vector<16x16xi1>, vector<16x16xf32>
    %150 = arith.truncf %149 : vector<16x16xf32> to vector<16x16xbf16>
    %cst_124 = arith.constant dense<0.000000e+00> : vector<16x16xf32>
    %151 = tpu.matmul %90, %150, %cst_124 {dimension_numbers = #tpu.dot_dimension_numbers<[1], [0], [0], [1], [0, 0, 1, 1], [], []>} : vector<16x16xbf16>, vector<16x16xbf16>, vector<16x16xf32> -> vector<16x16xf32>
    %c0_125 = arith.constant 0 : index
    %c3 = arith.constant 3 : index
    %c0_126 = arith.constant 0 : index
    %c0_127 = arith.constant 0 : index
    %152 = vector.load %arg16[%c0_125, %c3, %c0_126, %c0_127] : memref<1x4x16x16xbf16, #tpu.memory_space<vmem>>, vector<1x1x16x16xbf16>
    %153 = vector.shape_cast %152 : vector<1x1x16x16xbf16> to vector<16x16xbf16>
    %cst_128 = arith.constant dense<0.000000e+00> : vector<16x16xf32>
    %154 = tpu.matmul %150, %153, %cst_128 {dimension_numbers = #tpu.dot_dimension_numbers<[1], [0], [0], [1], [0, 0, 1, 1], [], []>} : vector<16x16xbf16>, vector<16x16xbf16>, vector<16x16xf32> -> vector<16x16xf32>
    %155 = arith.truncf %151 : vector<16x16xf32> to vector<16x16xbf16>
    %c0_129 = arith.constant 0 : index
    %c3_130 = arith.constant 3 : index
    %c0_131 = arith.constant 0 : index
    %c0_132 = arith.constant 0 : index
    %156 = vector.load %arg17[%c0_129, %c3_130, %c0_131, %c0_132] : memref<1x4x16x16xbf16, #tpu.memory_space<vmem>>, vector<1x1x16x16xbf16>
    %157 = vector.shape_cast %156 : vector<1x1x16x16xbf16> to vector<16x16xbf16>
    %cst_133 = arith.constant dense<0.000000e+00> : vector<16x16xf32>
    %158 = tpu.matmul %155, %157, %cst_133 {dimension_numbers = #tpu.dot_dimension_numbers<[1], [0], [0], [1], [0, 0, 1, 1], [], []>} : vector<16x16xbf16>, vector<16x16xbf16>, vector<16x16xf32> -> vector<16x16xf32>
    %159 = arith.addf %154, %158 : vector<16x16xf32>
    %c0_134 = arith.constant 0 : index
    %c3_135 = arith.constant 3 : index
    %c0_136 = arith.constant 0 : index
    %c0_137 = arith.constant 0 : index
    %160 = vector.load %arg18[%c0_134, %c3_135, %c0_136, %c0_137] : memref<1x4x1x16xf32, #tpu.memory_space<vmem>>, vector<1x1x1x16xf32>
    %161 = vector.shape_cast %160 : vector<1x1x1x16xf32> to vector<1x16xf32>
    %162 = vector.broadcast %161 : vector<1x16xf32> to vector<16x16xf32>
    %163 = arith.addf %159, %162 : vector<16x16xf32>
    %cst_138 = arith.constant 0.000000e+00 : f32
    %164 = vector.broadcast %cst_138 : f32 to vector<16x16xf32>
    %165 = arith.cmpf ogt, %163, %164 : vector<16x16xf32>
    %cst_139 = arith.constant 0.00999999977 : f32
    %166 = vector.broadcast %cst_139 : f32 to vector<16x16xf32>
    %167 = arith.mulf %166, %163 : vector<16x16xf32>
    %168 = arith.select %165, %163, %167 : vector<16x16xi1>, vector<16x16xf32>
    %169 = arith.truncf %168 : vector<16x16xf32> to vector<16x16xbf16>
    %c0_140 = arith.constant 0 : index
    %c0_141 = arith.constant 0 : index
    %170 = vector.load %arg15[%c0_140, %c0_141] : memref<2x16xbf16, #tpu.memory_space<vmem>>, vector<2x16xbf16>
    %cst_142 = arith.constant dense<0.000000e+00> : vector<2x16xf32>
    %171 = tpu.matmul %170, %169, %cst_142 {dimension_numbers = #tpu.dot_dimension_numbers<[1], [0], [0], [1], [0, 0, 1, 1], [], []>} : vector<2x16xbf16>, vector<16x16xbf16>, vector<2x16xf32> -> vector<2x16xf32>
    %c4 = arith.constant 4 : index
    %c0_143 = arith.constant 0 : index
    %172 = vector.load %arg27[%c4, %c0_143] : memref<6x16xf32, #tpu.memory_space<vmem>>, vector<2x16xf32>
    tpu.vector_store %arg27[%c4, %c0_143], %171 {strides = array<i32>} : memref<6x16xf32, #tpu.memory_space<vmem>>, vector<2x16xf32>,
    %c0_144 = arith.constant 0 : index
    %c0_145 = arith.constant 0 : index
    %173 = vector.load %arg27[%c0_144, %c0_145] : memref<6x16xf32, #tpu.memory_space<vmem>>, vector<6x16xf32>
    %174 = arith.truncf %173 : vector<6x16xf32> to vector<6x16xbf16>
    %c0_146 = arith.constant 0 : index
    %c0_147 = arith.constant 0 : index
    %c0_148 = arith.constant 0 : index
    %175 = vector.load %arg19[%c0_146, %c0_147, %c0_148] : memref<1x16x128xbf16, #tpu.memory_space<vmem>>, vector<1x16x128xbf16>
    %176 = vector.shape_cast %175 : vector<1x16x128xbf16> to vector<16x128xbf16>
    %cst_149 = arith.constant dense<0.000000e+00> : vector<6x128xf32>
    %177 = tpu.matmul %174, %176, %cst_149 {dimension_numbers = #tpu.dot_dimension_numbers<[1], [0], [0], [1], [0, 0, 1, 1], [], []>} : vector<6x16xbf16>, vector<16x128xbf16>, vector<6x128xf32> -> vector<6x128xf32>
    %c0_150 = arith.constant 0 : index
    %c0_151 = arith.constant 0 : index
    %c0_152 = arith.constant 0 : index
    %178 = vector.load %arg20[%c0_150, %c0_151, %c0_152] : memref<1x1x128xf32, #tpu.memory_space<vmem>>, vector<1x1x128xf32>
    %179 = vector.shape_cast %178 : vector<1x1x128xf32> to vector<1x128xf32>
    %180 = vector.broadcast %179 : vector<1x128xf32> to vector<6x128xf32>
    %181 = arith.addf %177, %180 : vector<6x128xf32>
    %cst_153 = arith.constant 0.000000e+00 : f32
    %182 = vector.broadcast %cst_153 : f32 to vector<6x128xf32>
    %183 = arith.cmpf ogt, %181, %182 : vector<6x128xf32>
    %cst_154 = arith.constant 0.00999999977 : f32
    %184 = vector.broadcast %cst_154 : f32 to vector<6x128xf32>
    %185 = arith.mulf %184, %181 : vector<6x128xf32>
    %186 = arith.select %183, %181, %185 : vector<6x128xi1>, vector<6x128xf32>
    %187 = arith.truncf %186 : vector<6x128xf32> to vector<6x128xbf16>
    %c0_155 = arith.constant 0 : index
    %c0_156 = arith.constant 0 : index
    %c0_157 = arith.constant 0 : index
    %188 = vector.load %arg21[%c0_155, %c0_156, %c0_157] : memref<1x128x128xbf16, #tpu.memory_space<vmem>>, vector<1x128x128xbf16>
    %189 = vector.shape_cast %188 : vector<1x128x128xbf16> to vector<128x128xbf16>
    %cst_158 = arith.constant dense<0.000000e+00> : vector<6x128xf32>
    %190 = tpu.matmul %187, %189, %cst_158 {dimension_numbers = #tpu.dot_dimension_numbers<[1], [0], [0], [1], [0, 0, 1, 1], [], []>} : vector<6x128xbf16>, vector<128x128xbf16>, vector<6x128xf32> -> vector<6x128xf32>
    %c0_159 = arith.constant 0 : index
    %c0_160 = arith.constant 0 : index
    %c0_161 = arith.constant 0 : index
    %191 = vector.load %arg22[%c0_159, %c0_160, %c0_161] : memref<1x1x128xf32, #tpu.memory_space<vmem>>, vector<1x1x128xf32>
    %192 = vector.shape_cast %191 : vector<1x1x128xf32> to vector<1x128xf32>
    %193 = vector.broadcast %192 : vector<1x128xf32> to vector<6x128xf32>
    %194 = arith.addf %190, %193 : vector<6x128xf32>
    %cst_162 = arith.constant 0.000000e+00 : f32
    %195 = vector.broadcast %cst_162 : f32 to vector<6x128xf32>
    %196 = arith.cmpf ogt, %194, %195 : vector<6x128xf32>
    %cst_163 = arith.constant 0.00999999977 : f32
    %197 = vector.broadcast %cst_163 : f32 to vector<6x128xf32>
    %198 = arith.mulf %197, %194 : vector<6x128xf32>
    %199 = arith.select %196, %194, %198 : vector<6x128xi1>, vector<6x128xf32>
    %200 = arith.truncf %199 : vector<6x128xf32> to vector<6x128xbf16>
    %c0_164 = arith.constant 0 : index
    %c0_165 = arith.constant 0 : index
    %c0_166 = arith.constant 0 : index
    %201 = vector.load %arg23[%c0_164, %c0_165, %c0_166] : memref<1x128x3xbf16, #tpu.memory_space<vmem>>, vector<1x128x3xbf16>
    %202 = vector.shape_cast %201 : vector<1x128x3xbf16> to vector<128x3xbf16>
    %cst_167 = arith.constant dense<0.000000e+00> : vector<6x3xf32>
    %203 = tpu.matmul %200, %202, %cst_167 {dimension_numbers = #tpu.dot_dimension_numbers<[1], [0], [0], [1], [0, 0, 1, 1], [], []>} : vector<6x128xbf16>, vector<128x3xbf16>, vector<6x3xf32> -> vector<6x3xf32>
    %c0_168 = arith.constant 0 : index
    %c0_169 = arith.constant 0 : index
    %c0_170 = arith.constant 0 : index
    %204 = vector.load %arg24[%c0_168, %c0_169, %c0_170] : memref<1x1x3xf32, #tpu.memory_space<vmem>>, vector<1x1x3xf32>
    %205 = vector.shape_cast %204 : vector<1x1x3xf32> to vector<1x3xf32>
    %206 = vector.broadcast %205 : vector<1x3xf32> to vector<6x3xf32>
    %207 = arith.addf %203, %206 : vector<6x3xf32>
    %c0_171 = arith.constant 0 : index
    %c0_172 = arith.constant 0 : index
    %c0_173 = arith.constant 0 : index
    %208 = vector.load %arg25[%c0_171, %c0_172, %c0_173] : memref<1x6x3xf32, #tpu.memory_space<vmem>>, vector<1x6x3xf32>
    %209 = vector.shape_cast %208 : vector<1x6x3xf32> to vector<6x3xf32>
    %210 = vector.shape_cast %207 : vector<6x3xf32> to vector<1x6x3xf32>
    tpu.vector_store %arg25[%c0_171, %c0_172, %c0_173], %210 {strides = array<i32>} : memref<1x6x3xf32, #tpu.memory_space<vmem>>, vector<1x6x3xf32>,
    return
  }
  func.func @transform_0(%arg0: i32) -> (i32, i32) {
    %c0_i32 = arith.constant 0 : i32
    %c0_i32_0 = arith.constant 0 : i32
    %c0_i32_1 = arith.constant 0 : i32
    return %c0_i32, %c0_i32_0 : i32, i32
  }
  func.func @transform_1(%arg0: i32) -> (i32, i32) {
    %c0_i32 = arith.constant 0 : i32
    %c0_i32_0 = arith.constant 0 : i32
    %c0_i32_1 = arith.constant 0 : i32
    return %c0_i32, %c0_i32_0 : i32, i32
  }
  func.func @transform_2(%arg0: i32) -> (i32, i32, i32) {
    %c0_i32 = arith.constant 0 : i32
    %c0_i32_0 = arith.constant 0 : i32
    %c0_i32_1 = arith.constant 0 : i32
    return %arg0, %c0_i32, %c0_i32_0 : i32, i32, i32
  }
  func.func @transform_3(%arg0: i32) -> (i32, i32, i32) {
    %c0_i32 = arith.constant 0 : i32
    %c0_i32_0 = arith.constant 0 : i32
    %c0_i32_1 = arith.constant 0 : i32
    return %arg0, %c0_i32, %c0_i32_0 : i32, i32, i32
  }
  func.func @transform_4(%arg0: i32) -> (i32, i32, i32) {
    %c0_i32 = arith.constant 0 : i32
    %c0_i32_0 = arith.constant 0 : i32
    %c0_i32_1 = arith.constant 0 : i32
    return %arg0, %c0_i32, %c0_i32_0 : i32, i32, i32
  }
  func.func @transform_5(%arg0: i32) -> (i32, i32, i32) {
    %c0_i32 = arith.constant 0 : i32
    %c0_i32_0 = arith.constant 0 : i32
    %c0_i32_1 = arith.constant 0 : i32
    return %arg0, %c0_i32, %c0_i32_0 : i32, i32, i32
  }
  func.func @transform_6(%arg0: i32) -> (i32, i32) {
    %c0_i32 = arith.constant 0 : i32
    %c0_i32_0 = arith.constant 0 : i32
    %c0_i32_1 = arith.constant 0 : i32
    return %c0_i32, %c0_i32_0 : i32, i32
  }
  func.func @transform_7(%arg0: i32) -> (i32, i32) {
    %c0_i32 = arith.constant 0 : i32
    %c0_i32_0 = arith.constant 0 : i32
    %c0_i32_1 = arith.constant 0 : i32
    return %c0_i32, %c0_i32_0 : i32, i32
  }
  func.func @transform_8(%arg0: i32) -> (i32, i32) {
    %c0_i32 = arith.constant 0 : i32
    %c0_i32_0 = arith.constant 0 : i32
    %c0_i32_1 = arith.constant 0 : i32
    return %c0_i32, %c0_i32_0 : i32, i32
  }
  func.func @transform_9(%arg0: i32) -> (i32, i32, i32, i32) {
    %c0_i32 = arith.constant 0 : i32
    %c0_i32_0 = arith.constant 0 : i32
    %c0_i32_1 = arith.constant 0 : i32
    %c0_i32_2 = arith.constant 0 : i32
    return %arg0, %c0_i32, %c0_i32_0, %c0_i32_1 : i32, i32, i32, i32
  }
  func.func @transform_10(%arg0: i32) -> (i32, i32, i32, i32) {
    %c0_i32 = arith.constant 0 : i32
    %c0_i32_0 = arith.constant 0 : i32
    %c0_i32_1 = arith.constant 0 : i32
    %c0_i32_2 = arith.constant 0 : i32
    return %arg0, %c0_i32, %c0_i32_0, %c0_i32_1 : i32, i32, i32, i32
  }
  func.func @transform_11(%arg0: i32) -> (i32, i32, i32, i32) {
    %c0_i32 = arith.constant 0 : i32
    %c0_i32_0 = arith.constant 0 : i32
    %c0_i32_1 = arith.constant 0 : i32
    %c0_i32_2 = arith.constant 0 : i32
    return %arg0, %c0_i32, %c0_i32_0, %c0_i32_1 : i32, i32, i32, i32
  }
  func.func @transform_12(%arg0: i32) -> (i32, i32) {
    %c0_i32 = arith.constant 0 : i32
    %c0_i32_0 = arith.constant 0 : i32
    %c0_i32_1 = arith.constant 0 : i32
    return %c0_i32, %c0_i32_0 : i32, i32
  }
  func.func @transform_13(%arg0: i32) -> (i32, i32) {
    %c0_i32 = arith.constant 0 : i32
    %c0_i32_0 = arith.constant 0 : i32
    %c0_i32_1 = arith.constant 0 : i32
    return %c0_i32, %c0_i32_0 : i32, i32
  }
  func.func @transform_14(%arg0: i32) -> (i32, i32) {
    %c0_i32 = arith.constant 0 : i32
    %c0_i32_0 = arith.constant 0 : i32
    %c0_i32_1 = arith.constant 0 : i32
    return %c0_i32, %c0_i32_0 : i32, i32
  }
  func.func @transform_15(%arg0: i32) -> (i32, i32, i32, i32) {
    %c0_i32 = arith.constant 0 : i32
    %c0_i32_0 = arith.constant 0 : i32
    %c0_i32_1 = arith.constant 0 : i32
    %c0_i32_2 = arith.constant 0 : i32
    return %arg0, %c0_i32, %c0_i32_0, %c0_i32_1 : i32, i32, i32, i32
  }
  func.func @transform_16(%arg0: i32) -> (i32, i32, i32, i32) {
    %c0_i32 = arith.constant 0 : i32
    %c0_i32_0 = arith.constant 0 : i32
    %c0_i32_1 = arith.constant 0 : i32
    %c0_i32_2 = arith.constant 0 : i32
    return %arg0, %c0_i32, %c0_i32_0, %c0_i32_1 : i32, i32, i32, i32
  }
  func.func @transform_17(%arg0: i32) -> (i32, i32, i32, i32) {
    %c0_i32 = arith.constant 0 : i32
    %c0_i32_0 = arith.constant 0 : i32
    %c0_i32_1 = arith.constant 0 : i32
    %c0_i32_2 = arith.constant 0 : i32
    return %arg0, %c0_i32, %c0_i32_0, %c0_i32_1 : i32, i32, i32, i32
  }
  func.func @transform_18(%arg0: i32) -> (i32, i32, i32) {
    %c0_i32 = arith.constant 0 : i32
    %c0_i32_0 = arith.constant 0 : i32
    %c0_i32_1 = arith.constant 0 : i32
    return %arg0, %c0_i32, %c0_i32_0 : i32, i32, i32
  }
  func.func @transform_19(%arg0: i32) -> (i32, i32, i32) {
    %c0_i32 = arith.constant 0 : i32
    %c0_i32_0 = arith.constant 0 : i32
    %c0_i32_1 = arith.constant 0 : i32
    return %arg0, %c0_i32, %c0_i32_0 : i32, i32, i32
  }
  func.func @transform_20(%arg0: i32) -> (i32, i32, i32) {
    %c0_i32 = arith.constant 0 : i32
    %c0_i32_0 = arith.constant 0 : i32
    %c0_i32_1 = arith.constant 0 : i32
    return %arg0, %c0_i32, %c0_i32_0 : i32, i32, i32
  }
  func.func @transform_21(%arg0: i32) -> (i32, i32, i32) {
    %c0_i32 = arith.constant 0 : i32
    %c0_i32_0 = arith.constant 0 : i32
    %c0_i32_1 = arith.constant 0 : i32
    return %arg0, %c0_i32, %c0_i32_0 : i32, i32, i32
  }
  func.func @transform_22(%arg0: i32) -> (i32, i32, i32) {
    %c0_i32 = arith.constant 0 : i32
    %c0_i32_0 = arith.constant 0 : i32
    %c0_i32_1 = arith.constant 0 : i32
    return %arg0, %c0_i32, %c0_i32_0 : i32, i32, i32
  }
  func.func @transform_23(%arg0: i32) -> (i32, i32, i32) {
    %c0_i32 = arith.constant 0 : i32
    %c0_i32_0 = arith.constant 0 : i32
    %c0_i32_1 = arith.constant 0 : i32
    return %arg0, %c0_i32, %c0_i32_0 : i32, i32, i32
  }
  func.func @transform_24(%arg0: i32) -> (i32, i32, i32) {
    %c0_i32 = arith.constant 0 : i32
    %c0_i32_0 = arith.constant 0 : i32
    %c0_i32_1 = arith.constant 0 : i32
    return %arg0, %c0_i32, %c0_i32_0 : i32, i32, i32
  }
  func.func @transform_25(%arg0: i32) -> (i32, i32, i32) {
    %c0_i32 = arith.constant 0 : i32
    %c0_i32_0 = arith.constant 0 : i32
    %c0_i32_1 = arith.constant 0 : i32
    return %arg0, %c0_i32, %c0_i32_0 : i32, i32, i32
  }
}

</mosaic_0001>

<llo_original>
// kernel: double_q_forward.1
$region0: #{double_q_forward.1}
  #allocation0 [shape = 'u32[]', space=smem, size = 0x4, offset = 0x4, fixed_abs, tag = 'smem constant byte address 0x4 - core index']
  #allocation1 [shape = 'u32[144,128]{1,0:T(1,128)}', space=vmem, size = 0x12000, scoped, tag = 'internal scratch']
  #allocation2 [shape = 'f32[6,16]{1,0:T(8,128)}', space=vmem, size = 0x1000, scoped, tag = 'scratch operand']
  %s0 = inlined_call_operand.vmem [shape: f32[32,33], index: 0, kind: input, shape index: {}]
  %s1 = inlined_call_operand.vmem [shape: f32[32,1], index: 1, kind: input, shape index: {}]
  %s2 = inlined_call_operand.vmem [shape: bf16[2,33,32], index: 2, kind: input, shape index: {}]
  %s3 = inlined_call_operand.vmem [shape: f32[2,1,32], index: 3, kind: input, shape index: {}]
  %s4 = inlined_call_operand.vmem [shape: bf16[2,32,16], index: 4, kind: input, shape index: {}]
  %s5 = inlined_call_operand.vmem [shape: f32[2,1,16], index: 5, kind: input, shape index: {}]
  %s6 = inlined_call_operand.vmem [shape: bf16[16,32], index: 6, kind: input, shape index: {}]
  %s7 = inlined_call_operand.vmem [shape: bf16[16,16], index: 7, kind: input, shape index: {}]
  %s8 = inlined_call_operand.vmem [shape: bf16[4,16], index: 8, kind: input, shape index: {}]
  %s9 = inlined_call_operand.vmem [shape: bf16[2,2,16,16], index: 9, kind: input, shape index: {}]
  %s10 = inlined_call_operand.vmem [shape: bf16[2,2,16,16], index: 10, kind: input, shape index: {}]
  %s11 = inlined_call_operand.vmem [shape: f32[2,2,1,16], index: 11, kind: input, shape index: {}]
  %s12 = inlined_call_operand.vmem [shape: bf16[16,32], index: 12, kind: input, shape index: {}]
  %s13 = inlined_call_operand.vmem [shape: bf16[16,16], index: 13, kind: input, shape index: {}]
  %s14 = inlined_call_operand.vmem [shape: bf16[2,16], index: 14, kind: input, shape index: {}]
  %s15 = inlined_call_operand.vmem [shape: bf16[2,4,16,16], index: 15, kind: input, shape index: {}]
  %s16 = inlined_call_operand.vmem [shape: bf16[2,4,16,16], index: 16, kind: input, shape index: {}]
  %s17 = inlined_call_operand.vmem [shape: f32[2,4,1,16], index: 17, kind: input, shape index: {}]
  %s18 = inlined_call_operand.vmem [shape: bf16[2,16,128], index: 18, kind: input, shape index: {}]
  %s19 = inlined_call_operand.vmem [shape: f32[2,1,128], index: 19, kind: input, shape index: {}]
  %s20 = inlined_call_operand.vmem [shape: bf16[2,128,128], index: 20, kind: input, shape index: {}]
  %s21 = inlined_call_operand.vmem [shape: f32[2,1,128], index: 21, kind: input, shape index: {}]
  %s22 = inlined_call_operand.vmem [shape: bf16[2,128,3], index: 22, kind: input, shape index: {}]
  %s23 = inlined_call_operand.vmem [shape: f32[2,1,3], index: 23, kind: input, shape index: {}]
  %s24 = inlined_call_operand.vmem [shape: f32[2,6,3], index: 24, kind: output, shape index: {0}]
  %s25 = inlined_call_operand.vmem [shape: f32[2,1,1], index: 25, kind: output, shape index: {1}]
  %26 = xla_tuple %s24, %s25
  %s27 = sld [smem:[#allocation0]]
  $region137: #{double_q_forward.1} parent=0
    _
  %s29 = ssub.s32 1, %s27
  %s30 = scalar_select 0, %s29, %s27
  loop: start=0, step=1, limit=4
  $region2: #{double_q_forward.1} parent=0 // loop_pre_header
    _
  $region3: #{double_q_forward.1} parent=0 // loop_header
    %s32 = sphi 0, %s36
    %p33 = scmp.ge.s32.totalorder %s32, 4
    %s40 = sphi 0, %s40
    %s42 = sphi 0, %s40
    %s43 = sphi 0, %s42
    %s57 = sphi 0, %s43
    %s61 = sphi 0, %s61
    %s63 = sphi 0, %s61
    %s64 = sphi 0, %s63
    %s78 = sphi 0, %s64
    %s84 = sphi 0, %s86
    %s87 = sphi 0, %s84
    %s88 = sphi 0, %s87
    %s104 = sphi 0, %s88
    %s110 = sphi 0, %s112
    %s113 = sphi 0, %s110
    %s114 = sphi 0, %s113
    %s130 = sphi 0, %s114
    %s136 = sphi 0, %s138
    %s139 = sphi 0, %s136
    %s140 = sphi 0, %s139
    %s156 = sphi 0, %s140
    %s162 = sphi 0, %s164
    %s165 = sphi 0, %s162
    %s166 = sphi 0, %s165
    %s182 = sphi 0, %s166
    %s186 = sphi 0, %s186
    %s188 = sphi 0, %s186
    %s189 = sphi 0, %s188
    %s203 = sphi 0, %s189
    %s207 = sphi 0, %s207
    %s209 = sphi 0, %s207
    %s210 = sphi 0, %s209
    %s224 = sphi 0, %s210
    %s228 = sphi 0, %s228
    %s230 = sphi 0, %s228
    %s231 = sphi 0, %s230
    %s245 = sphi 0, %s231
    %s251 = sphi 0, %s253
    %s254 = sphi 0, %s251
    %s255 = sphi 0, %s254
    %s271 = sphi 0, %s255
    %s277 = sphi 0, %s279
    %s280 = sphi 0, %s277
    %s281 = sphi 0, %s280
    %s297 = sphi 0, %s281
    %s303 = sphi 0, %s305
    %s306 = sphi 0, %s303
    %s307 = sphi 0, %s306
    %s323 = sphi 0, %s307
    %s327 = sphi 0, %s327
    %s329 = sphi 0, %s327
    %s330 = sphi 0, %s329
    %s344 = sphi 0, %s330
    %s348 = sphi 0, %s348
    %s350 = sphi 0, %s348
    %s351 = sphi 0, %s350
    %s365 = sphi 0, %s351
    %s369 = sphi 0, %s369
    %s371 = sphi 0, %s369
    %s372 = sphi 0, %s371
    %s386 = sphi 0, %s372
    %s392 = sphi 0, %s394
    %s395 = sphi 0, %s392
    %s396 = sphi 0, %s395
    %s412 = sphi 0, %s396
    %s418 = sphi 0, %s420
    %s421 = sphi 0, %s418
    %s422 = sphi 0, %s421
    %s438 = sphi 0, %s422
    %s444 = sphi 0, %s446
    %s447 = sphi 0, %s444
    %s448 = sphi 0, %s447
    %s464 = sphi 0, %s448
    %s470 = sphi 0, %s472
    %s473 = sphi 0, %s470
    %s474 = sphi 0, %s473
    %s490 = sphi 0, %s474
    %s496 = sphi 0, %s498
    %s499 = sphi 0, %s496
    %s500 = sphi 0, %s499
    %s516 = sphi 0, %s500
    %s522 = sphi 0, %s524
    %s525 = sphi 0, %s522
    %s526 = sphi 0, %s525
    %s542 = sphi 0, %s526
    %s548 = sphi 0, %s550
    %s551 = sphi 0, %s548
    %s552 = sphi 0, %s551
    %s568 = sphi 0, %s552
    %s574 = sphi 0, %s576
    %s577 = sphi 0, %s574
    %s578 = sphi 0, %s577
    %s594 = sphi 0, %s578
    %s600 = sphi 0, %s602
    %s603 = sphi 0, %s600
    %s604 = sphi 0, %s603
    %s620 = sphi 0, %s604
    %s626 = sphi 0, %s628
    %s629 = sphi 0, %s626
    %s630 = sphi 0, %s629
    %s646 = sphi 0, %s630
    %s652 = sphi 0, %s654
    %s655 = sphi 0, %s652
    %s656 = sphi 0, %s655
    %s672 = sphi 0, %s656
  $region4: #{double_q_forward.1} parent=0 // loop_header_branch
    %35 = sbr.rel (%p33) target = $region8
  $region5: #{double_q_forward.1} parent=0 // loop_body
    %s37 = ssub.s32 %s32, 1
    %s38 = ssub.s32 %s32, 2
    %s39 = sadd.s32 %s32, 1
    %s41 = sadd.s32 %s40, 1
    %p44 = scmp.eq.s32.totalorder %s32, 1
    %p45 = scmp.ne.s32.totalorder %s40, %s42
    %p46 = scmp.eq.s32.totalorder %s32, 0
    %p47 = por %p45, %p46
    %p48 = scmp.ne.s32.totalorder %s40, %s42
    %p49 = scmp.eq.s32.totalorder %s37, 1
    %p50 = por %p48, %p49
    %p51 = scmp.ne.s32.totalorder %s42, %s43
    %p52 = scmp.eq.s32.totalorder %s37, 0
    %p53 = por %p51, %p52
    %p54 = scmp.ne.s32.totalorder %s42, %s43
    %p55 = scmp.eq.s32.totalorder %s38, 1
    %p56 = por %p54, %p55
    %p58 = scmp.ne.s32.totalorder %s43, %s57
    %p59 = scmp.eq.s32.totalorder %s38, 0
    %p60 = por %p58, %p59
    %s62 = sadd.s32 %s61, 1
    %p65 = scmp.eq.s32.totalorder %s32, 1
    %p66 = scmp.ne.s32.totalorder %s61, %s63
    %p67 = scmp.eq.s32.totalorder %s32, 0
    %p68 = por %p66, %p67
    %p69 = scmp.ne.s32.totalorder %s61, %s63
    %p70 = scmp.eq.s32.totalorder %s37, 1
    %p71 = por %p69, %p70
    %p72 = scmp.ne.s32.totalorder %s63, %s64
    %p73 = scmp.eq.s32.totalorder %s37, 0
    %p74 = por %p72, %p73
    %p75 = scmp.ne.s32.totalorder %s63, %s64
    %p76 = scmp.eq.s32.totalorder %s38, 1
    %p77 = por %p75, %p76
    %p79 = scmp.ne.s32.totalorder %s64, %s78
    %p80 = scmp.eq.s32.totalorder %s38, 0
    %p81 = por %p79, %p80
    %s82 = ssub.s32 %s32, %s39
    %p83 = scmp.eq.s32.totalorder %s82, 0
    %s85 = sadd.s32 %s84, 1
    %s86 = scalar_select %p83, %s84, %s85
    %p89 = pneg %p83
    %p90 = scmp.eq.s32.totalorder %s32, 1
    %p91 = por %p89, %p90
    %p92 = scmp.ne.s32.totalorder %s84, %s87
    %p93 = scmp.eq.s32.totalorder %s32, 0
    %p94 = por %p92, %p93
    %p95 = scmp.ne.s32.totalorder %s84, %s87
    %p96 = scmp.eq.s32.totalorder %s37, 1
    %p97 = por %p95, %p96
    %p98 = scmp.ne.s32.totalorder %s87, %s88
    %p99 = scmp.eq.s32.totalorder %s37, 0
    %p100 = por %p98, %p99
    %p101 = scmp.ne.s32.totalorder %s87, %s88
    %p102 = scmp.eq.s32.totalorder %s38, 1
    %p103 = por %p101, %p102
    %p105 = scmp.ne.s32.totalorder %s88, %s104
    %p106 = scmp.eq.s32.totalorder %s38, 0
    %p107 = por %p105, %p106
    %s108 = ssub.s32 %s32, %s39
    %p109 = scmp.eq.s32.totalorder %s108, 0
    %s111 = sadd.s32 %s110, 1
    %s112 = scalar_select %p109, %s110, %s111
    %p115 = pneg %p109
    %p116 = scmp.eq.s32.totalorder %s32, 1
    %p117 = por %p115, %p116
    %p118 = scmp.ne.s32.totalorder %s110, %s113
    %p119 = scmp.eq.s32.totalorder %s32, 0
    %p120 = por %p118, %p119
    %p121 = scmp.ne.s32.totalorder %s110, %s113
    %p122 = scmp.eq.s32.totalorder %s37, 1
    %p123 = por %p121, %p122
    %p124 = scmp.ne.s32.totalorder %s113, %s114
    %p125 = scmp.eq.s32.totalorder %s37, 0
    %p126 = por %p124, %p125
    %p127 = scmp.ne.s32.totalorder %s113, %s114
    %p128 = scmp.eq.s32.totalorder %s38, 1
    %p129 = por %p127, %p128
    %p131 = scmp.ne.s32.totalorder %s114, %s130
    %p132 = scmp.eq.s32.totalorder %s38, 0
    %p133 = por %p131, %p132
    %s134 = ssub.s32 %s32, %s39
    %p135 = scmp.eq.s32.totalorder %s134, 0
    %s137 = sadd.s32 %s136, 1
    %s138 = scalar_select %p135, %s136, %s137
    %p141 = pneg %p135
    %p142 = scmp.eq.s32.totalorder %s32, 1
    %p143 = por %p141, %p142
    %p144 = scmp.ne.s32.totalorder %s136, %s139
    %p145 = scmp.eq.s32.totalorder %s32, 0
    %p146 = por %p144, %p145
    %p147 = scmp.ne.s32.totalorder %s136, %s139
    %p148 = scmp.eq.s32.totalorder %s37, 1
    %p149 = por %p147, %p148
    %p150 = scmp.ne.s32.totalorder %s139, %s140
    %p151 = scmp.eq.s32.totalorder %s37, 0
    %p152 = por %p150, %p151
    %p153 = scmp.ne.s32.totalorder %s139, %s140
    %p154 = scmp.eq.s32.totalorder %s38, 1
    %p155 = por %p153, %p154
    %p157 = scmp.ne.s32.totalorder %s140, %s156
    %p158 = scmp.eq.s32.totalorder %s38, 0
    %p159 = por %p157, %p158
    %s160 = ssub.s32 %s32, %s39
    %p161 = scmp.eq.s32.totalorder %s160, 0
    %s163 = sadd.s32 %s162, 1
    %s164 = scalar_select %p161, %s162, %s163
    %p167 = pneg %p161
    %p168 = scmp.eq.s32.totalorder %s32, 1
    %p169 = por %p167, %p168
    %p170 = scmp.ne.s32.totalorder %s162, %s165
    %p171 = scmp.eq.s32.totalorder %s32, 0
    %p172 = por %p170, %p171
    %p173 = scmp.ne.s32.totalorder %s162, %s165
    %p174 = scmp.eq.s32.totalorder %s37, 1
    %p175 = por %p173, %p174
    %p176 = scmp.ne.s32.totalorder %s165, %s166
    %p177 = scmp.eq.s32.totalorder %s37, 0
    %p178 = por %p176, %p177
    %p179 = scmp.ne.s32.totalorder %s165, %s166
    %p180 = scmp.eq.s32.totalorder %s38, 1
    %p181 = por %p179, %p180
    %p183 = scmp.ne.s32.totalorder %s166, %s182
    %p184 = scmp.eq.s32.totalorder %s38, 0
    %p185 = por %p183, %p184
    %s187 = sadd.s32 %s186, 1
    %p190 = scmp.eq.s32.totalorder %s32, 1
    %p191 = scmp.ne.s32.totalorder %s186, %s188
    %p192 = scmp.eq.s32.totalorder %s32, 0
    %p193 = por %p191, %p192
    %p194 = scmp.ne.s32.totalorder %s186, %s188
    %p195 = scmp.eq.s32.totalorder %s37, 1
    %p196 = por %p194, %p195
    %p197 = scmp.ne.s32.totalorder %s188, %s189
    %p198 = scmp.eq.s32.totalorder %s37, 0
    %p199 = por %p197, %p198
    %p200 = scmp.ne.s32.totalorder %s188, %s189
    %p201 = scmp.eq.s32.totalorder %s38, 1
    %p202 = por %p200, %p201
    %p204 = scmp.ne.s32.totalorder %s189, %s203
    %p205 = scmp.eq.s32.totalorder %s38, 0
    %p206 = por %p204, %p205
    %s208 = sadd.s32 %s207, 1
    %p211 = scmp.eq.s32.totalorder %s32, 1
    %p212 = scmp.ne.s32.totalorder %s207, %s209
    %p213 = scmp.eq.s32.totalorder %s32, 0
    %p214 = por %p212, %p213
    %p215 = scmp.ne.s32.totalorder %s207, %s209
    %p216 = scmp.eq.s32.totalorder %s37, 1
    %p217 = por %p215, %p216
    %p218 = scmp.ne.s32.totalorder %s209, %s210
    %p219 = scmp.eq.s32.totalorder %s37, 0
    %p220 = por %p218, %p219
    %p221 = scmp.ne.s32.totalorder %s209, %s210
    %p222 = scmp.eq.s32.totalorder %s38, 1
    %p223 = por %p221, %p222
    %p225 = scmp.ne.s32.totalorder %s210, %s224
    %p226 = scmp.eq.s32.totalorder %s38, 0
    %p227 = por %p225, %p226
    %s229 = sadd.s32 %s228, 1
    %p232 = scmp.eq.s32.totalorder %s32, 1
    %p233 = scmp.ne.s32.totalorder %s228, %s230
    %p234 = scmp.eq.s32.totalorder %s32, 0
    %p235 = por %p233, %p234
    %p236 = scmp.ne.s32.totalorder %s228, %s230
    %p237 = scmp.eq.s32.totalorder %s37, 1
    %p238 = por %p236, %p237
    %p239 = scmp.ne.s32.totalorder %s230, %s231
    %p240 = scmp.eq.s32.totalorder %s37, 0
    %p241 = por %p239, %p240
    %p242 = scmp.ne.s32.totalorder %s230, %s231
    %p243 = scmp.eq.s32.totalorder %s38, 1
    %p244 = por %p242, %p243
    %p246 = scmp.ne.s32.totalorder %s231, %s245
    %p247 = scmp.eq.s32.totalorder %s38, 0
    %p248 = por %p246, %p247
    %s249 = ssub.s32 %s32, %s39
    %p250 = scmp.eq.s32.totalorder %s249, 0
    %s252 = sadd.s32 %s251, 1
    %s253 = scalar_select %p250, %s251, %s252
    %p256 = pneg %p250
    %p257 = scmp.eq.s32.totalorder %s32, 1
    %p258 = por %p256, %p257
    %p259 = scmp.ne.s32.totalorder %s251, %s254
    %p260 = scmp.eq.s32.totalorder %s32, 0
    %p261 = por %p259, %p260
    %p262 = scmp.ne.s32.totalorder %s251, %s254
    %p263 = scmp.eq.s32.totalorder %s37, 1
    %p264 = por %p262, %p263
    %p265 = scmp.ne.s32.totalorder %s254, %s255
    %p266 = scmp.eq.s32.totalorder %s37, 0
    %p267 = por %p265, %p266
    %p268 = scmp.ne.s32.totalorder %s254, %s255
    %p269 = scmp.eq.s32.totalorder %s38, 1
    %p270 = por %p268, %p269
    %p272 = scmp.ne.s32.totalorder %s255, %s271
    %p273 = scmp.eq.s32.totalorder %s38, 0
    %p274 = por %p272, %p273
    %s275 = ssub.s32 %s32, %s39
    %p276 = scmp.eq.s32.totalorder %s275, 0
    %s278 = sadd.s32 %s277, 1
    %s279 = scalar_select %p276, %s277, %s278
    %p282 = pneg %p276
    %p283 = scmp.eq.s32.totalorder %s32, 1
    %p284 = por %p282, %p283
    %p285 = scmp.ne.s32.totalorder %s277, %s280
    %p286 = scmp.eq.s32.totalorder %s32, 0
    %p287 = por %p285, %p286
    %p288 = scmp.ne.s32.totalorder %s277, %s280
    %p289 = scmp.eq.s32.totalorder %s37, 1
    %p290 = por %p288, %p289
    %p291 = scmp.ne.s32.totalorder %s280, %s281
    %p292 = scmp.eq.s32.totalorder %s37, 0
    %p293 = por %p291, %p292
    %p294 = scmp.ne.s32.totalorder %s280, %s281
    %p295 = scmp.eq.s32.totalorder %s38, 1
    %p296 = por %p294, %p295
    %p298 = scmp.ne.s32.totalorder %s281, %s297
    %p299 = scmp.eq.s32.totalorder %s38, 0
    %p300 = por %p298, %p299
    %s301 = ssub.s32 %s32, %s39
    %p302 = scmp.eq.s32.totalorder %s301, 0
    %s304 = sadd.s32 %s303, 1
    %s305 = scalar_select %p302, %s303, %s304
    %p308 = pneg %p302
    %p309 = scmp.eq.s32.totalorder %s32, 1
    %p310 = por %p308, %p309
    %p311 = scmp.ne.s32.totalorder %s303, %s306
    %p312 = scmp.eq.s32.totalorder %s32, 0
    %p313 = por %p311, %p312
    %p314 = scmp.ne.s32.totalorder %s303, %s306
    %p315 = scmp.eq.s32.totalorder %s37, 1
    %p316 = por %p314, %p315
    %p317 = scmp.ne.s32.totalorder %s306, %s307
    %p318 = scmp.eq.s32.totalorder %s37, 0
    %p319 = por %p317, %p318
    %p320 = scmp.ne.s32.totalorder %s306, %s307
    %p321 = scmp.eq.s32.totalorder %s38, 1
    %p322 = por %p320, %p321
    %p324 = scmp.ne.s32.totalorder %s307, %s323
    %p325 = scmp.eq.s32.totalorder %s38, 0
    %p326 = por %p324, %p325
    %s328 = sadd.s32 %s327, 1
    %p331 = scmp.eq.s32.totalorder %s32, 1
    %p332 = scmp.ne.s32.totalorder %s327, %s329
    %p333 = scmp.eq.s32.totalorder %s32, 0
    %p334 = por %p332, %p333
    %p335 = scmp.ne.s32.totalorder %s327, %s329
    %p336 = scmp.eq.s32.totalorder %s37, 1
    %p337 = por %p335, %p336
    %p338 = scmp.ne.s32.totalorder %s329, %s330
    %p339 = scmp.eq.s32.totalorder %s37, 0
    %p340 = por %p338, %p339
    %p341 = scmp.ne.s32.totalorder %s329, %s330
    %p342 = scmp.eq.s32.totalorder %s38, 1
    %p343 = por %p341, %p342
    %p345 = scmp.ne.s32.totalorder %s330, %s344
    %p346 = scmp.eq.s32.totalorder %s38, 0
    %p347 = por %p345, %p346
    %s349 = sadd.s32 %s348, 1
    %p352 = scmp.eq.s32.totalorder %s32, 1
    %p353 = scmp.ne.s32.totalorder %s348, %s350
    %p354 = scmp.eq.s32.totalorder %s32, 0
    %p355 = por %p353, %p354
    %p356 = scmp.ne.s32.totalorder %s348, %s350
    %p357 = scmp.eq.s32.totalorder %s37, 1
    %p358 = por %p356, %p357
    %p359 = scmp.ne.s32.totalorder %s350, %s351
    %p360 = scmp.eq.s32.totalorder %s37, 0
    %p361 = por %p359, %p360
    %p362 = scmp.ne.s32.totalorder %s350, %s351
    %p363 = scmp.eq.s32.totalorder %s38, 1
    %p364 = por %p362, %p363
    %p366 = scmp.ne.s32.totalorder %s351, %s365
    %p367 = scmp.eq.s32.totalorder %s38, 0
    %p368 = por %p366, %p367
    %s370 = sadd.s32 %s369, 1
    %p373 = scmp.eq.s32.totalorder %s32, 1
    %p374 = scmp.ne.s32.totalorder %s369, %s371
    %p375 = scmp.eq.s32.totalorder %s32, 0
    %p376 = por %p374, %p375
    %p377 = scmp.ne.s32.totalorder %s369, %s371
    %p378 = scmp.eq.s32.totalorder %s37, 1
    %p379 = por %p377, %p378
    %p380 = scmp.ne.s32.totalorder %s371, %s372
    %p381 = scmp.eq.s32.totalorder %s37, 0
    %p382 = por %p380, %p381
    %p383 = scmp.ne.s32.totalorder %s371, %s372
    %p384 = scmp.eq.s32.totalorder %s38, 1
    %p385 = por %p383, %p384
    %p387 = scmp.ne.s32.totalorder %s372, %s386
    %p388 = scmp.eq.s32.totalorder %s38, 0
    %p389 = por %p387, %p388
    %s390 = ssub.s32 %s32, %s39
    %p391 = scmp.eq.s32.totalorder %s390, 0
    %s393 = sadd.s32 %s392, 1
    %s394 = scalar_select %p391, %s392, %s393
    %p397 = pneg %p391
    %p398 = scmp.eq.s32.totalorder %s32, 1
    %p399 = por %p397, %p398
    %p400 = scmp.ne.s32.totalorder %s392, %s395
    %p401 = scmp.eq.s32.totalorder %s32, 0
    %p402 = por %p400, %p401
    %p403 = scmp.ne.s32.totalorder %s392, %s395
    %p404 = scmp.eq.s32.totalorder %s37, 1
    %p405 = por %p403, %p404
    %p406 = scmp.ne.s32.totalorder %s395, %s396
    %p407 = scmp.eq.s32.totalorder %s37, 0
    %p408 = por %p406, %p407
    %p409 = scmp.ne.s32.totalorder %s395, %s396
    %p410 = scmp.eq.s32.totalorder %s38, 1
    %p411 = por %p409, %p410
    %p413 = scmp.ne.s32.totalorder %s396, %s412
    %p414 = scmp.eq.s32.totalorder %s38, 0
    %p415 = por %p413, %p414
    %s416 = ssub.s32 %s32, %s39
    %p417 = scmp.eq.s32.totalorder %s416, 0
    %s419 = sadd.s32 %s418, 1
    %s420 = scalar_select %p417, %s418, %s419
    %p423 = pneg %p417
    %p424 = scmp.eq.s32.totalorder %s32, 1
    %p425 = por %p423, %p424
    %p426 = scmp.ne.s32.totalorder %s418, %s421
    %p427 = scmp.eq.s32.totalorder %s32, 0
    %p428 = por %p426, %p427
    %p429 = scmp.ne.s32.totalorder %s418, %s421
    %p430 = scmp.eq.s32.totalorder %s37, 1
    %p431 = por %p429, %p430
    %p432 = scmp.ne.s32.totalorder %s421, %s422
    %p433 = scmp.eq.s32.totalorder %s37, 0
    %p434 = por %p432, %p433
    %p435 = scmp.ne.s32.totalorder %s421, %s422
    %p436 = scmp.eq.s32.totalorder %s38, 1
    %p437 = por %p435, %p436
    %p439 = scmp.ne.s32.totalorder %s422, %s438
    %p440 = scmp.eq.s32.totalorder %s38, 0
    %p441 = por %p439, %p440
    %s442 = ssub.s32 %s32, %s39
    %p443 = scmp.eq.s32.totalorder %s442, 0
    %s445 = sadd.s32 %s444, 1
    %s446 = scalar_select %p443, %s444, %s445
    %p449 = pneg %p443
    %p450 = scmp.eq.s32.totalorder %s32, 1
    %p451 = por %p449, %p450
    %p452 = scmp.ne.s32.totalorder %s444, %s447
    %p453 = scmp.eq.s32.totalorder %s32, 0
    %p454 = por %p452, %p453
    %p455 = scmp.ne.s32.totalorder %s444, %s447
    %p456 = scmp.eq.s32.totalorder %s37, 1
    %p457 = por %p455, %p456
    %p458 = scmp.ne.s32.totalorder %s447, %s448
    %p459 = scmp.eq.s32.totalorder %s37, 0
    %p460 = por %p458, %p459
    %p461 = scmp.ne.s32.totalorder %s447, %s448
    %p462 = scmp.eq.s32.totalorder %s38, 1
    %p463 = por %p461, %p462
    %p465 = scmp.ne.s32.totalorder %s448, %s464
    %p466 = scmp.eq.s32.totalorder %s38, 0
    %p467 = por %p465, %p466
    %s468 = ssub.s32 %s32, %s39
    %p469 = scmp.eq.s32.totalorder %s468, 0
    %s471 = sadd.s32 %s470, 1
    %s472 = scalar_select %p469, %s470, %s471
    %p475 = pneg %p469
    %p476 = scmp.eq.s32.totalorder %s32, 1
    %p477 = por %p475, %p476
    %p478 = scmp.ne.s32.totalorder %s470, %s473
    %p479 = scmp.eq.s32.totalorder %s32, 0
    %p480 = por %p478, %p479
    %p481 = scmp.ne.s32.totalorder %s470, %s473
    %p482 = scmp.eq.s32.totalorder %s37, 1
    %p483 = por %p481, %p482
    %p484 = scmp.ne.s32.totalorder %s473, %s474
    %p485 = scmp.eq.s32.totalorder %s37, 0
    %p486 = por %p484, %p485
    %p487 = scmp.ne.s32.totalorder %s473, %s474
    %p488 = scmp.eq.s32.totalorder %s38, 1
    %p489 = por %p487, %p488
    %p491 = scmp.ne.s32.totalorder %s474, %s490
    %p492 = scmp.eq.s32.totalorder %s38, 0
    %p493 = por %p491, %p492
    %s494 = ssub.s32 %s32, %s39
    %p495 = scmp.eq.s32.totalorder %s494, 0
    %s497 = sadd.s32 %s496, 1
    %s498 = scalar_select %p495, %s496, %s497
    %p501 = pneg %p495
    %p502 = scmp.eq.s32.totalorder %s32, 1
    %p503 = por %p501, %p502
    %p504 = scmp.ne.s32.totalorder %s496, %s499
    %p505 = scmp.eq.s32.totalorder %s32, 0
    %p506 = por %p504, %p505
    %p507 = scmp.ne.s32.totalorder %s496, %s499
    %p508 = scmp.eq.s32.totalorder %s37, 1
    %p509 = por %p507, %p508
    %p510 = scmp.ne.s32.totalorder %s499, %s500
    %p511 = scmp.eq.s32.totalorder %s37, 0
    %p512 = por %p510, %p511
    %p513 = scmp.ne.s32.totalorder %s499, %s500
    %p514 = scmp.eq.s32.totalorder %s38, 1
    %p515 = por %p513, %p514
    %p517 = scmp.ne.s32.totalorder %s500, %s516
    %p518 = scmp.eq.s32.totalorder %s38, 0
    %p519 = por %p517, %p518
    %s520 = ssub.s32 %s32, %s39
    %p521 = scmp.eq.s32.totalorder %s520, 0
    %s523 = sadd.s32 %s522, 1
    %s524 = scalar_select %p521, %s522, %s523
    %p527 = pneg %p521
    %p528 = scmp.eq.s32.totalorder %s32, 1
    %p529 = por %p527, %p528
    %p530 = scmp.ne.s32.totalorder %s522, %s525
    %p531 = scmp.eq.s32.totalorder %s32, 0
    %p532 = por %p530, %p531
    %p533 = scmp.ne.s32.totalorder %s522, %s525
    %p534 = scmp.eq.s32.totalorder %s37, 1
    %p535 = por %p533, %p534
    %p536 = scmp.ne.s32.totalorder %s525, %s526
    %p537 = scmp.eq.s32.totalorder %s37, 0
    %p538 = por %p536, %p537
    %p539 = scmp.ne.s32.totalorder %s525, %s526
    %p540 = scmp.eq.s32.totalorder %s38, 1
    %p541 = por %p539, %p540
    %p543 = scmp.ne.s32.totalorder %s526, %s542
    %p544 = scmp.eq.s32.totalorder %s38, 0
    %p545 = por %p543, %p544
    %s546 = ssub.s32 %s32, %s39
    %p547 = scmp.eq.s32.totalorder %s546, 0
    %s549 = sadd.s32 %s548, 1
    %s550 = scalar_select %p547, %s548, %s549
    %p553 = pneg %p547
    %p554 = scmp.eq.s32.totalorder %s32, 1
    %p555 = por %p553, %p554
    %p556 = scmp.ne.s32.totalorder %s548, %s551
    %p557 = scmp.eq.s32.totalorder %s32, 0
    %p558 = por %p556, %p557
    %p559 = scmp.ne.s32.totalorder %s548, %s551
    %p560 = scmp.eq.s32.totalorder %s37, 1
    %p561 = por %p559, %p560
    %p562 = scmp.ne.s32.totalorder %s551, %s552
    %p563 = scmp.eq.s32.totalorder %s37, 0
    %p564 = por %p562, %p563
    %p565 = scmp.ne.s32.totalorder %s551, %s552
    %p566 = scmp.eq.s32.totalorder %s38, 1
    %p567 = por %p565, %p566
    %p569 = scmp.ne.s32.totalorder %s552, %s568
    %p570 = scmp.eq.s32.totalorder %s38, 0
    %p571 = por %p569, %p570
    %s572 = ssub.s32 %s32, %s39
    %p573 = scmp.eq.s32.totalorder %s572, 0
    %s575 = sadd.s32 %s574, 1
    %s576 = scalar_select %p573, %s574, %s575
    %p579 = pneg %p573
    %p580 = scmp.eq.s32.totalorder %s32, 1
    %p581 = por %p579, %p580
    %p582 = scmp.ne.s32.totalorder %s574, %s577
    %p583 = scmp.eq.s32.totalorder %s32, 0
    %p584 = por %p582, %p583
    %p585 = scmp.ne.s32.totalorder %s574, %s577
    %p586 = scmp.eq.s32.totalorder %s37, 1
    %p587 = por %p585, %p586
    %p588 = scmp.ne.s32.totalorder %s577, %s578
    %p589 = scmp.eq.s32.totalorder %s37, 0
    %p590 = por %p588, %p589
    %p591 = scmp.ne.s32.totalorder %s577, %s578
    %p592 = scmp.eq.s32.totalorder %s38, 1
    %p593 = por %p591, %p592
    %p595 = scmp.ne.s32.totalorder %s578, %s594
    %p596 = scmp.eq.s32.totalorder %s38, 0
    %p597 = por %p595, %p596
    %s598 = ssub.s32 %s32, %s39
    %p599 = scmp.eq.s32.totalorder %s598, 0
    %s601 = sadd.s32 %s600, 1
    %s602 = scalar_select %p599, %s600, %s601
    %p605 = pneg %p599
    %p606 = scmp.eq.s32.totalorder %s32, 1
    %p607 = por %p605, %p606
    %p608 = scmp.ne.s32.totalorder %s600, %s603
    %p609 = scmp.eq.s32.totalorder %s32, 0
    %p610 = por %p608, %p609
    %p611 = scmp.ne.s32.totalorder %s600, %s603
    %p612 = scmp.eq.s32.totalorder %s37, 1
    %p613 = por %p611, %p612
    %p614 = scmp.ne.s32.totalorder %s603, %s604
    %p615 = scmp.eq.s32.totalorder %s37, 0
    %p616 = por %p614, %p615
    %p617 = scmp.ne.s32.totalorder %s603, %s604
    %p618 = scmp.eq.s32.totalorder %s38, 1
    %p619 = por %p617, %p618
    %p621 = scmp.ne.s32.totalorder %s604, %s620
    %p622 = scmp.eq.s32.totalorder %s38, 0
    %p623 = por %p621, %p622
    %s624 = ssub.s32 %s32, %s39
    %p625 = scmp.eq.s32.totalorder %s624, 0
    %s627 = sadd.s32 %s626, 1
    %s628 = scalar_select %p625, %s626, %s627
    %p631 = pneg %p625
    %p632 = scmp.eq.s32.totalorder %s32, 1
    %p633 = por %p631, %p632
    %p634 = scmp.ne.s32.totalorder %s626, %s629
    %p635 = scmp.eq.s32.totalorder %s32, 0
    %p636 = por %p634, %p635
    %p637 = scmp.ne.s32.totalorder %s626, %s629
    %p638 = scmp.eq.s32.totalorder %s37, 1
    %p639 = por %p637, %p638
    %p640 = scmp.ne.s32.totalorder %s629, %s630
    %p641 = scmp.eq.s32.totalorder %s37, 0
    %p642 = por %p640, %p641
    %p643 = scmp.ne.s32.totalorder %s629, %s630
    %p644 = scmp.eq.s32.totalorder %s38, 1
    %p645 = por %p643, %p644
    %p647 = scmp.ne.s32.totalorder %s630, %s646
    %p648 = scmp.eq.s32.totalorder %s38, 0
    %p649 = por %p647, %p648
    %s650 = ssub.s32 %s32, %s39
    %p651 = scmp.eq.s32.totalorder %s650, 0
    %s653 = sadd.s32 %s652, 1
    %s654 = scalar_select %p651, %s652, %s653
    %p657 = pneg %p651
    %p658 = scmp.eq.s32.totalorder %s32, 1
    %p659 = por %p657, %p658
    %p660 = scmp.ne.s32.totalorder %s652, %s655
    %p661 = scmp.eq.s32.totalorder %s32, 0
    %p662 = por %p660, %p661
    %p663 = scmp.ne.s32.totalorder %s652, %s655
    %p664 = scmp.eq.s32.totalorder %s37, 1
    %p665 = por %p663, %p664
    %p666 = scmp.ne.s32.totalorder %s655, %s656
    %p667 = scmp.eq.s32.totalorder %s37, 0
    %p668 = por %p666, %p667
    %p669 = scmp.ne.s32.totalorder %s655, %s656
    %p670 = scmp.eq.s32.totalorder %s38, 1
    %p671 = por %p669, %p670
    %p673 = scmp.ne.s32.totalorder %s656, %s672
    %p674 = scmp.eq.s32.totalorder %s38, 0
    %p675 = por %p673, %p674
    %p676 = scmp.le.s32.totalorder 1, %s32
    %p677 = scmp.lt.s32.totalorder %s32, 3
    %p678 = pnand %p676, %p677
    %p679 = pneg %p678
    // Predicated region
    $region9: #{double_q_forward.1} parent=5 // pred_check
      _
    $region10: #{double_q_forward.1} parent=5 // pred_check_branch
      %681 = sbr.rel (%p678) target = $region12
    $region11: #{double_q_forward.1} parent=5 // pred_region
      %s682 = ssub.s32 %s32, 1
      // Predicated region
      $region13: #{double_q_forward.1} parent=11 // pred_check
        %p683 = pneg %p53
      $region14: #{double_q_forward.1} parent=11 // pred_check_branch
        %685 = sbr.rel (%p683) target = $region16
      $region15: #{double_q_forward.1} parent=11 // pred_region
        _
      $region16: #{double_q_forward.1} parent=11 // pred_fallthru
        _
      // Predicated region
      $region17: #{double_q_forward.1} parent=11 // pred_check
        %p686 = pneg %p74
      $region18: #{double_q_forward.1} parent=11 // pred_check_branch
        %688 = sbr.rel (%p686) target = $region20
      $region19: #{double_q_forward.1} parent=11 // pred_region
        _
      $region20: #{double_q_forward.1} parent=11 // pred_fallthru
        _
      // Predicated region
      $region21: #{double_q_forward.1} parent=11 // pred_check
        %p689 = pneg %p199
      $region22: #{double_q_forward.1} parent=11 // pred_check_branch
        %691 = sbr.rel (%p689) target = $region24
      $region23: #{double_q_forward.1} parent=11 // pred_region
        _
      $region24: #{double_q_forward.1} parent=11 // pred_fallthru
        _
      // Predicated region
      $region25: #{double_q_forward.1} parent=11 // pred_check
        %p692 = pneg %p220
      $region26: #{double_q_forward.1} parent=11 // pred_check_branch
        %694 = sbr.rel (%p692) target = $region28
      $region27: #{double_q_forward.1} parent=11 // pred_region
        _
      $region28: #{double_q_forward.1} parent=11 // pred_fallthru
        _
      // Predicated region
      $region29: #{double_q_forward.1} parent=11 // pred_check
        %p695 = pneg %p241
      $region30: #{double_q_forward.1} parent=11 // pred_check_branch
        %697 = sbr.rel (%p695) target = $region32
      $region31: #{double_q_forward.1} parent=11 // pred_region
        _
      $region32: #{double_q_forward.1} parent=11 // pred_fallthru
        _
      // Predicated region
      $region33: #{double_q_forward.1} parent=11 // pred_check
        %p698 = pneg %p340
      $region34: #{double_q_forward.1} parent=11 // pred_check_branch
        %700 = sbr.rel (%p698) target = $region36
      $region35: #{double_q_forward.1} parent=11 // pred_region
        _
      $region36: #{double_q_forward.1} parent=11 // pred_fallthru
        _
      // Predicated region
      $region37: #{double_q_forward.1} parent=11 // pred_check
        %p701 = pneg %p361
      $region38: #{double_q_forward.1} parent=11 // pred_check_branch
        %703 = sbr.rel (%p701) target = $region40
      $region39: #{double_q_forward.1} parent=11 // pred_region
        _
      $region40: #{double_q_forward.1} parent=11 // pred_fallthru
        _
      // Predicated region
      $region41: #{double_q_forward.1} parent=11 // pred_check
        %p704 = pneg %p382
      $region42: #{double_q_forward.1} parent=11 // pred_check_branch
        %706 = sbr.rel (%p704) target = $region44
      $region43: #{double_q_forward.1} parent=11 // pred_region
        _
      $region44: #{double_q_forward.1} parent=11 // pred_fallthru
        _
    $region12: #{double_q_forward.1} parent=5 // pred_fallthru
      _
    %p707 = scmp.lt.s32.totalorder %s32, 2
    // Predicated region
    $region45: #{double_q_forward.1} parent=5 // pred_check
      %p708 = pneg %p707
    $region46: #{double_q_forward.1} parent=5 // pred_check_branch
      %710 = sbr.rel (%p708) target = $region48
    $region47: #{double_q_forward.1} parent=5 // pred_region
      // Predicated region
      $region49: #{double_q_forward.1} parent=47 // pred_check
        %p711 = pneg %p94
      $region50: #{double_q_forward.1} parent=47 // pred_check_branch
        %713 = sbr.rel (%p711) target = $region52
      $region51: #{double_q_forward.1} parent=47 // pred_region
        %p714 = scmp.lt.s32.totalorder %s32, 1
        %s715 = scalar_select %p714, %s32, 1
        %s716 = smul.addr %s715, 5
        %s717 = smul.addr %s716, 4
        %s718 = scalar_lea.vmem %s2, %s717
      $region52: #{double_q_forward.1} parent=47 // pred_fallthru
        _
      // Predicated region
      $region53: #{double_q_forward.1} parent=47 // pred_check
        %p719 = pneg %p120
      $region54: #{double_q_forward.1} parent=47 // pred_check_branch
        %721 = sbr.rel (%p719) target = $region56
      $region55: #{double_q_forward.1} parent=47 // pred_region
        %p722 = scmp.lt.s32.totalorder %s32, 1
        %s723 = scalar_select %p722, %s32, 1
        %s724 = scalar_lea.vmem %s3, %s723
      $region56: #{double_q_forward.1} parent=47 // pred_fallthru
        _
      // Predicated region
      $region57: #{double_q_forward.1} parent=47 // pred_check
        %p725 = pneg %p146
      $region58: #{double_q_forward.1} parent=47 // pred_check_branch
        %727 = sbr.rel (%p725) target = $region60
      $region59: #{double_q_forward.1} parent=47 // pred_region
        %p728 = scmp.lt.s32.totalorder %s32, 1
        %s729 = scalar_select %p728, %s32, 1
        %s730 = smul.addr %s729, 4
        %s731 = smul.addr %s730, 4
        %s732 = scalar_lea.vmem %s4, %s731
      $region60: #{double_q_forward.1} parent=47 // pred_fallthru
        _
      // Predicated region
      $region61: #{double_q_forward.1} parent=47 // pred_check
        %p733 = pneg %p172
      $region62: #{double_q_forward.1} parent=47 // pred_check_branch
        %735 = sbr.rel (%p733) target = $region64
      $region63: #{double_q_forward.1} parent=47 // pred_region
        %p736 = scmp.lt.s32.totalorder %s32, 1
        %s737 = scalar_select %p736, %s32, 1
        %s738 = scalar_lea.vmem %s5, %s737
      $region64: #{double_q_forward.1} parent=47 // pred_fallthru
        _
      // Predicated region
      $region65: #{double_q_forward.1} parent=47 // pred_check
        %p739 = pneg %p261
      $region66: #{double_q_forward.1} parent=47 // pred_check_branch
        %741 = sbr.rel (%p739) target = $region68
      $region67: #{double_q_forward.1} parent=47 // pred_region
        %p742 = scmp.lt.s32.totalorder %s32, 1
        %s743 = scalar_select %p742, %s32, 1
        %s744 = smul.addr %s743, 4
        %s745 = smul.addr %s744, 4
        %s746 = scalar_lea.vmem %s9, %s745
      $region68: #{double_q_forward.1} parent=47 // pred_fallthru
        _
      // Predicated region
      $region69: #{double_q_forward.1} parent=47 // pred_check
        %p747 = pneg %p287
      $region70: #{double_q_forward.1} parent=47 // pred_check_branch
        %749 = sbr.rel (%p747) target = $region72
      $region71: #{double_q_forward.1} parent=47 // pred_region
        %p750 = scmp.lt.s32.totalorder %s32, 1
        %s751 = scalar_select %p750, %s32, 1
        %s752 = smul.addr %s751, 4
        %s753 = smul.addr %s752, 4
        %s754 = scalar_lea.vmem %s10, %s753
      $region72: #{double_q_forward.1} parent=47 // pred_fallthru
        _
      // Predicated region
      $region73: #{double_q_forward.1} parent=47 // pred_check
        %p755 = pneg %p313
      $region74: #{double_q_forward.1} parent=47 // pred_check_branch
        %757 = sbr.rel (%p755) target = $region76
      $region75: #{double_q_forward.1} parent=47 // pred_region
        %p758 = scmp.lt.s32.totalorder %s32, 1
        %s759 = scalar_select %p758, %s32, 1
        %s760 = smul.addr %s759, 2
        %s761 = scalar_lea.vmem %s11, %s760
      $region76: #{double_q_forward.1} parent=47 // pred_fallthru
        _
      // Predicated region
      $region77: #{double_q_forward.1} parent=47 // pred_check
        %p762 = pneg %p402
      $region78: #{double_q_forward.1} parent=47 // pred_check_branch
        %764 = sbr.rel (%p762) target = $region80
      $region79: #{double_q_forward.1} parent=47 // pred_region
        %p765 = scmp.lt.s32.totalorder %s32, 1
        %s766 = scalar_select %p765, %s32, 1
        %s767 = smul.addr %s766, 8
        %s768 = smul.addr %s767, 4
        %s769 = scalar_lea.vmem %s15, %s768
      $region80: #{double_q_forward.1} parent=47 // pred_fallthru
        _
      // Predicated region
      $region81: #{double_q_forward.1} parent=47 // pred_check
        %p770 = pneg %p428
      $region82: #{double_q_forward.1} parent=47 // pred_check_branch
        %772 = sbr.rel (%p770) target = $region84
      $region83: #{double_q_forward.1} parent=47 // pred_region
        %p773 = scmp.lt.s32.totalorder %s32, 1
        %s774 = scalar_select %p773, %s32, 1
        %s775 = smul.addr %s774, 8
        %s776 = smul.addr %s775, 4
        %s777 = scalar_lea.vmem %s16, %s776
      $region84: #{double_q_forward.1} parent=47 // pred_fallthru
        _
      // Predicated region
      $region85: #{double_q_forward.1} parent=47 // pred_check
        %p778 = pneg %p454
      $region86: #{double_q_forward.1} parent=47 // pred_check_branch
        %780 = sbr.rel (%p778) target = $region88
      $region87: #{double_q_forward.1} parent=47 // pred_region
        %p781 = scmp.lt.s32.totalorder %s32, 1
        %s782 = scalar_select %p781, %s32, 1
        %s783 = smul.addr %s782, 4
        %s784 = scalar_lea.vmem %s17, %s783
      $region88: #{double_q_forward.1} parent=47 // pred_fallthru
        _
      // Predicated region
      $region89: #{double_q_forward.1} parent=47 // pred_check
        %p785 = pneg %p480
      $region90: #{double_q_forward.1} parent=47 // pred_check_branch
        %787 = sbr.rel (%p785) target = $region92
      $region91: #{double_q_forward.1} parent=47 // pred_region
        %p788 = scmp.lt.s32.totalorder %s32, 1
        %s789 = scalar_select %p788, %s32, 1
        %s790 = smul.addr %s789, 2
        %s791 = smul.addr %s790, 4
        %s792 = scalar_lea.vmem %s18, %s791
      $region92: #{double_q_forward.1} parent=47 // pred_fallthru
        _
      // Predicated region
      $region93: #{double_q_forward.1} parent=47 // pred_check
        %p793 = pneg %p506
      $region94: #{double_q_forward.1} parent=47 // pred_check_branch
        %795 = sbr.rel (%p793) target = $region96
      $region95: #{double_q_forward.1} parent=47 // pred_region
        %p796 = scmp.lt.s32.totalorder %s32, 1
        %s797 = scalar_select %p796, %s32, 1
        %s798 = scalar_lea.vmem %s19, %s797
      $region96: #{double_q_forward.1} parent=47 // pred_fallthru
        _
      // Predicated region
      $region97: #{double_q_forward.1} parent=47 // pred_check
        %p799 = pneg %p532
      $region98: #{double_q_forward.1} parent=47 // pred_check_branch
        %801 = sbr.rel (%p799) target = $region100
      $region99: #{double_q_forward.1} parent=47 // pred_region
        %p802 = scmp.lt.s32.totalorder %s32, 1
        %s803 = scalar_select %p802, %s32, 1
        %s804 = smul.addr %s803, 16
        %s805 = smul.addr %s804, 4
        %s806 = scalar_lea.vmem %s20, %s805
      $region100: #{double_q_forward.1} parent=47 // pred_fallthru
        _
      // Predicated region
      $region101: #{double_q_forward.1} parent=47 // pred_check
        %p807 = pneg %p558
      $region102: #{double_q_forward.1} parent=47 // pred_check_branch
        %809 = sbr.rel (%p807) target = $region104
      $region103: #{double_q_forward.1} parent=47 // pred_region
        %p810 = scmp.lt.s32.totalorder %s32, 1
        %s811 = scalar_select %p810, %s32, 1
        %s812 = scalar_lea.vmem %s21, %s811
      $region104: #{double_q_forward.1} parent=47 // pred_fallthru
        _
      // Predicated region
      $region105: #{double_q_forward.1} parent=47 // pred_check
        %p813 = pneg %p584
      $region106: #{double_q_forward.1} parent=47 // pred_check_branch
        %815 = sbr.rel (%p813) target = $region108
      $region107: #{double_q_forward.1} parent=47 // pred_region
        %p816 = scmp.lt.s32.totalorder %s32, 1
        %s817 = scalar_select %p816, %s32, 1
        %s818 = smul.addr %s817, 16
        %s819 = smul.addr %s818, 4
        %s820 = scalar_lea.vmem %s22, %s819
      $region108: #{double_q_forward.1} parent=47 // pred_fallthru
        _
      // Predicated region
      $region109: #{double_q_forward.1} parent=47 // pred_check
        %p821 = pneg %p610
      $region110: #{double_q_forward.1} parent=47 // pred_check_branch
        %823 = sbr.rel (%p821) target = $region112
      $region111: #{double_q_forward.1} parent=47 // pred_region
        %p824 = scmp.lt.s32.totalorder %s32, 1
        %s825 = scalar_select %p824, %s32, 1
        %s826 = scalar_lea.vmem %s23, %s825
      $region112: #{double_q_forward.1} parent=47 // pred_fallthru
        _
    $region48: #{double_q_forward.1} parent=5 // pred_fallthru
      _
    %p827 = scmp.le.s32.totalorder 1, %s32
    %p828 = scmp.lt.s32.totalorder %s32, 3
    %p829 = pnand %p827, %p828
    %p830 = pneg %p829
    // Predicated region
    $region113: #{double_q_forward.1} parent=5 // pred_check
      _
    $region114: #{double_q_forward.1} parent=5 // pred_check_branch
      %832 = sbr.rel (%p829) target = $region116
    $region115: #{double_q_forward.1} parent=5 // pred_region
      %s833 = ssub.s32 %s32, 1
      %p834 = pneg %p53
      %p835 = pneg %p50
      %p836 = pneg %p74
      %p837 = pneg %p71
      %p838 = scmp.lt.s32.totalorder %s37, 1
      %s839 = scalar_select %p838, %s37, 1
      %s840 = smul.addr %s839, 5
      %s841 = smul.addr %s840, 4
      %s842 = scalar_lea.vmem %s2, %s841
      %p843 = pneg %p100
      %p844 = pneg %p97
      %p845 = scmp.lt.s32.totalorder %s37, 1
      %s846 = scalar_select %p845, %s37, 1
      %s847 = scalar_lea.vmem %s3, %s846
      %p848 = pneg %p126
      %p849 = pneg %p123
      %p850 = scmp.lt.s32.totalorder %s37, 1
      %s851 = scalar_select %p850, %s37, 1
      %s852 = smul.addr %s851, 4
      %s853 = smul.addr %s852, 4
      %s854 = scalar_lea.vmem %s4, %s853
      %p855 = pneg %p152
      %p856 = pneg %p149
      %p857 = scmp.lt.s32.totalorder %s37, 1
      %s858 = scalar_select %p857, %s37, 1
      %s859 = scalar_lea.vmem %s5, %s858
      %p860 = pneg %p178
      %p861 = pneg %p175
      %p862 = pneg %p199
      %p863 = pneg %p196
      %p864 = pneg %p220
      %p865 = pneg %p217
      %p866 = pneg %p241
      %p867 = pneg %p238
      %p868 = scmp.lt.s32.totalorder %s37, 1
      %s869 = scalar_select %p868, %s37, 1
      %s870 = smul.addr %s869, 4
      %s871 = smul.addr %s870, 4
      %s872 = scalar_lea.vmem %s9, %s871
      %p873 = pneg %p267
      %p874 = pneg %p264
      %p875 = scmp.lt.s32.totalorder %s37, 1
      %s876 = scalar_select %p875, %s37, 1
      %s877 = smul.addr %s876, 4
      %s878 = smul.addr %s877, 4
      %s879 = scalar_lea.vmem %s10, %s878
      %p880 = pneg %p293
      %p881 = pneg %p290
      %p882 = scmp.lt.s32.totalorder %s37, 1
      %s883 = scalar_select %p882, %s37, 1
      %s884 = smul.addr %s883, 2
      %s885 = scalar_lea.vmem %s11, %s884
      %p886 = pneg %p319
      %p887 = pneg %p316
      %p888 = pneg %p340
      %p889 = pneg %p337
      %p890 = pneg %p361
      %p891 = pneg %p358
      %p892 = pneg %p382
      %p893 = pneg %p379
      %p894 = scmp.lt.s32.totalorder %s37, 1
      %s895 = scalar_select %p894, %s37, 1
      %s896 = smul.addr %s895, 8
      %s897 = smul.addr %s896, 4
      %s898 = scalar_lea.vmem %s15, %s897
      %p899 = pneg %p408
      %p900 = pneg %p405
      %p901 = scmp.lt.s32.totalorder %s37, 1
      %s902 = scalar_select %p901, %s37, 1
      %s903 = smul.addr %s902, 8
      %s904 = smul.addr %s903, 4
      %s905 = scalar_lea.vmem %s16, %s904
      %p906 = pneg %p434
      %p907 = pneg %p431
      %p908 = scmp.lt.s32.totalorder %s37, 1
      %s909 = scalar_select %p908, %s37, 1
      %s910 = smul.addr %s909, 4
      %s911 = scalar_lea.vmem %s17, %s910
      %p912 = pneg %p460
      %p913 = pneg %p457
      %p914 = scmp.lt.s32.totalorder %s37, 1
      %s915 = scalar_select %p914, %s37, 1
      %s916 = smul.addr %s915, 2
      %s917 = smul.addr %s916, 4
      %s918 = scalar_lea.vmem %s18, %s917
      %p919 = pneg %p486
      %p920 = pneg %p483
      %p921 = scmp.lt.s32.totalorder %s37, 1
      %s922 = scalar_select %p921, %s37, 1
      %s923 = scalar_lea.vmem %s19, %s922
      %p924 = pneg %p512
      %p925 = pneg %p509
      %p926 = scmp.lt.s32.totalorder %s37, 1
      %s927 = scalar_select %p926, %s37, 1
      %s928 = smul.addr %s927, 16
      %s929 = smul.addr %s928, 4
      %s930 = scalar_lea.vmem %s20, %s929
      %p931 = pneg %p538
      %p932 = pneg %p535
      %p933 = scmp.lt.s32.totalorder %s37, 1
      %s934 = scalar_select %p933, %s37, 1
      %s935 = scalar_lea.vmem %s21, %s934
      %p936 = pneg %p564
      %p937 = pneg %p561
      %p938 = scmp.lt.s32.totalorder %s37, 1
      %s939 = scalar_select %p938, %s37, 1
      %s940 = smul.addr %s939, 16
      %s941 = smul.addr %s940, 4
      %s942 = scalar_lea.vmem %s22, %s941
      %p943 = pneg %p590
      %p944 = pneg %p587
      %p945 = scmp.lt.s32.totalorder %s37, 1
      %s946 = scalar_select %p945, %s37, 1
      %s947 = scalar_lea.vmem %s23, %s946
      %p948 = pneg %p616
      %p949 = pneg %p613
      %p950 = pneg %p642
      %p951 = pneg %p639
      %p952 = scmp.lt.s32.totalorder %s37, 1
      %s953 = scalar_select %p952, %s37, 1
      %s954 = smul.addr %s953, 8
      %s955 = scalar_lea.vmem %s24, %s954
      %p956 = pneg %p668
      %p957 = pneg %p665
      %p958 = scmp.lt.s32.totalorder %s37, 1
      %s959 = scalar_select %p958, %s37, 1
      %s960 = scalar_lea.vmem %s25, %s959
      %p961 = scmp.lt.s32.totalorder %s37, 1
      %s962 = scalar_select %p961, %s37, 1
      %s963 = smul.addr %s962, 5
      %s964 = smul.addr %s963, 4
      %s965 = scalar_lea.vmem %s2, %s964
      %p966 = scmp.lt.s32.totalorder %s37, 1
      %s967 = scalar_select %p966, %s37, 1
      %s968 = scalar_lea.vmem %s3, %s967
      %p969 = scmp.lt.s32.totalorder %s37, 1
      %s970 = scalar_select %p969, %s37, 1
      %s971 = smul.addr %s970, 4
      %s972 = smul.addr %s971, 4
      %s973 = scalar_lea.vmem %s4, %s972
      %p974 = scmp.lt.s32.totalorder %s37, 1
      %s975 = scalar_select %p974, %s37, 1
      %s976 = scalar_lea.vmem %s5, %s975
      %p977 = scmp.lt.s32.totalorder %s37, 1
      %s978 = scalar_select %p977, %s37, 1
      %s979 = smul.addr %s978, 4
      %s980 = smul.addr %s979, 4
      %s981 = scalar_lea.vmem %s9, %s980
      %p982 = scmp.lt.s32.totalorder %s37, 1
      %s983 = scalar_select %p982, %s37, 1
      %s984 = smul.addr %s983, 4
      %s985 = smul.addr %s984, 4
      %s986 = scalar_lea.vmem %s10, %s985
      %p987 = scmp.lt.s32.totalorder %s37, 1
      %s988 = scalar_select %p987, %s37, 1
      %s989 = smul.addr %s988, 2
      %s990 = scalar_lea.vmem %s11, %s989
      %p991 = scmp.lt.s32.totalorder %s37, 1
      %s992 = scalar_select %p991, %s37, 1
      %s993 = smul.addr %s992, 8
      %s994 = smul.addr %s993, 4
      %s995 = scalar_lea.vmem %s15, %s994
      %p996 = scmp.lt.s32.totalorder %s37, 1
      %s997 = scalar_select %p996, %s37, 1
      %s998 = smul.addr %s997, 8
      %s999 = smul.addr %s998, 4
      %s1000 = scalar_lea.vmem %s16, %s999
      %p1001 = scmp.lt.s32.totalorder %s37, 1
      %s1002 = scalar_select %p1001, %s37, 1
      %s1003 = smul.addr %s1002, 4
      %s1004 = scalar_lea.vmem %s17, %s1003
      %p1005 = scmp.lt.s32.totalorder %s37, 1
      %s1006 = scalar_select %p1005, %s37, 1
      %s1007 = smul.addr %s1006, 2
      %s1008 = smul.addr %s1007, 4
      %s1009 = scalar_lea.vmem %s18, %s1008
      %p1010 = scmp.lt.s32.totalorder %s37, 1
      %s1011 = scalar_select %p1010, %s37, 1
      %s1012 = scalar_lea.vmem %s19, %s1011
      %p1013 = scmp.lt.s32.totalorder %s37, 1
      %s1014 = scalar_select %p1013, %s37, 1
      %s1015 = smul.addr %s1014, 16
      %s1016 = smul.addr %s1015, 4
      %s1017 = scalar_lea.vmem %s20, %s1016
      %p1018 = scmp.lt.s32.totalorder %s37, 1
      %s1019 = scalar_select %p1018, %s37, 1
      %s1020 = scalar_lea.vmem %s21, %s1019
      %p1021 = scmp.lt.s32.totalorder %s37, 1
      %s1022 = scalar_select %p1021, %s37, 1
      %s1023 = smul.addr %s1022, 16
      %s1024 = smul.addr %s1023, 4
      %s1025 = scalar_lea.vmem %s22, %s1024
      %p1026 = scmp.lt.s32.totalorder %s37, 1
      %s1027 = scalar_select %p1026, %s37, 1
      %s1028 = scalar_lea.vmem %s23, %s1027
      %p1029 = scmp.lt.s32.totalorder %s37, 1
      %s1030 = scalar_select %p1029, %s37, 1
      %s1031 = smul.addr %s1030, 8
      %s1032 = scalar_lea.vmem %s24, %s1031
      %p1033 = scmp.lt.s32.totalorder %s37, 1
      %s1034 = scalar_select %p1033, %s37, 1
      %s1035 = scalar_lea.vmem %s25, %s1034
      %v1037 = vld [vmem:[%s0] sm:$0xff]
      %v1038 = vld [vmem:[%s0 + $0x8] sm:$0xff]
      %v1039 = vld [vmem:[%s0 + $0x10] sm:$0xff]
      %v1040 = vld [vmem:[%s0 + $0x18] sm:$0xff]
      %v1041 = vpack.c.bf16 %v1038, %v1037
      %v1042 = vpack.c.bf16 %v1040, %v1039
      %v1043 = vld [vmem:[%s965] sm:$0xf]
      %v1044 = vld [vmem:[%s965 + $0x4] sm:$0xf]
      %v1045 = vld [vmem:[%s965 + $0x8] sm:$0xf]
      %v1046 = vld [vmem:[%s965 + $0xc] sm:$0xf]
      %v1047 = vld [vmem:[%s965 + $0x10] sm:$0x1]
      %v1048 = vld [vmem:[%s968] sm:$0x1]
      %v1050 = vlaneseq
      %v1051 = vshrl.u32 %v1050, 7
      %v1052 = vsub.s32 0, %v1051
      %v1053 = vrot.slane %v1048, %v1052
      %v1060 = vunpack.c.l.b16 %v1043
      %v1061 = vunpack.c.l.b16 %v1044
      %v1062 = vunpack.c.l.b16 %v1045
      %v1063 = vunpack.c.l.b16 %v1046
      %v1064 = vunpack.c.l.b16 %v1047
      %v1065 = vpack.c.b16 %v1061, %v1060
      %v1066 = vpack.c.b16 %v1063, %v1062
      %v1067 = vpack.c.b16 %v1064, %v1064
      %vm1070 = vcmask 269312
      %v1072 = vsel %vm1070, %v1041, 0
      %v1075 = vsel %vm1070, %v1042, 0
      %vm1077 = vcmask 1040384
      %v1078 = vsel 0, 4294967295, 65535
      %v1079 = vsel %vm1077, %v1078, 0
      %v1081 = vand.u32 %v1067, %v1079
      %1083 = vmatprep.subr.bf16.mxu0 0
      %1084 = vmatpush1.bf16.msra.mxu0 %v1065
      %1085 = vmatprep.subr.bf16.mxu0 0
      %1086 = vmatpush1.bf16.msra.mxu0 %v1066
      %1087 = vmatprep.subr.bf16.mxu0 0
      %1088 = vmatpush1.bf16.msra.mxu0 %v1081
      %1089 = vmatprep.subr.bf16.mxu0 0
      %1090 = vmatpush1.bf16.msra.mxu0 0
      %1091 = vmatprep.subr.bf16.mxu0 0
      %1092 = vmatpush1.bf16.msra.mxu0 0
      %1093 = vmatprep.subr.bf16.mxu0 0
      %1094 = vmatpush1.bf16.msra.mxu0 0
      %1095 = vmatprep.subr.bf16.mxu0 0
      %1096 = vmatpush1.bf16.msra.mxu0 0
      %1097 = vmatprep.subr.bf16.mxu0 0
      %1098 = vmatpush1.bf16.msra.mxu0 0
      %1099 = vmatprep.subr.bf16.mxu0 0
      %1100 = vmatpush1.bf16.msra.mxu0 0
      %1101 = vmatprep.subr.bf16.mxu0 0
      %1102 = vmatpush1.bf16.msra.mxu0 0
      %1103 = vmatprep.subr.bf16.mxu0 0
      %1104 = vmatpush1.bf16.msra.mxu0 0
      %1105 = vmatprep.subr.bf16.mxu0 0
      %1106 = vmatpush1.bf16.msra.mxu0 0
      %1107 = vmatprep.subr.bf16.mxu0 0
      %1108 = vmatpush1.bf16.msra.mxu0 0
      %1109 = vmatprep.subr.bf16.mxu0 0
      %1110 = vmatpush1.bf16.msra.mxu0 0
      %1111 = vmatprep.subr.bf16.mxu0 0
      %1112 = vmatpush1.bf16.msra.mxu0 0
      %1113 = vmatprep.subr.bf16.mxu0 0
      %1114 = vmatpush1.bf16.msra.mxu0 0
      %1115 = vmatprep.mubr.bf16.mxu0 0
      %1116 = vmatmul.mubr.bf16.gmra.mrb[0].mxu0 %v1072
      %v1117 = vpop.f32.mrb[0].mxu0
      %v1118 = vadd.f32 %v1053, %v1117
      %v1119 = vpop.f32.mrb[0].mxu0
      %v1120 = vpop.f32.mrb[0].mxu0
      %v1121 = vadd.f32 %v1053, %v1120
      %v1122 = vpop.f32.mrb[0].mxu0
      %1123 = vmatprep.mubr.bf16.mxu0 0
      %1124 = vmatmul.mubr.bf16.gmra.mrb[0].mxu0 %v1075
      %v1125 = vpop.f32.mrb[0].mxu0
      %v1126 = vadd.f32 %v1053, %v1125
      %v1127 = vpop.f32.mrb[0].mxu0
      %v1128 = vpop.f32.mrb[0].mxu0
      %v1129 = vadd.f32 %v1053, %v1128
      %v1130 = vpop.f32.mrb[0].mxu0
      %1131 = vdwg.mxu0
      %vm1132 = vcmp.gt.f32.partialorder %v1118, 0.0
      %vm1133 = vcmp.gt.f32.partialorder %v1121, 0.0
      %vm1134 = vcmp.gt.f32.partialorder %v1126, 0.0
      %vm1135 = vcmp.gt.f32.partialorder %v1129, 0.0
      %v1136 = vmul.f32 %v1118, 0.01
      %v1137 = vmul.f32 %v1121, 0.01
      %v1138 = vmul.f32 %v1126, 0.01
      %v1139 = vmul.f32 %v1129, 0.01
      %v1140 = vsel %vm1132, %v1118, %v1136
      %v1141 = vsel %vm1133, %v1121, %v1137
      %v1142 = vsel %vm1134, %v1126, %v1138
      %v1143 = vsel %vm1135, %v1129, %v1139
      %v1144 = vpack.c.bf16 %v1141, %v1140
      %v1145 = vpack.c.bf16 %v1143, %v1142
      %v1146 = vld [vmem:[%s973] sm:$0xf]
      %v1147 = vld [vmem:[%s973 + $0x4] sm:$0xf]
      %v1148 = vld [vmem:[%s973 + $0x8] sm:$0xf]
      %v1149 = vld [vmem:[%s973 + $0xc] sm:$0xf]
      %v1150 = vld [vmem:[%s976] sm:$0x1]
      %v1152 = vlaneseq
      %v1153 = vshrl.u32 %v1152, 7
      %v1154 = vsub.s32 0, %v1153
      %v1155 = vrot.slane %v1150, %v1154
      %v1161 = vunpack.c.l.b16 %v1146
      %v1162 = vunpack.c.l.b16 %v1147
      %v1163 = vunpack.c.l.b16 %v1148
      %v1164 = vunpack.c.l.b16 %v1149
      %v1165 = vpack.c.b16 %v1162, %v1161
      %v1166 = vpack.c.b16 %v1164, %v1163
      %vm1169 = vcmask 261120
      %v1171 = vsel %vm1169, %v1144, 0
      %v1174 = vsel %vm1169, %v1145, 0
      %1176 = vmatprep.subr.bf16.mxu0 0
      %1177 = vmatpush1.bf16.msra.mxu0 %v1165
      %1178 = vmatprep.subr.bf16.mxu0 0
      %1179 = vmatpush1.bf16.msra.mxu0 %v1166
      %1180 = vmatprep.subr.bf16.mxu0 0
      %1181 = vmatpush1.bf16.msra.mxu0 0
      %1182 = vmatprep.subr.bf16.mxu0 0
      %1183 = vmatpush1.bf16.msra.mxu0 0
      %1184 = vmatprep.subr.bf16.mxu0 0
      %1185 = vmatpush1.bf16.msra.mxu0 0
      %1186 = vmatprep.subr.bf16.mxu0 0
      %1187 = vmatpush1.bf16.msra.mxu0 0
      %1188 = vmatprep.subr.bf16.mxu0 0
      %1189 = vmatpush1.bf16.msra.mxu0 0
      %1190 = vmatprep.subr.bf16.mxu0 0
      %1191 = vmatpush1.bf16.msra.mxu0 0
      %1192 = vmatprep.subr.bf16.mxu0 0
      %1193 = vmatpush1.bf16.msra.mxu0 0
      %1194 = vmatprep.subr.bf16.mxu0 0
      %1195 = vmatpush1.bf16.msra.mxu0 0
      %1196 = vmatprep.subr.bf16.mxu0 0
      %1197 = vmatpush1.bf16.msra.mxu0 0
      %1198 = vmatprep.subr.bf16.mxu0 0
      %1199 = vmatpush1.bf16.msra.mxu0 0
      %1200 = vmatprep.subr.bf16.mxu0 0
      %1201 = vmatpush1.bf16.msra.mxu0 0
      %1202 = vmatprep.subr.bf16.mxu0 0
      %1203 = vmatpush1.bf16.msra.mxu0 0
      %1204 = vmatprep.subr.bf16.mxu0 0
      %1205 = vmatpush1.bf16.msra.mxu0 0
      %1206 = vmatprep.subr.bf16.mxu0 0
      %1207 = vmatpush1.bf16.msra.mxu0 0
      %1208 = vmatprep.mubr.bf16.mxu0 0
      %1209 = vmatmul.mubr.bf16.gmra.mrb[0].mxu0 %v1171
      %v1210 = vpop.f32.mrb[0].mxu0
      %v1211 = vadd.f32 %v1155, %v1210
      %v1212 = vpop.f32.mrb[0].mxu0
      %v1213 = vpop.f32.mrb[0].mxu0
      %v1214 = vadd.f32 %v1155, %v1213
      %v1215 = vpop.f32.mrb[0].mxu0
      %1216 = vmatprep.mubr.bf16.mxu0 0
      %1217 = vmatmul.mubr.bf16.gmra.mrb[0].mxu0 %v1174
      %v1218 = vpop.f32.mrb[0].mxu0
      %v1219 = vadd.f32 %v1155, %v1218
      %v1220 = vpop.f32.mrb[0].mxu0
      %v1221 = vpop.f32.mrb[0].mxu0
      %v1222 = vadd.f32 %v1155, %v1221
      %v1223 = vpop.f32.mrb[0].mxu0
      %1224 = vdwg.mxu0
      %vm1225 = vcmask 130048
      %v1226 = vsel %vm1225, %v1211, 0.0
      %1227 = vadd.xlane.f32.xlu0 %v1226
      %v1228 = vpop.xlane.xlu0 %1227
      %v1229 = vsel %vm1225, %v1214, 0.0
      %1230 = vadd.xlane.f32.xlu0 %v1229
      %v1231 = vpop.xlane.xlu0 %1230
      %v1232 = vsel %vm1225, %v1219, 0.0
      %1233 = vadd.xlane.f32.xlu0 %v1232
      %v1234 = vpop.xlane.xlu0 %1233
      %v1235 = vsel %vm1225, %v1222, 0.0
      %1236 = vadd.xlane.f32.xlu0 %v1235
      %v1237 = vpop.xlane.xlu0 %1236
      %v1238 = vrcp.pop 16.0
      %v1239 = vmul.f32 %v1228, %v1238
      %v1240 = vmul.f32 %v1231, %v1238
      %v1241 = vmul.f32 %v1234, %v1238
      %v1242 = vmul.f32 %v1237, %v1238
      %v1243 = vxor.u32 %v1239, 2147483648
      %v1244 = vxor.u32 %v1240, 2147483648
      %v1245 = vxor.u32 %v1241, 2147483648
      %v1246 = vxor.u32 %v1242, 2147483648
      %v1247 = vmul.f32 %v1243, 1.442695
      %v1248 = vpow.pop %v1247
      %v1249 = vmul.f32 %v1244, 1.442695
      %v1250 = vpow.pop %v1249
      %v1251 = vmul.f32 %v1245, 1.442695
      %v1252 = vpow.pop %v1251
      %v1253 = vmul.f32 %v1246, 1.442695
      %v1254 = vpow.pop %v1253
      %v1255 = vadd.f32 %v1248, 1.0
      %v1256 = vadd.f32 %v1250, 1.0
      %v1257 = vadd.f32 %v1252, 1.0
      %v1258 = vadd.f32 %v1254, 1.0
      %v1259 = vrcp.pop %v1255
      %v1260 = vmul.f32 1.0, %v1259
      %v1261 = vrcp.pop %v1256
      %v1262 = vmul.f32 1.0, %v1261
      %v1263 = vrcp.pop %v1257
      %v1264 = vmul.f32 1.0, %v1263
      %v1265 = vrcp.pop %v1258
      %v1266 = vmul.f32 1.0, %v1265
      %v1267 = vld [vmem:[%s1] sm:$0xff]
      %v1268 = vld [vmem:[%s1 + $0x8] sm:$0xff]
      %v1269 = vld [vmem:[%s1 + $0x10] sm:$0xff]
      %v1270 = vld [vmem:[%s1 + $0x18] sm:$0xff]
      %v1271 = vsub.f32 %v1260, %v1267
      %v1272 = vsub.f32 %v1262, %v1268
      %v1273 = vsub.f32 %v1264, %v1269
      %v1274 = vsub.f32 %v1266, %v1270
      %v1275 = vmul.f32 %v1271, %v1271
      %v1276 = vmul.f32 %v1272, %v1272
      %v1277 = vmul.f32 %v1273, %v1273
      %v1278 = vmul.f32 %v1274, %v1274
      %vm1279 = vcmask 7168
      %v1280 = vsel %vm1279, %v1275, 0.0
      %v1281 = vsel %vm1279, %v1276, 0.0
      %v1282 = vadd.f32 %v1280, %v1281
      %v1283 = vsel %vm1279, %v1277, 0.0
      %v1284 = vadd.f32 %v1282, %v1283
      %v1285 = vsel %vm1279, %v1278, 0.0
      %v1286 = vadd.f32 %v1284, %v1285
      %1287 = vadd.xlane.f32.xlu0 %v1286
      %v1288 = vpop.xlane.xlu0 %1287
      %v1289 = vrot.slane %v1288, 4
      %v1290 = vadd.f32 %v1288, %v1289
      %v1291 = vrot.slane %v1290, 2
      %v1292 = vadd.f32 %v1290, %v1291
      %v1293 = vrot.slane %v1292, 1
      %v1294 = vadd.f32 %v1292, %v1293
      %s1295 = vtos %v1294
      %v1296 = vstv %s1295
      %v1297 = vrcp.pop 32.0
      %v1298 = vmul.f32 %v1296, %v1297
      %vm1299 = vcmask 0
      %1300 = vst.msk [vmem:[%s1035] sm:$0x1] %vm1299, %v1298
      %v1301 = vpack.c.bf16 %v1214, %v1211
      %v1302 = vpack.c.bf16 %v1222, %v1219
      %v1303 = vld [vmem:[%s7] sm:$0xf]
      %v1304 = vld [vmem:[%s7 + $0x4] sm:$0xf]
      %v1305 = vld [vmem:[%s6] sm:$0xf]
      %v1306 = vld [vmem:[%s6 + $0x4] sm:$0xf]
      %v1309 = vunpack.c.l.b16 %v1305
      %v1310 = vunpack.c.l.b16 %v1306
      %v1311 = vpack.c.b16 %v1310, %v1309
      %v1313 = vsel %vm1169, %v1311, 0
      %1315 = vmatprep.subr.bf16.mxu0 0
      %1316 = vmatpush1.bf16.msra.mxu0 %v1301
      %1317 = vmatprep.subr.bf16.mxu0 0
      %1318 = vmatpush1.bf16.msra.mxu0 %v1302
      %1319 = vmatprep.subr.bf16.mxu0 0
      %1320 = vmatpush1.bf16.msra.mxu0 0
      %1321 = vmatprep.subr.bf16.mxu0 0
      %1322 = vmatpush1.bf16.msra.mxu0 0
      %1323 = vmatprep.subr.bf16.mxu0 0
      %1324 = vmatpush1.bf16.msra.mxu0 0
      %1325 = vmatprep.subr.bf16.mxu0 0
      %1326 = vmatpush1.bf16.msra.mxu0 0
      %1327 = vmatprep.subr.bf16.mxu0 0
      %1328 = vmatpush1.bf16.msra.mxu0 0
      %1329 = vmatprep.subr.bf16.mxu0 0
      %1330 = vmatpush1.bf16.msra.mxu0 0
      %1331 = vmatprep.subr.bf16.mxu0 0
      %1332 = vmatpush1.bf16.msra.mxu0 0
      %1333 = vmatprep.subr.bf16.mxu0 0
      %1334 = vmatpush1.bf16.msra.mxu0 0
      %1335 = vmatprep.subr.bf16.mxu0 0
      %1336 = vmatpush1.bf16.msra.mxu0 0
      %1337 = vmatprep.subr.bf16.mxu0 0
      %1338 = vmatpush1.bf16.msra.mxu0 0
      %1339 = vmatprep.subr.bf16.mxu0 0
      %1340 = vmatpush1.bf16.msra.mxu0 0
      %1341 = vmatprep.subr.bf16.mxu0 0
      %1342 = vmatpush1.bf16.msra.mxu0 0
      %1343 = vmatprep.subr.bf16.mxu0 0
      %1344 = vmatpush1.bf16.msra.mxu0 0
      %1345 = vmatprep.subr.bf16.mxu0 0
      %1346 = vmatpush1.bf16.msra.mxu0 0
      %1347 = vmatprep.mubr.bf16.mxu0 0
      %1348 = vmatmul.mubr.bf16.gmra.mrb[0].mxu0 %v1313
      %v1349 = vpop.f32.mrb[0].mxu0
      %v1350 = vadd.f32 0.0, %v1349
      %v1351 = vpop.f32.mrb[0].mxu0
      %v1352 = vpop.f32.mrb[0].mxu0
      %v1353 = vadd.f32 0.0, %v1352
      %v1354 = vpop.f32.mrb[0].mxu0
      %1355 = vdwg.mxu0
      %v1356 = vpack.c.bf16 %v1353, %v1350
      %v1359 = vunpack.c.l.b16 %v1303
      %v1360 = vunpack.c.l.b16 %v1304
      %v1361 = vpack.c.b16 %v1360, %v1359
      %v1363 = vsel %vm1225, %v1361, 0
      %1365 = vmatprep.subr.bf16.mxu0 0
      %1366 = vmatpush1.bf16.msra.mxu0 %v1356
      %1367 = vmatprep.subr.bf16.mxu0 0
      %1368 = vmatpush1.bf16.msra.mxu0 0
      %1369 = vmatprep.subr.bf16.mxu0 0
      %1370 = vmatpush1.bf16.msra.mxu0 0
      %1371 = vmatprep.subr.bf16.mxu0 0
      %1372 = vmatpush1.bf16.msra.mxu0 0
      %1373 = vmatprep.subr.bf16.mxu0 0
      %1374 = vmatpush1.bf16.msra.mxu0 0
      %1375 = vmatprep.subr.bf16.mxu0 0
      %1376 = vmatpush1.bf16.msra.mxu0 0
      %1377 = vmatprep.subr.bf16.mxu0 0
      %1378 = vmatpush1.bf16.msra.mxu0 0
      %1379 = vmatprep.subr.bf16.mxu0 0
      %1380 = vmatpush1.bf16.msra.mxu0 0
      %1381 = vmatprep.subr.bf16.mxu0 0
      %1382 = vmatpush1.bf16.msra.mxu0 0
      %1383 = vmatprep.subr.bf16.mxu0 0
      %1384 = vmatpush1.bf16.msra.mxu0 0
      %1385 = vmatprep.subr.bf16.mxu0 0
      %1386 = vmatpush1.bf16.msra.mxu0 0
      %1387 = vmatprep.subr.bf16.mxu0 0
      %1388 = vmatpush1.bf16.msra.mxu0 0
      %1389 = vmatprep.subr.bf16.mxu0 0
      %1390 = vmatpush1.bf16.msra.mxu0 0
      %1391 = vmatprep.subr.bf16.mxu0 0
      %1392 = vmatpush1.bf16.msra.mxu0 0
      %1393 = vmatprep.subr.bf16.mxu0 0
      %1394 = vmatpush1.bf16.msra.mxu0 0
      %1395 = vmatprep.subr.bf16.mxu0 0
      %1396 = vmatpush1.bf16.msra.mxu0 0
      %1397 = vmatprep.mubr.bf16.mxu0 0
      %1398 = vmatmul.mubr.bf16.gmra.mrb[0].mxu0 %v1363
      %v1399 = vpop.f32.mrb[0].mxu0
      %v1400 = vadd.f32 0.0, %v1399
      %v1401 = vpop.f32.mrb[0].mxu0
      %v1402 = vpop.f32.mrb[0].mxu0
      %v1403 = vadd.f32 0.0, %v1402
      %v1404 = vpop.f32.mrb[0].mxu0
      %1405 = vdwg.mxu0
      %v1406 = vld [vmem:[%s981] sm:$0xf]
      %v1407 = vld [vmem:[%s981 + $0x4] sm:$0xf]
      %v1408 = vpack.c.bf16 %v1403, %v1400
      %v1409 = vld [vmem:[%s986] sm:$0xf]
      %v1410 = vld [vmem:[%s986 + $0x4] sm:$0xf]
      %v1413 = vunpack.c.l.b16 %v1409
      %v1414 = vunpack.c.l.b16 %v1410
      %v1415 = vpack.c.b16 %v1414, %v1413
      %v1418 = vsel %vm1225, %v1408, 0
      %1420 = vmatprep.subr.bf16.mxu0 0
      %1421 = vmatpush1.bf16.msra.mxu0 %v1415
      %1422 = vmatprep.subr.bf16.mxu0 0
      %1423 = vmatpush1.bf16.msra.mxu0 0
      %1424 = vmatprep.subr.bf16.mxu0 0
      %1425 = vmatpush1.bf16.msra.mxu0 0
      %1426 = vmatprep.subr.bf16.mxu0 0
      %1427 = vmatpush1.bf16.msra.mxu0 0
      %1428 = vmatprep.subr.bf16.mxu0 0
      %1429 = vmatpush1.bf16.msra.mxu0 0
      %1430 = vmatprep.subr.bf16.mxu0 0
      %1431 = vmatpush1.bf16.msra.mxu0 0
      %1432 = vmatprep.subr.bf16.mxu0 0
      %1433 = vmatpush1.bf16.msra.mxu0 0
      %1434 = vmatprep.subr.bf16.mxu0 0
      %1435 = vmatpush1.bf16.msra.mxu0 0
      %1436 = vmatprep.subr.bf16.mxu0 0
      %1437 = vmatpush1.bf16.msra.mxu0 0
      %1438 = vmatprep.subr.bf16.mxu0 0
      %1439 = vmatpush1.bf16.msra.mxu0 0
      %1440 = vmatprep.subr.bf16.mxu0 0
      %1441 = vmatpush1.bf16.msra.mxu0 0
      %1442 = vmatprep.subr.bf16.mxu0 0
      %1443 = vmatpush1.bf16.msra.mxu0 0
      %1444 = vmatprep.subr.bf16.mxu0 0
      %1445 = vmatpush1.bf16.msra.mxu0 0
      %1446 = vmatprep.subr.bf16.mxu0 0
      %1447 = vmatpush1.bf16.msra.mxu0 0
      %1448 = vmatprep.subr.bf16.mxu0 0
      %1449 = vmatpush1.bf16.msra.mxu0 0
      %1450 = vmatprep.subr.bf16.mxu0 0
      %1451 = vmatpush1.bf16.msra.mxu0 0
      %1452 = vmatprep.mubr.bf16.mxu0 0
      %1453 = vmatmul.mubr.bf16.gmra.mrb[0].mxu0 %v1418
      %v1454 = vpop.f32.mrb[0].mxu0
      %v1455 = vadd.f32 0.0, %v1454
      %v1456 = vpop.f32.mrb[0].mxu0
      %v1457 = vpop.f32.mrb[0].mxu0
      %v1458 = vadd.f32 0.0, %v1457
      %v1459 = vpop.f32.mrb[0].mxu0
      %1460 = vdwg.mxu0
      %v1463 = vunpack.c.l.b16 %v1406
      %v1464 = vunpack.c.l.b16 %v1407
      %v1465 = vpack.c.b16 %v1464, %v1463
      %v1468 = vsel %vm1225, %v1356, 0
      %1470 = vmatprep.subr.bf16.mxu0 0
      %1471 = vmatpush1.bf16.msra.mxu0 %v1465
      %1472 = vmatprep.subr.bf16.mxu0 0
      %1473 = vmatpush1.bf16.msra.mxu0 0
      %1474 = vmatprep.subr.bf16.mxu0 0
      %1475 = vmatpush1.bf16.msra.mxu0 0
      %1476 = vmatprep.subr.bf16.mxu0 0
      %1477 = vmatpush1.bf16.msra.mxu0 0
      %1478 = vmatprep.subr.bf16.mxu0 0
      %1479 = vmatpush1.bf16.msra.mxu0 0
      %1480 = vmatprep.subr.bf16.mxu0 0
      %1481 = vmatpush1.bf16.msra.mxu0 0
      %1482 = vmatprep.subr.bf16.mxu0 0
      %1483 = vmatpush1.bf16.msra.mxu0 0
      %1484 = vmatprep.subr.bf16.mxu0 0
      %1485 = vmatpush1.bf16.msra.mxu0 0
      %1486 = vmatprep.subr.bf16.mxu0 0
      %1487 = vmatpush1.bf16.msra.mxu0 0
      %1488 = vmatprep.subr.bf16.mxu0 0
      %1489 = vmatpush1.bf16.msra.mxu0 0
      %1490 = vmatprep.subr.bf16.mxu0 0
      %1491 = vmatpush1.bf16.msra.mxu0 0
      %1492 = vmatprep.subr.bf16.mxu0 0
      %1493 = vmatpush1.bf16.msra.mxu0 0
      %1494 = vmatprep.subr.bf16.mxu0 0
      %1495 = vmatpush1.bf16.msra.mxu0 0
      %1496 = vmatprep.subr.bf16.mxu0 0
      %1497 = vmatpush1.bf16.msra.mxu0 0
      %1498 = vmatprep.subr.bf16.mxu0 0
      %1499 = vmatpush1.bf16.msra.mxu0 0
      %1500 = vmatprep.subr.bf16.mxu0 0
      %1501 = vmatpush1.bf16.msra.mxu0 0
      %1502 = vmatprep.mubr.bf16.mxu0 0
      %1503 = vmatmul.mubr.bf16.gmra.mrb[0].mxu0 %v1468
      %v1504 = vpop.f32.mrb[0].mxu0
      %v1505 = vadd.f32 %v1455, %v1504
      %v1506 = vpop.f32.mrb[0].mxu0
      %v1507 = vpop.f32.mrb[0].mxu0
      %v1508 = vadd.f32 %v1458, %v1507
      %v1509 = vpop.f32.mrb[0].mxu0
      %1510 = vdwg.mxu0
      %v1511 = vld [vmem:[%s990] sm:$0x1]
      %v1513 = vlaneseq
      %v1514 = vshrl.u32 %v1513, 7
      %v1515 = vsub.s32 0, %v1514
      %v1516 = vrot.slane %v1511, %v1515
      %v1518 = vadd.f32 %v1505, %v1516
      %v1519 = vadd.f32 %v1508, %v1516
      %vm1520 = vcmp.gt.f32.partialorder %v1518, 0.0
      %vm1521 = vcmp.gt.f32.partialorder %v1519, 0.0
      %v1522 = vmul.f32 %v1518, 0.01
      %v1523 = vmul.f32 %v1519, 0.01
      %v1524 = vsel %vm1520, %v1518, %v1522
      %v1525 = vsel %vm1521, %v1519, %v1523
      %v1526 = vpack.c.bf16 %v1525, %v1524
      %1527 = vmatprep.subr.bf16.mxu0 0
      %1528 = vmatpush1.bf16.msra.mxu0 %v1526
      %1529 = vmatprep.subr.bf16.mxu0 0
      %1530 = vmatpush1.bf16.msra.mxu0 0
      %1531 = vmatprep.subr.bf16.mxu0 0
      %1532 = vmatpush1.bf16.msra.mxu0 0
      %1533 = vmatprep.subr.bf16.mxu0 0
      %1534 = vmatpush1.bf16.msra.mxu0 0
      %1535 = vmatprep.subr.bf16.mxu0 0
      %1536 = vmatpush1.bf16.msra.mxu0 0
      %1537 = vmatprep.subr.bf16.mxu0 0
      %1538 = vmatpush1.bf16.msra.mxu0 0
      %1539 = vmatprep.subr.bf16.mxu0 0
      %1540 = vmatpush1.bf16.msra.mxu0 0
      %1541 = vmatprep.subr.bf16.mxu0 0
      %1542 = vmatpush1.bf16.msra.mxu0 0
      %1543 = vmatprep.subr.bf16.mxu0 0
      %1544 = vmatpush1.bf16.msra.mxu0 0
      %1545 = vmatprep.subr.bf16.mxu0 0
      %1546 = vmatpush1.bf16.msra.mxu0 0
      %1547 = vmatprep.subr.bf16.mxu0 0
      %1548 = vmatpush1.bf16.msra.mxu0 0
      %1549 = vmatprep.subr.bf16.mxu0 0
      %1550 = vmatpush1.bf16.msra.mxu0 0
      %1551 = vmatprep.subr.bf16.mxu0 0
      %1552 = vmatpush1.bf16.msra.mxu0 0
      %1553 = vmatprep.subr.bf16.mxu0 0
      %1554 = vmatpush1.bf16.msra.mxu0 0
      %1555 = vmatprep.subr.bf16.mxu0 0
      %1556 = vmatpush1.bf16.msra.mxu0 0
      %1557 = vmatprep.subr.bf16.mxu0 0
      %1558 = vmatpush1.bf16.msra.mxu0 0
      %1559 = vmatprep.mubr.bf16.mxu0 0
      %1560 = vmatmul.mubr.bf16.gmra.mrb[0].mxu0 %v1363
      %v1561 = vpop.f32.mrb[0].mxu0
      %v1562 = vadd.f32 0.0, %v1561
      %v1563 = vpop.f32.mrb[0].mxu0
      %v1564 = vpop.f32.mrb[0].mxu0
      %v1565 = vadd.f32 0.0, %v1564
      %v1566 = vpop.f32.mrb[0].mxu0
      %1567 = vdwg.mxu0
      %s1568 = scalar_lea.vmem %s981, 8
      %v1569 = vld [vmem:[%s1568] sm:$0xf]
      %v1570 = vld [vmem:[%s1568 + $0x4] sm:$0xf]
      %v1571 = vpack.c.bf16 %v1565, %v1562
      %s1572 = scalar_lea.vmem %s986, 8
      %v1573 = vld [vmem:[%s1572] sm:$0xf]
      %v1574 = vld [vmem:[%s1572 + $0x4] sm:$0xf]
      %v1577 = vunpack.c.l.b16 %v1573
      %v1578 = vunpack.c.l.b16 %v1574
      %v1579 = vpack.c.b16 %v1578, %v1577
      %v1582 = vsel %vm1225, %v1571, 0
      %1584 = vmatprep.subr.bf16.mxu0 0
      %1585 = vmatpush1.bf16.msra.mxu0 %v1579
      %1586 = vmatprep.subr.bf16.mxu0 0
      %1587 = vmatpush1.bf16.msra.mxu0 0
      %1588 = vmatprep.subr.bf16.mxu0 0
      %1589 = vmatpush1.bf16.msra.mxu0 0
      %1590 = vmatprep.subr.bf16.mxu0 0
      %1591 = vmatpush1.bf16.msra.mxu0 0
      %1592 = vmatprep.subr.bf16.mxu0 0
      %1593 = vmatpush1.bf16.msra.mxu0 0
      %1594 = vmatprep.subr.bf16.mxu0 0
      %1595 = vmatpush1.bf16.msra.mxu0 0
      %1596 = vmatprep.subr.bf16.mxu0 0
      %1597 = vmatpush1.bf16.msra.mxu0 0
      %1598 = vmatprep.subr.bf16.mxu0 0
      %1599 = vmatpush1.bf16.msra.mxu0 0
      %1600 = vmatprep.subr.bf16.mxu0 0
      %1601 = vmatpush1.bf16.msra.mxu0 0
      %1602 = vmatprep.subr.bf16.mxu0 0
      %1603 = vmatpush1.bf16.msra.mxu0 0
      %1604 = vmatprep.subr.bf16.mxu0 0
      %1605 = vmatpush1.bf16.msra.mxu0 0
      %1606 = vmatprep.subr.bf16.mxu0 0
      %1607 = vmatpush1.bf16.msra.mxu0 0
      %1608 = vmatprep.subr.bf16.mxu0 0
      %1609 = vmatpush1.bf16.msra.mxu0 0
      %1610 = vmatprep.subr.bf16.mxu0 0
      %1611 = vmatpush1.bf16.msra.mxu0 0
      %1612 = vmatprep.subr.bf16.mxu0 0
      %1613 = vmatpush1.bf16.msra.mxu0 0
      %1614 = vmatprep.subr.bf16.mxu0 0
      %1615 = vmatpush1.bf16.msra.mxu0 0
      %1616 = vmatprep.mubr.bf16.mxu0 0
      %1617 = vmatmul.mubr.bf16.gmra.mrb[0].mxu0 %v1582
      %v1618 = vpop.f32.mrb[0].mxu0
      %v1619 = vadd.f32 0.0, %v1618
      %v1620 = vpop.f32.mrb[0].mxu0
      %v1621 = vpop.f32.mrb[0].mxu0
      %v1622 = vadd.f32 0.0, %v1621
      %v1623 = vpop.f32.mrb[0].mxu0
      %1624 = vdwg.mxu0
      %v1627 = vunpack.c.l.b16 %v1569
      %v1628 = vunpack.c.l.b16 %v1570
      %v1629 = vpack.c.b16 %v1628, %v1627
      %v1632 = vsel %vm1225, %v1526, 0
      %1634 = vmatprep.subr.bf16.mxu0 0
      %1635 = vmatpush1.bf16.msra.mxu0 %v1629
      %1636 = vmatprep.subr.bf16.mxu0 0
      %1637 = vmatpush1.bf16.msra.mxu0 0
      %1638 = vmatprep.subr.bf16.mxu0 0
      %1639 = vmatpush1.bf16.msra.mxu0 0
      %1640 = vmatprep.subr.bf16.mxu0 0
      %1641 = vmatpush1.bf16.msra.mxu0 0
      %1642 = vmatprep.subr.bf16.mxu0 0
      %1643 = vmatpush1.bf16.msra.mxu0 0
      %1644 = vmatprep.subr.bf16.mxu0 0
      %1645 = vmatpush1.bf16.msra.mxu0 0
      %1646 = vmatprep.subr.bf16.mxu0 0
      %1647 = vmatpush1.bf16.msra.mxu0 0
      %1648 = vmatprep.subr.bf16.mxu0 0
      %1649 = vmatpush1.bf16.msra.mxu0 0
      %1650 = vmatprep.subr.bf16.mxu0 0
      %1651 = vmatpush1.bf16.msra.mxu0 0
      %1652 = vmatprep.subr.bf16.mxu0 0
      %1653 = vmatpush1.bf16.msra.mxu0 0
      %1654 = vmatprep.subr.bf16.mxu0 0
      %1655 = vmatpush1.bf16.msra.mxu0 0
      %1656 = vmatprep.subr.bf16.mxu0 0
      %1657 = vmatpush1.bf16.msra.mxu0 0
      %1658 = vmatprep.subr.bf16.mxu0 0
      %1659 = vmatpush1.bf16.msra.mxu0 0
      %1660 = vmatprep.subr.bf16.mxu0 0
      %1661 = vmatpush1.bf16.msra.mxu0 0
      %1662 = vmatprep.subr.bf16.mxu0 0
      %1663 = vmatpush1.bf16.msra.mxu0 0
      %1664 = vmatprep.subr.bf16.mxu0 0
      %1665 = vmatpush1.bf16.msra.mxu0 0
      %1666 = vmatprep.mubr.bf16.mxu0 0
      %1667 = vmatmul.mubr.bf16.gmra.mrb[0].mxu0 %v1632
      %v1668 = vpop.f32.mrb[0].mxu0
      %v1669 = vadd.f32 %v1619, %v1668
      %v1670 = vpop.f32.mrb[0].mxu0
      %v1671 = vpop.f32.mrb[0].mxu0
      %v1672 = vadd.f32 %v1622, %v1671
      %v1673 = vpop.f32.mrb[0].mxu0
      %1674 = vdwg.mxu0
      %s1675 = scalar_lea.vmem %s990, 1
      %v1676 = vld [vmem:[%s1675] sm:$0x1]
      %v1678 = vlaneseq
      %v1679 = vshrl.u32 %v1678, 7
      %v1680 = vsub.s32 0, %v1679
      %v1681 = vrot.slane %v1676, %v1680
      %v1683 = vadd.f32 %v1669, %v1681
      %v1684 = vadd.f32 %v1672, %v1681
      %vm1685 = vcmp.gt.f32.partialorder %v1683, 0.0
      %vm1686 = vcmp.gt.f32.partialorder %v1684, 0.0
      %v1687 = vmul.f32 %v1683, 0.01
      %v1688 = vmul.f32 %v1684, 0.01
      %v1689 = vsel %vm1685, %v1683, %v1687
      %v1690 = vsel %vm1686, %v1684, %v1688
      %v1691 = vpack.c.bf16 %v1690, %v1689
      %v1692 = vld [vmem:[%s8] sm:$0x3]
      %v1694 = vsel %vm1225, %v1692, 0
      %1696 = vmatprep.subr.bf16.mxu0 0
      %1697 = vmatpush1.bf16.msra.mxu0 %v1691
      %1698 = vmatprep.subr.bf16.mxu0 0
      %1699 = vmatpush1.bf16.msra.mxu0 0
      %1700 = vmatprep.subr.bf16.mxu0 0
      %1701 = vmatpush1.bf16.msra.mxu0 0
      %1702 = vmatprep.subr.bf16.mxu0 0
      %1703 = vmatpush1.bf16.msra.mxu0 0
      %1704 = vmatprep.subr.bf16.mxu0 0
      %1705 = vmatpush1.bf16.msra.mxu0 0
      %1706 = vmatprep.subr.bf16.mxu0 0
      %1707 = vmatpush1.bf16.msra.mxu0 0
      %1708 = vmatprep.subr.bf16.mxu0 0
      %1709 = vmatpush1.bf16.msra.mxu0 0
      %1710 = vmatprep.subr.bf16.mxu0 0
      %1711 = vmatpush1.bf16.msra.mxu0 0
      %1712 = vmatprep.subr.bf16.mxu0 0
      %1713 = vmatpush1.bf16.msra.mxu0 0
      %1714 = vmatprep.subr.bf16.mxu0 0
      %1715 = vmatpush1.bf16.msra.mxu0 0
      %1716 = vmatprep.subr.bf16.mxu0 0
      %1717 = vmatpush1.bf16.msra.mxu0 0
      %1718 = vmatprep.subr.bf16.mxu0 0
      %1719 = vmatpush1.bf16.msra.mxu0 0
      %1720 = vmatprep.subr.bf16.mxu0 0
      %1721 = vmatpush1.bf16.msra.mxu0 0
      %1722 = vmatprep.subr.bf16.mxu0 0
      %1723 = vmatpush1.bf16.msra.mxu0 0
      %1724 = vmatprep.subr.bf16.mxu0 0
      %1725 = vmatpush1.bf16.msra.mxu0 0
      %1726 = vmatprep.subr.bf16.mxu0 0
      %1727 = vmatpush1.bf16.msra.mxu0 0
      %1728 = vmatprep.mubr.bf16.mxu0 0
      %1729 = vmatmul.mubr.bf16.gmra.mrb[0].mxu0 %v1694
      %v1730 = vpop.f32.mrb[0].mxu0
      %v1731 = vadd.f32 0.0, %v1730
      %v1732 = vpop.f32.mrb[0].mxu0
      %v1733 = vpop.f32.mrb[0].mxu0
      %v1734 = vpop.f32.mrb[0].mxu0
      %1735 = vdwg.mxu0
      %vm1736 = vcmask 125952
      %1737 = vst.msk [vmem:[#allocation2] sm:$0xf] %vm1736, %v1731
      %v1738 = vld [vmem:[%s13] sm:$0xf]
      %v1739 = vld [vmem:[%s13 + $0x4] sm:$0xf]
      %v1740 = vld [vmem:[%s12] sm:$0xf]
      %v1741 = vld [vmem:[%s12 + $0x4] sm:$0xf]
      %v1744 = vunpack.c.l.b16 %v1740
      %v1745 = vunpack.c.l.b16 %v1741
      %v1746 = vpack.c.b16 %v1745, %v1744
      %v1748 = vsel %vm1169, %v1746, 0
      %1750 = vmatprep.subr.bf16.mxu0 0
      %1751 = vmatpush1.bf16.msra.mxu0 %v1301
      %1752 = vmatprep.subr.bf16.mxu0 0
      %1753 = vmatpush1.bf16.msra.mxu0 %v1302
      %1754 = vmatprep.subr.bf16.mxu0 0
      %1755 = vmatpush1.bf16.msra.mxu0 0
      %1756 = vmatprep.subr.bf16.mxu0 0
      %1757 = vmatpush1.bf16.msra.mxu0 0
      %1758 = vmatprep.subr.bf16.mxu0 0
      %1759 = vmatpush1.bf16.msra.mxu0 0
      %1760 = vmatprep.subr.bf16.mxu0 0
      %1761 = vmatpush1.bf16.msra.mxu0 0
      %1762 = vmatprep.subr.bf16.mxu0 0
      %1763 = vmatpush1.bf16.msra.mxu0 0
      %1764 = vmatprep.subr.bf16.mxu0 0
      %1765 = vmatpush1.bf16.msra.mxu0 0
      %1766 = vmatprep.subr.bf16.mxu0 0
      %1767 = vmatpush1.bf16.msra.mxu0 0
      %1768 = vmatprep.subr.bf16.mxu0 0
      %1769 = vmatpush1.bf16.msra.mxu0 0
      %1770 = vmatprep.subr.bf16.mxu0 0
      %1771 = vmatpush1.bf16.msra.mxu0 0
      %1772 = vmatprep.subr.bf16.mxu0 0
      %1773 = vmatpush1.bf16.msra.mxu0 0
      %1774 = vmatprep.subr.bf16.mxu0 0
      %1775 = vmatpush1.bf16.msra.mxu0 0
      %1776 = vmatprep.subr.bf16.mxu0 0
      %1777 = vmatpush1.bf16.msra.mxu0 0
      %1778 = vmatprep.subr.bf16.mxu0 0
      %1779 = vmatpush1.bf16.msra.mxu0 0
      %1780 = vmatprep.subr.bf16.mxu0 0
      %1781 = vmatpush1.bf16.msra.mxu0 0
      %1782 = vmatprep.mubr.bf16.mxu0 0
      %1783 = vmatmul.mubr.bf16.gmra.mrb[0].mxu0 %v1748
      %v1784 = vpop.f32.mrb[0].mxu0
      %v1785 = vadd.f32 0.0, %v1784
      %v1786 = vpop.f32.mrb[0].mxu0
      %v1787 = vpop.f32.mrb[0].mxu0
      %v1788 = vadd.f32 0.0, %v1787
      %v1789 = vpop.f32.mrb[0].mxu0
      %1790 = vdwg.mxu0
      %v1791 = vpack.c.bf16 %v1788, %v1785
      %v1794 = vunpack.c.l.b16 %v1738
      %v1795 = vunpack.c.l.b16 %v1739
      %v1796 = vpack.c.b16 %v1795, %v1794
      %v1798 = vsel %vm1225, %v1796, 0
      %1800 = vmatprep.subr.bf16.mxu0 0
      %1801 = vmatpush1.bf16.msra.mxu0 %v1791
      %1802 = vmatprep.subr.bf16.mxu0 0
      %1803 = vmatpush1.bf16.msra.mxu0 0
      %1804 = vmatprep.subr.bf16.mxu0 0
      %1805 = vmatpush1.bf16.msra.mxu0 0
      %1806 = vmatprep.subr.bf16.mxu0 0
      %1807 = vmatpush1.bf16.msra.mxu0 0
      %1808 = vmatprep.subr.bf16.mxu0 0
      %1809 = vmatpush1.bf16.msra.mxu0 0
      %1810 = vmatprep.subr.bf16.mxu0 0
      %1811 = vmatpush1.bf16.msra.mxu0 0
      %1812 = vmatprep.subr.bf16.mxu0 0
      %1813 = vmatpush1.bf16.msra.mxu0 0
      %1814 = vmatprep.subr.bf16.mxu0 0
      %1815 = vmatpush1.bf16.msra.mxu0 0
      %1816 = vmatprep.subr.bf16.mxu0 0
      %1817 = vmatpush1.bf16.msra.mxu0 0
      %1818 = vmatprep.subr.bf16.mxu0 0
      %1819 = vmatpush1.bf16.msra.mxu0 0
      %1820 = vmatprep.subr.bf16.mxu0 0
      %1821 = vmatpush1.bf16.msra.mxu0 0
      %1822 = vmatprep.subr.bf16.mxu0 0
      %1823 = vmatpush1.bf16.msra.mxu0 0
      %1824 = vmatprep.subr.bf16.mxu0 0
      %1825 = vmatpush1.bf16.msra.mxu0 0
      %1826 = vmatprep.subr.bf16.mxu0 0
      %1827 = vmatpush1.bf16.msra.mxu0 0
      %1828 = vmatprep.subr.bf16.mxu0 0
      %1829 = vmatpush1.bf16.msra.mxu0 0
      %1830 = vmatprep.subr.bf16.mxu0 0
      %1831 = vmatpush1.bf16.msra.mxu0 0
      %1832 = vmatprep.mubr.bf16.mxu0 0
      %1833 = vmatmul.mubr.bf16.gmra.mrb[0].mxu0 %v1798
      %v1834 = vpop.f32.mrb[0].mxu0
      %v1835 = vadd.f32 0.0, %v1834
      %v1836 = vpop.f32.mrb[0].mxu0
      %v1837 = vpop.f32.mrb[0].mxu0
      %v1838 = vadd.f32 0.0, %v1837
      %v1839 = vpop.f32.mrb[0].mxu0
      %1840 = vdwg.mxu0
      %v1841 = vld [vmem:[%s995] sm:$0xf]
      %v1842 = vld [vmem:[%s995 + $0x4] sm:$0xf]
      %v1843 = vpack.c.bf16 %v1838, %v1835
      %v1844 = vld [vmem:[%s1000] sm:$0xf]
      %v1845 = vld [vmem:[%s1000 + $0x4] sm:$0xf]
      %v1848 = vunpack.c.l.b16 %v1844
      %v1849 = vunpack.c.l.b16 %v1845
      %v1850 = vpack.c.b16 %v1849, %v1848
      %v1853 = vsel %vm1225, %v1843, 0
      %1855 = vmatprep.subr.bf16.mxu0 0
      %1856 = vmatpush1.bf16.msra.mxu0 %v1850
      %1857 = vmatprep.subr.bf16.mxu0 0
      %1858 = vmatpush1.bf16.msra.mxu0 0
      %1859 = vmatprep.subr.bf16.mxu0 0
      %1860 = vmatpush1.bf16.msra.mxu0 0
      %1861 = vmatprep.subr.bf16.mxu0 0
      %1862 = vmatpush1.bf16.msra.mxu0 0
      %1863 = vmatprep.subr.bf16.mxu0 0
      %1864 = vmatpush1.bf16.msra.mxu0 0
      %1865 = vmatprep.subr.bf16.mxu0 0
      %1866 = vmatpush1.bf16.msra.mxu0 0
      %1867 = vmatprep.subr.bf16.mxu0 0
      %1868 = vmatpush1.bf16.msra.mxu0 0
      %1869 = vmatprep.subr.bf16.mxu0 0
      %1870 = vmatpush1.bf16.msra.mxu0 0
      %1871 = vmatprep.subr.bf16.mxu0 0
      %1872 = vmatpush1.bf16.msra.mxu0 0
      %1873 = vmatprep.subr.bf16.mxu0 0
      %1874 = vmatpush1.bf16.msra.mxu0 0
      %1875 = vmatprep.subr.bf16.mxu0 0
      %1876 = vmatpush1.bf16.msra.mxu0 0
      %1877 = vmatprep.subr.bf16.mxu0 0
      %1878 = vmatpush1.bf16.msra.mxu0 0
      %1879 = vmatprep.subr.bf16.mxu0 0
      %1880 = vmatpush1.bf16.msra.mxu0 0
      %1881 = vmatprep.subr.bf16.mxu0 0
      %1882 = vmatpush1.bf16.msra.mxu0 0
      %1883 = vmatprep.subr.bf16.mxu0 0
      %1884 = vmatpush1.bf16.msra.mxu0 0
      %1885 = vmatprep.subr.bf16.mxu0 0
      %1886 = vmatpush1.bf16.msra.mxu0 0
      %1887 = vmatprep.mubr.bf16.mxu0 0
      %1888 = vmatmul.mubr.bf16.gmra.mrb[0].mxu0 %v1853
      %v1889 = vpop.f32.mrb[0].mxu0
      %v1890 = vadd.f32 0.0, %v1889
      %v1891 = vpop.f32.mrb[0].mxu0
      %v1892 = vpop.f32.mrb[0].mxu0
      %v1893 = vadd.f32 0.0, %v1892
      %v1894 = vpop.f32.mrb[0].mxu0
      %1895 = vdwg.mxu0
      %v1898 = vunpack.c.l.b16 %v1841
      %v1899 = vunpack.c.l.b16 %v1842
      %v1900 = vpack.c.b16 %v1899, %v1898
      %v1903 = vsel %vm1225, %v1791, 0
      %1905 = vmatprep.subr.bf16.mxu0 0
      %1906 = vmatpush1.bf16.msra.mxu0 %v1900
      %1907 = vmatprep.subr.bf16.mxu0 0
      %1908 = vmatpush1.bf16.msra.mxu0 0
      %1909 = vmatprep.subr.bf16.mxu0 0
      %1910 = vmatpush1.bf16.msra.mxu0 0
      %1911 = vmatprep.subr.bf16.mxu0 0
      %1912 = vmatpush1.bf16.msra.mxu0 0
      %1913 = vmatprep.subr.bf16.mxu0 0
      %1914 = vmatpush1.bf16.msra.mxu0 0
      %1915 = vmatprep.subr.bf16.mxu0 0
      %1916 = vmatpush1.bf16.msra.mxu0 0
      %1917 = vmatprep.subr.bf16.mxu0 0
      %1918 = vmatpush1.bf16.msra.mxu0 0
      %1919 = vmatprep.subr.bf16.mxu0 0
      %1920 = vmatpush1.bf16.msra.mxu0 0
      %1921 = vmatprep.subr.bf16.mxu0 0
      %1922 = vmatpush1.bf16.msra.mxu0 0
      %1923 = vmatprep.subr.bf16.mxu0 0
      %1924 = vmatpush1.bf16.msra.mxu0 0
      %1925 = vmatprep.subr.bf16.mxu0 0
      %1926 = vmatpush1.bf16.msra.mxu0 0
      %1927 = vmatprep.subr.bf16.mxu0 0
      %1928 = vmatpush1.bf16.msra.mxu0 0
      %1929 = vmatprep.subr.bf16.mxu0 0
      %1930 = vmatpush1.bf16.msra.mxu0 0
      %1931 = vmatprep.subr.bf16.mxu0 0
      %1932 = vmatpush1.bf16.msra.mxu0 0
      %1933 = vmatprep.subr.bf16.mxu0 0
      %1934 = vmatpush1.bf16.msra.mxu0 0
      %1935 = vmatprep.subr.bf16.mxu0 0
      %1936 = vmatpush1.bf16.msra.mxu0 0
      %1937 = vmatprep.mubr.bf16.mxu0 0
      %1938 = vmatmul.mubr.bf16.gmra.mrb[0].mxu0 %v1903
      %v1939 = vpop.f32.mrb[0].mxu0
      %v1940 = vadd.f32 %v1890, %v1939
      %v1941 = vpop.f32.mrb[0].mxu0
      %v1942 = vpop.f32.mrb[0].mxu0
      %v1943 = vadd.f32 %v1893, %v1942
      %v1944 = vpop.f32.mrb[0].mxu0
      %1945 = vdwg.mxu0
      %v1946 = vld [vmem:[%s1004] sm:$0x1]
      %v1948 = vlaneseq
      %v1949 = vshrl.u32 %v1948, 7
      %v1950 = vsub.s32 0, %v1949
      %v1951 = vrot.slane %v1946, %v1950
      %v1953 = vadd.f32 %v1940, %v1951
      %v1954 = vadd.f32 %v1943, %v1951
      %vm1955 = vcmp.gt.f32.partialorder %v1953, 0.0
      %vm1956 = vcmp.gt.f32.partialorder %v1954, 0.0
      %v1957 = vmul.f32 %v1953, 0.01
      %v1958 = vmul.f32 %v1954, 0.01
      %v1959 = vsel %vm1955, %v1953, %v1957
      %v1960 = vsel %vm1956, %v1954, %v1958
      %v1961 = vpack.c.bf16 %v1960, %v1959
      %1962 = vmatprep.subr.bf16.mxu0 0
      %1963 = vmatpush1.bf16.msra.mxu0 %v1961
      %1964 = vmatprep.subr.bf16.mxu0 0
      %1965 = vmatpush1.bf16.msra.mxu0 0
      %1966 = vmatprep.subr.bf16.mxu0 0
      %1967 = vmatpush1.bf16.msra.mxu0 0
      %1968 = vmatprep.subr.bf16.mxu0 0
      %1969 = vmatpush1.bf16.msra.mxu0 0
      %1970 = vmatprep.subr.bf16.mxu0 0
      %1971 = vmatpush1.bf16.msra.mxu0 0
      %1972 = vmatprep.subr.bf16.mxu0 0
      %1973 = vmatpush1.bf16.msra.mxu0 0
      %1974 = vmatprep.subr.bf16.mxu0 0
      %1975 = vmatpush1.bf16.msra.mxu0 0
      %1976 = vmatprep.subr.bf16.mxu0 0
      %1977 = vmatpush1.bf16.msra.mxu0 0
      %1978 = vmatprep.subr.bf16.mxu0 0
      %1979 = vmatpush1.bf16.msra.mxu0 0
      %1980 = vmatprep.subr.bf16.mxu0 0
      %1981 = vmatpush1.bf16.msra.mxu0 0
      %1982 = vmatprep.subr.bf16.mxu0 0
      %1983 = vmatpush1.bf16.msra.mxu0 0
      %1984 = vmatprep.subr.bf16.mxu0 0
      %1985 = vmatpush1.bf16.msra.mxu0 0
      %1986 = vmatprep.subr.bf16.mxu0 0
      %1987 = vmatpush1.bf16.msra.mxu0 0
      %1988 = vmatprep.subr.bf16.mxu0 0
      %1989 = vmatpush1.bf16.msra.mxu0 0
      %1990 = vmatprep.subr.bf16.mxu0 0
      %1991 = vmatpush1.bf16.msra.mxu0 0
      %1992 = vmatprep.subr.bf16.mxu0 0
      %1993 = vmatpush1.bf16.msra.mxu0 0
      %1994 = vmatprep.mubr.bf16.mxu0 0
      %1995 = vmatmul.mubr.bf16.gmra.mrb[0].mxu0 %v1798
      %v1996 = vpop.f32.mrb[0].mxu0
      %v1997 = vadd.f32 0.0, %v1996
      %v1998 = vpop.f32.mrb[0].mxu0
      %v1999 = vpop.f32.mrb[0].mxu0
      %v2000 = vadd.f32 0.0, %v1999
      %v2001 = vpop.f32.mrb[0].mxu0
      %2002 = vdwg.mxu0
      %s2003 = scalar_lea.vmem %s995, 8
      %v2004 = vld [vmem:[%s2003] sm:$0xf]
      %v2005 = vld [vmem:[%s2003 + $0x4] sm:$0xf]
      %v2006 = vpack.c.bf16 %v2000, %v1997
      %s2007 = scalar_lea.vmem %s1000, 8
      %v2008 = vld [vmem:[%s2007] sm:$0xf]
      %v2009 = vld [vmem:[%s2007 + $0x4] sm:$0xf]
      %v2012 = vunpack.c.l.b16 %v2008
      %v2013 = vunpack.c.l.b16 %v2009
      %v2014 = vpack.c.b16 %v2013, %v2012
      %v2017 = vsel %vm1225, %v2006, 0
      %2019 = vmatprep.subr.bf16.mxu0 0
      %2020 = vmatpush1.bf16.msra.mxu0 %v2014
      %2021 = vmatprep.subr.bf16.mxu0 0
      %2022 = vmatpush1.bf16.msra.mxu0 0
      %2023 = vmatprep.subr.bf16.mxu0 0
      %2024 = vmatpush1.bf16.msra.mxu0 0
      %2025 = vmatprep.subr.bf16.mxu0 0
      %2026 = vmatpush1.bf16.msra.mxu0 0
      %2027 = vmatprep.subr.bf16.mxu0 0
      %2028 = vmatpush1.bf16.msra.mxu0 0
      %2029 = vmatprep.subr.bf16.mxu0 0
      %2030 = vmatpush1.bf16.msra.mxu0 0
      %2031 = vmatprep.subr.bf16.mxu0 0
      %2032 = vmatpush1.bf16.msra.mxu0 0
      %2033 = vmatprep.subr.bf16.mxu0 0
      %2034 = vmatpush1.bf16.msra.mxu0 0
      %2035 = vmatprep.subr.bf16.mxu0 0
      %2036 = vmatpush1.bf16.msra.mxu0 0
      %2037 = vmatprep.subr.bf16.mxu0 0
      %2038 = vmatpush1.bf16.msra.mxu0 0
      %2039 = vmatprep.subr.bf16.mxu0 0
      %2040 = vmatpush1.bf16.msra.mxu0 0
      %2041 = vmatprep.subr.bf16.mxu0 0
      %2042 = vmatpush1.bf16.msra.mxu0 0
      %2043 = vmatprep.subr.bf16.mxu0 0
      %2044 = vmatpush1.bf16.msra.mxu0 0
      %2045 = vmatprep.subr.bf16.mxu0 0
      %2046 = vmatpush1.bf16.msra.mxu0 0
      %2047 = vmatprep.subr.bf16.mxu0 0
      %2048 = vmatpush1.bf16.msra.mxu0 0
      %2049 = vmatprep.subr.bf16.mxu0 0
      %2050 = vmatpush1.bf16.msra.mxu0 0
      %2051 = vmatprep.mubr.bf16.mxu0 0
      %2052 = vmatmul.mubr.bf16.gmra.mrb[0].mxu0 %v2017
      %v2053 = vpop.f32.mrb[0].mxu0
      %v2054 = vadd.f32 0.0, %v2053
      %v2055 = vpop.f32.mrb[0].mxu0
      %v2056 = vpop.f32.mrb[0].mxu0
      %v2057 = vadd.f32 0.0, %v2056
      %v2058 = vpop.f32.mrb[0].mxu0
      %2059 = vdwg.mxu0
      %v2062 = vunpack.c.l.b16 %v2004
      %v2063 = vunpack.c.l.b16 %v2005
      %v2064 = vpack.c.b16 %v2063, %v2062
      %v2067 = vsel %vm1225, %v1961, 0
      %2069 = vmatprep.subr.bf16.mxu0 0
      %2070 = vmatpush1.bf16.msra.mxu0 %v2064
      %2071 = vmatprep.subr.bf16.mxu0 0
      %2072 = vmatpush1.bf16.msra.mxu0 0
      %2073 = vmatprep.subr.bf16.mxu0 0
      %2074 = vmatpush1.bf16.msra.mxu0 0
      %2075 = vmatprep.subr.bf16.mxu0 0
      %2076 = vmatpush1.bf16.msra.mxu0 0
      %2077 = vmatprep.subr.bf16.mxu0 0
      %2078 = vmatpush1.bf16.msra.mxu0 0
      %2079 = vmatprep.subr.bf16.mxu0 0
      %2080 = vmatpush1.bf16.msra.mxu0 0
      %2081 = vmatprep.subr.bf16.mxu0 0
      %2082 = vmatpush1.bf16.msra.mxu0 0
      %2083 = vmatprep.subr.bf16.mxu0 0
      %2084 = vmatpush1.bf16.msra.mxu0 0
      %2085 = vmatprep.subr.bf16.mxu0 0
      %2086 = vmatpush1.bf16.msra.mxu0 0
      %2087 = vmatprep.subr.bf16.mxu0 0
      %2088 = vmatpush1.bf16.msra.mxu0 0
      %2089 = vmatprep.subr.bf16.mxu0 0
      %2090 = vmatpush1.bf16.msra.mxu0 0
      %2091 = vmatprep.subr.bf16.mxu0 0
      %2092 = vmatpush1.bf16.msra.mxu0 0
      %2093 = vmatprep.subr.bf16.mxu0 0
      %2094 = vmatpush1.bf16.msra.mxu0 0
      %2095 = vmatprep.subr.bf16.mxu0 0
      %2096 = vmatpush1.bf16.msra.mxu0 0
      %2097 = vmatprep.subr.bf16.mxu0 0
      %2098 = vmatpush1.bf16.msra.mxu0 0
      %2099 = vmatprep.subr.bf16.mxu0 0
      %2100 = vmatpush1.bf16.msra.mxu0 0
      %2101 = vmatprep.mubr.bf16.mxu0 0
      %2102 = vmatmul.mubr.bf16.gmra.mrb[0].mxu0 %v2067
      %v2103 = vpop.f32.mrb[0].mxu0
      %v2104 = vadd.f32 %v2054, %v2103
      %v2105 = vpop.f32.mrb[0].mxu0
      %v2106 = vpop.f32.mrb[0].mxu0
      %v2107 = vadd.f32 %v2057, %v2106
      %v2108 = vpop.f32.mrb[0].mxu0
      %2109 = vdwg.mxu0
      %s2110 = scalar_lea.vmem %s1004, 1
      %v2111 = vld [vmem:[%s2110] sm:$0x1]
      %v2113 = vlaneseq
      %v2114 = vshrl.u32 %v2113, 7
      %v2115 = vsub.s32 0, %v2114
      %v2116 = vrot.slane %v2111, %v2115
      %v2118 = vadd.f32 %v2104, %v2116
      %v2119 = vadd.f32 %v2107, %v2116
      %vm2120 = vcmp.gt.f32.partialorder %v2118, 0.0
      %vm2121 = vcmp.gt.f32.partialorder %v2119, 0.0
      %v2122 = vmul.f32 %v2118, 0.01
      %v2123 = vmul.f32 %v2119, 0.01
      %v2124 = vsel %vm2120, %v2118, %v2122
      %v2125 = vsel %vm2121, %v2119, %v2123
      %v2126 = vpack.c.bf16 %v2125, %v2124
      %2127 = vmatprep.subr.bf16.mxu0 0
      %2128 = vmatpush1.bf16.msra.mxu0 %v2126
      %2129 = vmatprep.subr.bf16.mxu0 0
      %2130 = vmatpush1.bf16.msra.mxu0 0
      %2131 = vmatprep.subr.bf16.mxu0 0
      %2132 = vmatpush1.bf16.msra.mxu0 0
      %2133 = vmatprep.subr.bf16.mxu0 0
      %2134 = vmatpush1.bf16.msra.mxu0 0
      %2135 = vmatprep.subr.bf16.mxu0 0
      %2136 = vmatpush1.bf16.msra.mxu0 0
      %2137 = vmatprep.subr.bf16.mxu0 0
      %2138 = vmatpush1.bf16.msra.mxu0 0
      %2139 = vmatprep.subr.bf16.mxu0 0
      %2140 = vmatpush1.bf16.msra.mxu0 0
      %2141 = vmatprep.subr.bf16.mxu0 0
      %2142 = vmatpush1.bf16.msra.mxu0 0
      %2143 = vmatprep.subr.bf16.mxu0 0
      %2144 = vmatpush1.bf16.msra.mxu0 0
      %2145 = vmatprep.subr.bf16.mxu0 0
      %2146 = vmatpush1.bf16.msra.mxu0 0
      %2147 = vmatprep.subr.bf16.mxu0 0
      %2148 = vmatpush1.bf16.msra.mxu0 0
      %2149 = vmatprep.subr.bf16.mxu0 0
      %2150 = vmatpush1.bf16.msra.mxu0 0
      %2151 = vmatprep.subr.bf16.mxu0 0
      %2152 = vmatpush1.bf16.msra.mxu0 0
      %2153 = vmatprep.subr.bf16.mxu0 0
      %2154 = vmatpush1.bf16.msra.mxu0 0
      %2155 = vmatprep.subr.bf16.mxu0 0
      %2156 = vmatpush1.bf16.msra.mxu0 0
      %2157 = vmatprep.subr.bf16.mxu0 0
      %2158 = vmatpush1.bf16.msra.mxu0 0
      %2159 = vmatprep.mubr.bf16.mxu0 0
      %2160 = vmatmul.mubr.bf16.gmra.mrb[0].mxu0 %v1798
      %v2161 = vpop.f32.mrb[0].mxu0
      %v2162 = vadd.f32 0.0, %v2161
      %v2163 = vpop.f32.mrb[0].mxu0
      %v2164 = vpop.f32.mrb[0].mxu0
      %v2165 = vadd.f32 0.0, %v2164
      %v2166 = vpop.f32.mrb[0].mxu0
      %2167 = vdwg.mxu0
      %s2168 = scalar_lea.vmem %s995, 16
      %v2169 = vld [vmem:[%s2168] sm:$0xf]
      %v2170 = vld [vmem:[%s2168 + $0x4] sm:$0xf]
      %v2171 = vpack.c.bf16 %v2165, %v2162
      %s2172 = scalar_lea.vmem %s1000, 16
      %v2173 = vld [vmem:[%s2172] sm:$0xf]
      %v2174 = vld [vmem:[%s2172 + $0x4] sm:$0xf]
      %v2177 = vunpack.c.l.b16 %v2173
      %v2178 = vunpack.c.l.b16 %v2174
      %v2179 = vpack.c.b16 %v2178, %v2177
      %v2182 = vsel %vm1225, %v2171, 0
      %2184 = vmatprep.subr.bf16.mxu0 0
      %2185 = vmatpush1.bf16.msra.mxu0 %v2179
      %2186 = vmatprep.subr.bf16.mxu0 0
      %2187 = vmatpush1.bf16.msra.mxu0 0
      %2188 = vmatprep.subr.bf16.mxu0 0
      %2189 = vmatpush1.bf16.msra.mxu0 0
      %2190 = vmatprep.subr.bf16.mxu0 0
      %2191 = vmatpush1.bf16.msra.mxu0 0
      %2192 = vmatprep.subr.bf16.mxu0 0
      %2193 = vmatpush1.bf16.msra.mxu0 0
      %2194 = vmatprep.subr.bf16.mxu0 0
      %2195 = vmatpush1.bf16.msra.mxu0 0
      %2196 = vmatprep.subr.bf16.mxu0 0
      %2197 = vmatpush1.bf16.msra.mxu0 0
      %2198 = vmatprep.subr.bf16.mxu0 0
      %2199 = vmatpush1.bf16.msra.mxu0 0
      %2200 = vmatprep.subr.bf16.mxu0 0
      %2201 = vmatpush1.bf16.msra.mxu0 0
      %2202 = vmatprep.subr.bf16.mxu0 0
      %2203 = vmatpush1.bf16.msra.mxu0 0
      %2204 = vmatprep.subr.bf16.mxu0 0
      %2205 = vmatpush1.bf16.msra.mxu0 0
      %2206 = vmatprep.subr.bf16.mxu0 0
      %2207 = vmatpush1.bf16.msra.mxu0 0
      %2208 = vmatprep.subr.bf16.mxu0 0
      %2209 = vmatpush1.bf16.msra.mxu0 0
      %2210 = vmatprep.subr.bf16.mxu0 0
      %2211 = vmatpush1.bf16.msra.mxu0 0
      %2212 = vmatprep.subr.bf16.mxu0 0
      %2213 = vmatpush1.bf16.msra.mxu0 0
      %2214 = vmatprep.subr.bf16.mxu0 0
      %2215 = vmatpush1.bf16.msra.mxu0 0
      %2216 = vmatprep.mubr.bf16.mxu0 0
      %2217 = vmatmul.mubr.bf16.gmra.mrb[0].mxu0 %v2182
      %v2218 = vpop.f32.mrb[0].mxu0
      %v2219 = vadd.f32 0.0, %v2218
      %v2220 = vpop.f32.mrb[0].mxu0
      %v2221 = vpop.f32.mrb[0].mxu0
      %v2222 = vadd.f32 0.0, %v2221
      %v2223 = vpop.f32.mrb[0].mxu0
      %2224 = vdwg.mxu0
      %v2227 = vunpack.c.l.b16 %v2169
      %v2228 = vunpack.c.l.b16 %v2170
      %v2229 = vpack.c.b16 %v2228, %v2227
      %v2232 = vsel %vm1225, %v2126, 0
      %2234 = vmatprep.subr.bf16.mxu0 0
      %2235 = vmatpush1.bf16.msra.mxu0 %v2229
      %2236 = vmatprep.subr.bf16.mxu0 0
      %2237 = vmatpush1.bf16.msra.mxu0 0
      %2238 = vmatprep.subr.bf16.mxu0 0
      %2239 = vmatpush1.bf16.msra.mxu0 0
      %2240 = vmatprep.subr.bf16.mxu0 0
      %2241 = vmatpush1.bf16.msra.mxu0 0
      %2242 = vmatprep.subr.bf16.mxu0 0
      %2243 = vmatpush1.bf16.msra.mxu0 0
      %2244 = vmatprep.subr.bf16.mxu0 0
      %2245 = vmatpush1.bf16.msra.mxu0 0
      %2246 = vmatprep.subr.bf16.mxu0 0
      %2247 = vmatpush1.bf16.msra.mxu0 0
      %2248 = vmatprep.subr.bf16.mxu0 0
      %2249 = vmatpush1.bf16.msra.mxu0 0
      %2250 = vmatprep.subr.bf16.mxu0 0
      %2251 = vmatpush1.bf16.msra.mxu0 0
      %2252 = vmatprep.subr.bf16.mxu0 0
      %2253 = vmatpush1.bf16.msra.mxu0 0
      %2254 = vmatprep.subr.bf16.mxu0 0
      %2255 = vmatpush1.bf16.msra.mxu0 0
      %2256 = vmatprep.subr.bf16.mxu0 0
      %2257 = vmatpush1.bf16.msra.mxu0 0
      %2258 = vmatprep.subr.bf16.mxu0 0
      %2259 = vmatpush1.bf16.msra.mxu0 0
      %2260 = vmatprep.subr.bf16.mxu0 0
      %2261 = vmatpush1.bf16.msra.mxu0 0
      %2262 = vmatprep.subr.bf16.mxu0 0
      %2263 = vmatpush1.bf16.msra.mxu0 0
      %2264 = vmatprep.subr.bf16.mxu0 0
      %2265 = vmatpush1.bf16.msra.mxu0 0
      %2266 = vmatprep.mubr.bf16.mxu0 0
      %2267 = vmatmul.mubr.bf16.gmra.mrb[0].mxu0 %v2232
      %v2268 = vpop.f32.mrb[0].mxu0
      %v2269 = vadd.f32 %v2219, %v2268
      %v2270 = vpop.f32.mrb[0].mxu0
      %v2271 = vpop.f32.mrb[0].mxu0
      %v2272 = vadd.f32 %v2222, %v2271
      %v2273 = vpop.f32.mrb[0].mxu0
      %2274 = vdwg.mxu0
      %s2275 = scalar_lea.vmem %s1004, 2
      %v2276 = vld [vmem:[%s2275] sm:$0x1]
      %v2278 = vlaneseq
      %v2279 = vshrl.u32 %v2278, 7
      %v2280 = vsub.s32 0, %v2279
      %v2281 = vrot.slane %v2276, %v2280
      %v2283 = vadd.f32 %v2269, %v2281
      %v2284 = vadd.f32 %v2272, %v2281
      %vm2285 = vcmp.gt.f32.partialorder %v2283, 0.0
      %vm2286 = vcmp.gt.f32.partialorder %v2284, 0.0
      %v2287 = vmul.f32 %v2283, 0.01
      %v2288 = vmul.f32 %v2284, 0.01
      %v2289 = vsel %vm2285, %v2283, %v2287
      %v2290 = vsel %vm2286, %v2284, %v2288
      %v2291 = vpack.c.bf16 %v2290, %v2289
      %2292 = vmatprep.subr.bf16.mxu0 0
      %2293 = vmatpush1.bf16.msra.mxu0 %v2291
      %2294 = vmatprep.subr.bf16.mxu0 0
      %2295 = vmatpush1.bf16.msra.mxu0 0
      %2296 = vmatprep.subr.bf16.mxu0 0
      %2297 = vmatpush1.bf16.msra.mxu0 0
      %2298 = vmatprep.subr.bf16.mxu0 0
      %2299 = vmatpush1.bf16.msra.mxu0 0
      %2300 = vmatprep.subr.bf16.mxu0 0
      %2301 = vmatpush1.bf16.msra.mxu0 0
      %2302 = vmatprep.subr.bf16.mxu0 0
      %2303 = vmatpush1.bf16.msra.mxu0 0
      %2304 = vmatprep.subr.bf16.mxu0 0
      %2305 = vmatpush1.bf16.msra.mxu0 0
      %2306 = vmatprep.subr.bf16.mxu0 0
      %2307 = vmatpush1.bf16.msra.mxu0 0
      %2308 = vmatprep.subr.bf16.mxu0 0
      %2309 = vmatpush1.bf16.msra.mxu0 0
      %2310 = vmatprep.subr.bf16.mxu0 0
      %2311 = vmatpush1.bf16.msra.mxu0 0
      %2312 = vmatprep.subr.bf16.mxu0 0
      %2313 = vmatpush1.bf16.msra.mxu0 0
      %2314 = vmatprep.subr.bf16.mxu0 0
      %2315 = vmatpush1.bf16.msra.mxu0 0
      %2316 = vmatprep.subr.bf16.mxu0 0
      %2317 = vmatpush1.bf16.msra.mxu0 0
      %2318 = vmatprep.subr.bf16.mxu0 0
      %2319 = vmatpush1.bf16.msra.mxu0 0
      %2320 = vmatprep.subr.bf16.mxu0 0
      %2321 = vmatpush1.bf16.msra.mxu0 0
      %2322 = vmatprep.subr.bf16.mxu0 0
      %2323 = vmatpush1.bf16.msra.mxu0 0
      %2324 = vmatprep.mubr.bf16.mxu0 0
      %2325 = vmatmul.mubr.bf16.gmra.mrb[0].mxu0 %v1798
      %v2326 = vpop.f32.mrb[0].mxu0
      %v2327 = vadd.f32 0.0, %v2326
      %v2328 = vpop.f32.mrb[0].mxu0
      %v2329 = vpop.f32.mrb[0].mxu0
      %v2330 = vadd.f32 0.0, %v2329
      %v2331 = vpop.f32.mrb[0].mxu0
      %2332 = vdwg.mxu0
      %s2333 = scalar_lea.vmem %s995, 24
      %v2334 = vld [vmem:[%s2333] sm:$0xf]
      %v2335 = vld [vmem:[%s2333 + $0x4] sm:$0xf]
      %v2336 = vpack.c.bf16 %v2330, %v2327
      %s2337 = scalar_lea.vmem %s1000, 24
      %v2338 = vld [vmem:[%s2337] sm:$0xf]
      %v2339 = vld [vmem:[%s2337 + $0x4] sm:$0xf]
      %v2342 = vunpack.c.l.b16 %v2338
      %v2343 = vunpack.c.l.b16 %v2339
      %v2344 = vpack.c.b16 %v2343, %v2342
      %v2347 = vsel %vm1225, %v2336, 0
      %2349 = vmatprep.subr.bf16.mxu0 0
      %2350 = vmatpush1.bf16.msra.mxu0 %v2344
      %2351 = vmatprep.subr.bf16.mxu0 0
      %2352 = vmatpush1.bf16.msra.mxu0 0
      %2353 = vmatprep.subr.bf16.mxu0 0
      %2354 = vmatpush1.bf16.msra.mxu0 0
      %2355 = vmatprep.subr.bf16.mxu0 0
      %2356 = vmatpush1.bf16.msra.mxu0 0
      %2357 = vmatprep.subr.bf16.mxu0 0
      %2358 = vmatpush1.bf16.msra.mxu0 0
      %2359 = vmatprep.subr.bf16.mxu0 0
      %2360 = vmatpush1.bf16.msra.mxu0 0
      %2361 = vmatprep.subr.bf16.mxu0 0
      %2362 = vmatpush1.bf16.msra.mxu0 0
      %2363 = vmatprep.subr.bf16.mxu0 0
      %2364 = vmatpush1.bf16.msra.mxu0 0
      %2365 = vmatprep.subr.bf16.mxu0 0
      %2366 = vmatpush1.bf16.msra.mxu0 0
      %2367 = vmatprep.subr.bf16.mxu0 0
      %2368 = vmatpush1.bf16.msra.mxu0 0
      %2369 = vmatprep.subr.bf16.mxu0 0
      %2370 = vmatpush1.bf16.msra.mxu0 0
      %2371 = vmatprep.subr.bf16.mxu0 0
      %2372 = vmatpush1.bf16.msra.mxu0 0
      %2373 = vmatprep.subr.bf16.mxu0 0
      %2374 = vmatpush1.bf16.msra.mxu0 0
      %2375 = vmatprep.subr.bf16.mxu0 0
      %2376 = vmatpush1.bf16.msra.mxu0 0
      %2377 = vmatprep.subr.bf16.mxu0 0
      %2378 = vmatpush1.bf16.msra.mxu0 0
      %2379 = vmatprep.subr.bf16.mxu0 0
      %2380 = vmatpush1.bf16.msra.mxu0 0
      %2381 = vmatprep.mubr.bf16.mxu0 0
      %2382 = vmatmul.mubr.bf16.gmra.mrb[0].mxu0 %v2347
      %v2383 = vpop.f32.mrb[0].mxu0
      %v2384 = vadd.f32 0.0, %v2383
      %v2385 = vpop.f32.mrb[0].mxu0
      %v2386 = vpop.f32.mrb[0].mxu0
      %v2387 = vadd.f32 0.0, %v2386
      %v2388 = vpop.f32.mrb[0].mxu0
      %2389 = vdwg.mxu0
      %v2392 = vunpack.c.l.b16 %v2334
      %v2393 = vunpack.c.l.b16 %v2335
      %v2394 = vpack.c.b16 %v2393, %v2392
      %v2397 = vsel %vm1225, %v2291, 0
      %2399 = vmatprep.subr.bf16.mxu0 0
      %2400 = vmatpush1.bf16.msra.mxu0 %v2394
      %2401 = vmatprep.subr.bf16.mxu0 0
      %2402 = vmatpush1.bf16.msra.mxu0 0
      %2403 = vmatprep.subr.bf16.mxu0 0
      %2404 = vmatpush1.bf16.msra.mxu0 0
      %2405 = vmatprep.subr.bf16.mxu0 0
      %2406 = vmatpush1.bf16.msra.mxu0 0
      %2407 = vmatprep.subr.bf16.mxu0 0
      %2408 = vmatpush1.bf16.msra.mxu0 0
      %2409 = vmatprep.subr.bf16.mxu0 0
      %2410 = vmatpush1.bf16.msra.mxu0 0
      %2411 = vmatprep.subr.bf16.mxu0 0
      %2412 = vmatpush1.bf16.msra.mxu0 0
      %2413 = vmatprep.subr.bf16.mxu0 0
      %2414 = vmatpush1.bf16.msra.mxu0 0
      %2415 = vmatprep.subr.bf16.mxu0 0
      %2416 = vmatpush1.bf16.msra.mxu0 0
      %2417 = vmatprep.subr.bf16.mxu0 0
      %2418 = vmatpush1.bf16.msra.mxu0 0
      %2419 = vmatprep.subr.bf16.mxu0 0
      %2420 = vmatpush1.bf16.msra.mxu0 0
      %2421 = vmatprep.subr.bf16.mxu0 0
      %2422 = vmatpush1.bf16.msra.mxu0 0
      %2423 = vmatprep.subr.bf16.mxu0 0
      %2424 = vmatpush1.bf16.msra.mxu0 0
      %2425 = vmatprep.subr.bf16.mxu0 0
      %2426 = vmatpush1.bf16.msra.mxu0 0
      %2427 = vmatprep.subr.bf16.mxu0 0
      %2428 = vmatpush1.bf16.msra.mxu0 0
      %2429 = vmatprep.subr.bf16.mxu0 0
      %2430 = vmatpush1.bf16.msra.mxu0 0
      %2431 = vmatprep.mubr.bf16.mxu0 0
      %2432 = vmatmul.mubr.bf16.gmra.mrb[0].mxu0 %v2397
      %v2433 = vpop.f32.mrb[0].mxu0
      %v2434 = vadd.f32 %v2384, %v2433
      %v2435 = vpop.f32.mrb[0].mxu0
      %v2436 = vpop.f32.mrb[0].mxu0
      %v2437 = vadd.f32 %v2387, %v2436
      %v2438 = vpop.f32.mrb[0].mxu0
      %2439 = vdwg.mxu0
      %s2440 = scalar_lea.vmem %s1004, 3
      %v2441 = vld [vmem:[%s2440] sm:$0x1]
      %v2443 = vlaneseq
      %v2444 = vshrl.u32 %v2443, 7
      %v2445 = vsub.s32 0, %v2444
      %v2446 = vrot.slane %v2441, %v2445
      %v2448 = vadd.f32 %v2434, %v2446
      %v2449 = vadd.f32 %v2437, %v2446
      %vm2450 = vcmp.gt.f32.partialorder %v2448, 0.0
      %vm2451 = vcmp.gt.f32.partialorder %v2449, 0.0
      %v2452 = vmul.f32 %v2448, 0.01
      %v2453 = vmul.f32 %v2449, 0.01
      %v2454 = vsel %vm2450, %v2448, %v2452
      %v2455 = vsel %vm2451, %v2449, %v2453
      %v2456 = vpack.c.bf16 %v2455, %v2454
      %v2457 = vld [vmem:[%s14] sm:$0x1]
      %v2459 = vsel %vm1225, %v2457, 0
      %2461 = vmatprep.subr.bf16.mxu0 0
      %2462 = vmatpush1.bf16.msra.mxu0 %v2456
      %2463 = vmatprep.subr.bf16.mxu0 0
      %2464 = vmatpush1.bf16.msra.mxu0 0
      %2465 = vmatprep.subr.bf16.mxu0 0
      %2466 = vmatpush1.bf16.msra.mxu0 0
      %2467 = vmatprep.subr.bf16.mxu0 0
      %2468 = vmatpush1.bf16.msra.mxu0 0
      %2469 = vmatprep.subr.bf16.mxu0 0
      %2470 = vmatpush1.bf16.msra.mxu0 0
      %2471 = vmatprep.subr.bf16.mxu0 0
      %2472 = vmatpush1.bf16.msra.mxu0 0
      %2473 = vmatprep.subr.bf16.mxu0 0
      %2474 = vmatpush1.bf16.msra.mxu0 0
      %2475 = vmatprep.subr.bf16.mxu0 0
      %2476 = vmatpush1.bf16.msra.mxu0 0
      %2477 = vmatprep.subr.bf16.mxu0 0
      %2478 = vmatpush1.bf16.msra.mxu0 0
      %2479 = vmatprep.subr.bf16.mxu0 0
      %2480 = vmatpush1.bf16.msra.mxu0 0
      %2481 = vmatprep.subr.bf16.mxu0 0
      %2482 = vmatpush1.bf16.msra.mxu0 0
      %2483 = vmatprep.subr.bf16.mxu0 0
      %2484 = vmatpush1.bf16.msra.mxu0 0
      %2485 = vmatprep.subr.bf16.mxu0 0
      %2486 = vmatpush1.bf16.msra.mxu0 0
      %2487 = vmatprep.subr.bf16.mxu0 0
      %2488 = vmatpush1.bf16.msra.mxu0 0
      %2489 = vmatprep.subr.bf16.mxu0 0
      %2490 = vmatpush1.bf16.msra.mxu0 0
      %2491 = vmatprep.subr.bf16.mxu0 0
      %2492 = vmatpush1.bf16.msra.mxu0 0
      %2493 = vmatprep.mubr.bf16.mxu0 0
      %2494 = vmatmul.mubr.bf16.gmra.mrb[0].mxu0 %v2459
      %v2495 = vpop.f32.mrb[0].mxu0
      %v2496 = vadd.f32 0.0, %v2495
      %v2497 = vpop.f32.mrb[0].mxu0
      %v2498 = vpop.f32.mrb[0].mxu0
      %v2499 = vpop.f32.mrb[0].mxu0
      %2500 = vdwg.mxu0
      %vm2501 = vcmask 123904
      %2502 = vst.msk [vmem:[#allocation2 + $0x4] sm:$0x3] %vm2501, %v2496
      %v2503 = vld [vmem:[#allocation2] sm:$0x3f]
      %v2504 = vpack.c.bf16 %v2503, %v2503
      %v2505 = vld [vmem:[%s1009] sm:$0xf]
      %v2506 = vld [vmem:[%s1009 + $0x4] sm:$0xf]
      %v2507 = vld [vmem:[%s1012] sm:$0x1]
      %v2509 = vlaneseq
      %v2510 = vshrl.u32 %v2509, 7
      %v2511 = vsub.s32 0, %v2510
      %v2512 = vrot.slane %v2507, %v2511
      %v2516 = vunpack.c.l.b16 %v2505
      %v2517 = vunpack.c.l.b16 %v2506
      %v2518 = vpack.c.b16 %v2517, %v2516
      %v2521 = vsel %vm1225, %v2504, 0
      %2523 = vmatprep.subr.bf16.mxu0 0
      %2524 = vmatpush1.bf16.msra.mxu0 %v2518
      %2525 = vmatprep.subr.bf16.mxu0 0
      %2526 = vmatpush1.bf16.msra.mxu0 0
      %2527 = vmatprep.subr.bf16.mxu0 0
      %2528 = vmatpush1.bf16.msra.mxu0 0
      %2529 = vmatprep.subr.bf16.mxu0 0
      %2530 = vmatpush1.bf16.msra.mxu0 0
      %2531 = vmatprep.subr.bf16.mxu0 0
      %2532 = vmatpush1.bf16.msra.mxu0 0
      %2533 = vmatprep.subr.bf16.mxu0 0
      %2534 = vmatpush1.bf16.msra.mxu0 0
      %2535 = vmatprep.subr.bf16.mxu0 0
      %2536 = vmatpush1.bf16.msra.mxu0 0
      %2537 = vmatprep.subr.bf16.mxu0 0
      %2538 = vmatpush1.bf16.msra.mxu0 0
      %2539 = vmatprep.subr.bf16.mxu0 0
      %2540 = vmatpush1.bf16.msra.mxu0 0
      %2541 = vmatprep.subr.bf16.mxu0 0
      %2542 = vmatpush1.bf16.msra.mxu0 0
      %2543 = vmatprep.subr.bf16.mxu0 0
      %2544 = vmatpush1.bf16.msra.mxu0 0
      %2545 = vmatprep.subr.bf16.mxu0 0
      %2546 = vmatpush1.bf16.msra.mxu0 0
      %2547 = vmatprep.subr.bf16.mxu0 0
      %2548 = vmatpush1.bf16.msra.mxu0 0
      %2549 = vmatprep.subr.bf16.mxu0 0
      %2550 = vmatpush1.bf16.msra.mxu0 0
      %2551 = vmatprep.subr.bf16.mxu0 0
      %2552 = vmatpush1.bf16.msra.mxu0 0
      %2553 = vmatprep.subr.bf16.mxu0 0
      %2554 = vmatpush1.bf16.msra.mxu0 0
      %2555 = vmatprep.mubr.bf16.mxu0 0
      %2556 = vmatmul.mubr.bf16.gmra.mrb[0].mxu0 %v2521
      %v2557 = vpop.f32.mrb[0].mxu0
      %v2558 = vadd.f32 %v2512, %v2557
      %v2559 = vpop.f32.mrb[0].mxu0
      %v2560 = vpop.f32.mrb[0].mxu0
      %v2561 = vpop.f32.mrb[0].mxu0
      %2562 = vdwg.mxu0
      %vm2563 = vcmp.gt.f32.partialorder %v2558, 0.0
      %v2564 = vmul.f32 %v2558, 0.01
      %v2565 = vsel %vm2563, %v2558, %v2564
      %v2566 = vpack.c.bf16 %v2565, %v2565
      %v2567 = vld [vmem:[%s1017] sm:$0xf]
      %v2568 = vld [vmem:[%s1017 + $0x4] sm:$0xf]
      %v2569 = vld [vmem:[%s1017 + $0x8] sm:$0xf]
      %v2570 = vld [vmem:[%s1017 + $0xc] sm:$0xf]
      %v2571 = vld [vmem:[%s1017 + $0x10] sm:$0xf]
      %v2572 = vld [vmem:[%s1017 + $0x14] sm:$0xf]
      %v2573 = vld [vmem:[%s1017 + $0x18] sm:$0xf]
      %v2574 = vld [vmem:[%s1017 + $0x1c] sm:$0xf]
      %v2575 = vld [vmem:[%s1017 + $0x20] sm:$0xf]
      %v2576 = vld [vmem:[%s1017 + $0x24] sm:$0xf]
      %v2577 = vld [vmem:[%s1017 + $0x28] sm:$0xf]
      %v2578 = vld [vmem:[%s1017 + $0x2c] sm:$0xf]
      %v2579 = vld [vmem:[%s1017 + $0x30] sm:$0xf]
      %v2580 = vld [vmem:[%s1017 + $0x34] sm:$0xf]
      %v2581 = vld [vmem:[%s1017 + $0x38] sm:$0xf]
      %v2582 = vld [vmem:[%s1017 + $0x3c] sm:$0xf]
      %v2583 = vld [vmem:[%s1020] sm:$0x1]
      %v2585 = vlaneseq
      %v2586 = vshrl.u32 %v2585, 7
      %v2587 = vsub.s32 0, %v2586
      %v2588 = vrot.slane %v2583, %v2587
      %v2606 = vunpack.c.l.b16 %v2567
      %v2607 = vunpack.c.l.b16 %v2568
      %v2608 = vunpack.c.l.b16 %v2569
      %v2609 = vunpack.c.l.b16 %v2570
      %v2610 = vunpack.c.l.b16 %v2571
      %v2611 = vunpack.c.l.b16 %v2572
      %v2612 = vunpack.c.l.b16 %v2573
      %v2613 = vunpack.c.l.b16 %v2574
      %v2614 = vunpack.c.l.b16 %v2575
      %v2615 = vunpack.c.l.b16 %v2576
      %v2616 = vunpack.c.l.b16 %v2577
      %v2617 = vunpack.c.l.b16 %v2578
      %v2618 = vunpack.c.l.b16 %v2579
      %v2619 = vunpack.c.l.b16 %v2580
      %v2620 = vunpack.c.l.b16 %v2581
      %v2621 = vunpack.c.l.b16 %v2582
      %v2622 = vpack.c.b16 %v2607, %v2606
      %v2623 = vpack.c.b16 %v2609, %v2608
      %v2624 = vpack.c.b16 %v2611, %v2610
      %v2625 = vpack.c.b16 %v2613, %v2612
      %v2626 = vpack.c.b16 %v2615, %v2614
      %v2627 = vpack.c.b16 %v2617, %v2616
      %v2628 = vpack.c.b16 %v2619, %v2618
      %v2629 = vpack.c.b16 %v2621, %v2620
      %2638 = vmatprep.subr.bf16.mxu0 0
      %2639 = vmatpush1.bf16.msra.mxu0 %v2622
      %2640 = vmatprep.subr.bf16.mxu0 0
      %2641 = vmatpush1.bf16.msra.mxu0 %v2623
      %2642 = vmatprep.subr.bf16.mxu0 0
      %2643 = vmatpush1.bf16.msra.mxu0 %v2624
      %2644 = vmatprep.subr.bf16.mxu0 0
      %2645 = vmatpush1.bf16.msra.mxu0 %v2625
      %2646 = vmatprep.subr.bf16.mxu0 0
      %2647 = vmatpush1.bf16.msra.mxu0 %v2626
      %2648 = vmatprep.subr.bf16.mxu0 0
      %2649 = vmatpush1.bf16.msra.mxu0 %v2627
      %2650 = vmatprep.subr.bf16.mxu0 0
      %2651 = vmatpush1.bf16.msra.mxu0 %v2628
      %2652 = vmatprep.subr.bf16.mxu0 0
      %2653 = vmatpush1.bf16.msra.mxu0 %v2629
      %2654 = vmatprep.subr.bf16.mxu0 0
      %2655 = vmatpush1.bf16.msra.mxu0 0
      %2656 = vmatprep.subr.bf16.mxu0 0
      %2657 = vmatpush1.bf16.msra.mxu0 0
      %2658 = vmatprep.subr.bf16.mxu0 0
      %2659 = vmatpush1.bf16.msra.mxu0 0
      %2660 = vmatprep.subr.bf16.mxu0 0
      %2661 = vmatpush1.bf16.msra.mxu0 0
      %2662 = vmatprep.subr.bf16.mxu0 0
      %2663 = vmatpush1.bf16.msra.mxu0 0
      %2664 = vmatprep.subr.bf16.mxu0 0
      %2665 = vmatpush1.bf16.msra.mxu0 0
      %2666 = vmatprep.subr.bf16.mxu0 0
      %2667 = vmatpush1.bf16.msra.mxu0 0
      %2668 = vmatprep.subr.bf16.mxu0 0
      %2669 = vmatpush1.bf16.msra.mxu0 0
      %2670 = vmatprep.mubr.bf16.mxu0 0
      %2671 = vmatmul.mubr.bf16.gmra.mrb[0].mxu0 %v2566
      %v2672 = vpop.f32.mrb[0].mxu0
      %v2673 = vadd.f32 %v2588, %v2672
      %v2674 = vpop.f32.mrb[0].mxu0
      %v2675 = vpop.f32.mrb[0].mxu0
      %v2676 = vpop.f32.mrb[0].mxu0
      %2677 = vdwg.mxu0
      %vm2678 = vcmp.gt.f32.partialorder %v2673, 0.0
      %v2679 = vmul.f32 %v2673, 0.01
      %v2680 = vsel %vm2678, %v2673, %v2679
      %v2681 = vpack.c.bf16 %v2680, %v2680
      %v2682 = vld [vmem:[%s1025] sm:$0xf]
      %v2683 = vld [vmem:[%s1025 + $0x4] sm:$0xf]
      %v2684 = vld [vmem:[%s1025 + $0x8] sm:$0xf]
      %v2685 = vld [vmem:[%s1025 + $0xc] sm:$0xf]
      %v2686 = vld [vmem:[%s1025 + $0x10] sm:$0xf]
      %v2687 = vld [vmem:[%s1025 + $0x14] sm:$0xf]
      %v2688 = vld [vmem:[%s1025 + $0x18] sm:$0xf]
      %v2689 = vld [vmem:[%s1025 + $0x1c] sm:$0xf]
      %v2690 = vld [vmem:[%s1025 + $0x20] sm:$0xf]
      %v2691 = vld [vmem:[%s1025 + $0x24] sm:$0xf]
      %v2692 = vld [vmem:[%s1025 + $0x28] sm:$0xf]
      %v2693 = vld [vmem:[%s1025 + $0x2c] sm:$0xf]
      %v2694 = vld [vmem:[%s1025 + $0x30] sm:$0xf]
      %v2695 = vld [vmem:[%s1025 + $0x34] sm:$0xf]
      %v2696 = vld [vmem:[%s1025 + $0x38] sm:$0xf]
      %v2697 = vld [vmem:[%s1025 + $0x3c] sm:$0xf]
      %v2698 = vld [vmem:[%s1028] sm:$0x1]
      %v2700 = vlaneseq
      %v2701 = vshrl.u32 %v2700, 7
      %v2702 = vsub.s32 0, %v2701
      %v2703 = vrot.slane %v2698, %v2702
      %v2721 = vunpack.c.l.b16 %v2682
      %v2722 = vunpack.c.l.b16 %v2683
      %v2723 = vunpack.c.l.b16 %v2684
      %v2724 = vunpack.c.l.b16 %v2685
      %v2725 = vunpack.c.l.b16 %v2686
      %v2726 = vunpack.c.l.b16 %v2687
      %v2727 = vunpack.c.l.b16 %v2688
      %v2728 = vunpack.c.l.b16 %v2689
      %v2729 = vunpack.c.l.b16 %v2690
      %v2730 = vunpack.c.l.b16 %v2691
      %v2731 = vunpack.c.l.b16 %v2692
      %v2732 = vunpack.c.l.b16 %v2693
      %v2733 = vunpack.c.l.b16 %v2694
      %v2734 = vunpack.c.l.b16 %v2695
      %v2735 = vunpack.c.l.b16 %v2696
      %v2736 = vunpack.c.l.b16 %v2697
      %v2737 = vpack.c.b16 %v2722, %v2721
      %v2738 = vpack.c.b16 %v2724, %v2723
      %v2739 = vpack.c.b16 %v2726, %v2725
      %v2740 = vpack.c.b16 %v2728, %v2727
      %v2741 = vpack.c.b16 %v2730, %v2729
      %v2742 = vpack.c.b16 %v2732, %v2731
      %v2743 = vpack.c.b16 %v2734, %v2733
      %v2744 = vpack.c.b16 %v2736, %v2735
      %2753 = vmatprep.subr.bf16.mxu0 0
      %2754 = vmatpush1.bf16.msra.mxu0 %v2737
      %2755 = vmatprep.subr.bf16.mxu0 0
      %2756 = vmatpush1.bf16.msra.mxu0 %v2738
      %2757 = vmatprep.subr.bf16.mxu0 0
      %2758 = vmatpush1.bf16.msra.mxu0 %v2739
      %2759 = vmatprep.subr.bf16.mxu0 0
      %2760 = vmatpush1.bf16.msra.mxu0 %v2740
      %2761 = vmatprep.subr.bf16.mxu0 0
      %2762 = vmatpush1.bf16.msra.mxu0 %v2741
      %2763 = vmatprep.subr.bf16.mxu0 0
      %2764 = vmatpush1.bf16.msra.mxu0 %v2742
      %2765 = vmatprep.subr.bf16.mxu0 0
      %2766 = vmatpush1.bf16.msra.mxu0 %v2743
      %2767 = vmatprep.subr.bf16.mxu0 0
      %2768 = vmatpush1.bf16.msra.mxu0 %v2744
      %2769 = vmatprep.subr.bf16.mxu0 0
      %2770 = vmatpush1.bf16.msra.mxu0 0
      %2771 = vmatprep.subr.bf16.mxu0 0
      %2772 = vmatpush1.bf16.msra.mxu0 0
      %2773 = vmatprep.subr.bf16.mxu0 0
      %2774 = vmatpush1.bf16.msra.mxu0 0
      %2775 = vmatprep.subr.bf16.mxu0 0
      %2776 = vmatpush1.bf16.msra.mxu0 0
      %2777 = vmatprep.subr.bf16.mxu0 0
      %2778 = vmatpush1.bf16.msra.mxu0 0
      %2779 = vmatprep.subr.bf16.mxu0 0
      %2780 = vmatpush1.bf16.msra.mxu0 0
      %2781 = vmatprep.subr.bf16.mxu0 0
      %2782 = vmatpush1.bf16.msra.mxu0 0
      %2783 = vmatprep.subr.bf16.mxu0 0
      %2784 = vmatpush1.bf16.msra.mxu0 0
      %2785 = vmatprep.mubr.bf16.mxu0 0
      %2786 = vmatmul.mubr.bf16.gmra.mrb[0].mxu0 %v2681
      %v2787 = vpop.f32.mrb[0].mxu0
      %v2788 = vadd.f32 %v2703, %v2787
      %v2789 = vpop.f32.mrb[0].mxu0
      %v2790 = vpop.f32.mrb[0].mxu0
      %v2791 = vpop.f32.mrb[0].mxu0
      %2792 = vdwg.mxu0
      %vm2793 = vcmask 21504
      %2794 = vst.msk [vmem:[%s1032] sm:$0x3f] %vm2793, %v2788
      %p2795 = scmp.lt.s32.totalorder %s37, 1
      %s2796 = scalar_select %p2795, %s37, 1
      %s2797 = smul.addr %s2796, 8
      %s2798 = scalar_lea.vmem %s24, %s2797
      %p2799 = scmp.lt.s32.totalorder %s37, 1
      %s2800 = scalar_select %p2799, %s37, 1
      %s2801 = scalar_lea.vmem %s25, %s2800
      // Predicated region
      $region117: #{double_q_forward.1} parent=115 // pred_check
        %p2802 = pneg %p639
      $region118: #{double_q_forward.1} parent=115 // pred_check_branch
        %2804 = sbr.rel (%p2802) target = $region120
      $region119: #{double_q_forward.1} parent=115 // pred_region
        _
      $region120: #{double_q_forward.1} parent=115 // pred_fallthru
        _
      // Predicated region
      $region121: #{double_q_forward.1} parent=115 // pred_check
        %p2805 = pneg %p665
      $region122: #{double_q_forward.1} parent=115 // pred_check_branch
        %2807 = sbr.rel (%p2805) target = $region124
      $region123: #{double_q_forward.1} parent=115 // pred_region
        _
      $region124: #{double_q_forward.1} parent=115 // pred_fallthru
        _
    $region116: #{double_q_forward.1} parent=5 // pred_fallthru
      _
    %p2808 = scmp.le.s32.totalorder 2, %s32
    // Predicated region
    $region125: #{double_q_forward.1} parent=5 // pred_check
      %p2809 = pneg %p2808
    $region126: #{double_q_forward.1} parent=5 // pred_check_branch
      %2811 = sbr.rel (%p2809) target = $region128
    $region127: #{double_q_forward.1} parent=5 // pred_region
      %s2812 = ssub.s32 %s32, 2
      // Predicated region
      $region129: #{double_q_forward.1} parent=127 // pred_check
        %p2813 = pneg %p645
      $region130: #{double_q_forward.1} parent=127 // pred_check_branch
        %2815 = sbr.rel (%p2813) target = $region132
      $region131: #{double_q_forward.1} parent=127 // pred_region
        %p2816 = scmp.lt.s32.totalorder %s38, 1
        %s2817 = scalar_select %p2816, %s38, 1
        %s2818 = smul.addr %s2817, 8
        %s2819 = scalar_lea.vmem %s24, %s2818
      $region132: #{double_q_forward.1} parent=127 // pred_fallthru
        _
      // Predicated region
      $region133: #{double_q_forward.1} parent=127 // pred_check
        %p2820 = pneg %p671
      $region134: #{double_q_forward.1} parent=127 // pred_check_branch
        %2822 = sbr.rel (%p2820) target = $region136
      $region135: #{double_q_forward.1} parent=127 // pred_region
        %p2823 = scmp.lt.s32.totalorder %s38, 1
        %s2824 = scalar_select %p2823, %s38, 1
        %s2825 = scalar_lea.vmem %s25, %s2824
      $region136: #{double_q_forward.1} parent=127 // pred_fallthru
        _
    $region128: #{double_q_forward.1} parent=5 // pred_fallthru
      _
  $region6: #{double_q_forward.1} parent=0 // loop_footer
    %s36 = sadd.s32 1, %s32
  $region7: #{double_q_forward.1} parent=0 // loop_footer_branch
    %31 = sbr.rel target = $region3
  $region8: #{double_q_forward.1} parent=0 // loop_exit
    _

</llo_original>
